<compile_context>
chip_gen: v7x
topology: tpu7x:2x2x1
jax: 0.10.0
libtpu: 0.0.40
codegen_flags: <defaults>
</compile_context>

<pallas_src>
import functools
import math

import jax
import jax.numpy as jnp
from jax.experimental import pallas as pl
from jax.experimental.pallas import tpu as pltpu


def _round_up(x, m):
    return ((x + m - 1) // m) * m


# ----------------------------------------------------------------------------
# Tiled linear (matmul + bias + optional activation)
# ----------------------------------------------------------------------------
def _linear_kernel(x_ref, w_ref, b_ref, o_ref, acc_ref, *, act):
    @pl.when(pl.program_id(2) == 0)
    def _():
        acc_ref[...] = jnp.zeros_like(acc_ref)

    acc_ref[...] += jnp.dot(x_ref[...], w_ref[...],
                            preferred_element_type=jnp.float32)

    @pl.when(pl.program_id(2) == pl.num_programs(2) - 1)
    def _():
        y = acc_ref[...] + b_ref[...]
        if act == "relu":
            y = jnp.maximum(y, 0.0)
        elif act == "gelu":
            y = jax.nn.gelu(y)
        elif act == "swish":
            y = y * jax.nn.sigmoid(y)
        o_ref[...] = y.astype(o_ref.dtype)


def linear(x, w, b, act="none", *, tm=256, tn=256, tk=512):
    """x: [M, K], w: [K, N], b: [N] -> [M, N] (float32)."""
    M, K = x.shape
    N = w.shape[1]
    tm = min(tm, _round_up(M, 8))
    tn = min(tn, _round_up(N, 128))
    tk = min(tk, _round_up(K, 128))
    Mp, Kp, Np = _round_up(M, tm), _round_up(K, tk), _round_up(N, tn)

    xp = x if (Mp == M and Kp == K) else jnp.pad(x, ((0, Mp - M), (0, Kp - K)))
    wp = w if (Kp == K and Np == N) else jnp.pad(w, ((0, Kp - K), (0, Np - N)))
    bp = b if Np == N else jnp.pad(b, (0, Np - N))

    grid = (Mp // tm, Np // tn, Kp // tk)
    cost = pl.CostEstimate(
        flops=int(2 * Mp * Np * Kp),
        transcendentals=int(Mp * Np) if act in ("gelu", "swish") else 0,
        bytes_accessed=int(4 * (Mp * Kp + Kp * Np + Mp * Np)),
    )
    out = pl.pallas_call(
        functools.partial(_linear_kernel, act=act),
        grid=grid,
        in_specs=[
            pl.BlockSpec((tm, tk), lambda i, j, k: (i, k)),
            pl.BlockSpec((tk, tn), lambda i, j, k: (k, j)),
            pl.BlockSpec((1, tn), lambda i, j, k: (0, j)),
        ],
        out_specs=pl.BlockSpec((tm, tn), lambda i, j, k: (i, j)),
        out_shape=jax.ShapeDtypeStruct((Mp, Np), jnp.float32),
        scratch_shapes=[pltpu.VMEM((tm, tn), jnp.float32)],
        compiler_params=pltpu.CompilerParams(
            dimension_semantics=("parallel", "parallel", "arbitrary")),
        cost_estimate=cost,
    )(xp, wp, bp.reshape(1, Np))
    if Mp != M or Np != N:
        out = out[:M, :N]
    return out


# ----------------------------------------------------------------------------
# Fused residual-add + LayerNorm (row tiled)
# ----------------------------------------------------------------------------
def _add_layernorm_kernel(x_ref, y_ref, g_ref, b_ref, o_ref, *, eps):
    h = x_ref[...] + y_ref[...]
    mean = jnp.mean(h, axis=-1, keepdims=True)
    var = jnp.mean(jnp.square(h - mean), axis=-1, keepdims=True)
    inv = jax.lax.rsqrt(var + eps)
    o_ref[...] = ((h - mean) * inv) * g_ref[...] + b_ref[...]


def add_layernorm(x, y, gamma, beta, eps=1e-12):
    """LayerNorm(x + y) over the last dim.  x, y: [B, T, D]."""
    B, T, D = x.shape
    M = B * T
    tr = min(256, _round_up(M, 8))
    Mp = _round_up(M, tr)
    x2 = x.reshape(M, D)
    y2 = y.reshape(M, D)
    if Mp != M:
        x2 = jnp.pad(x2, ((0, Mp - M), (0, 0)))
        y2 = jnp.pad(y2, ((0, Mp - M), (0, 0)))
    cost = pl.CostEstimate(flops=int(8 * Mp * D), transcendentals=int(Mp),
                           bytes_accessed=int(4 * 3 * Mp * D))
    out = pl.pallas_call(
        functools.partial(_add_layernorm_kernel, eps=eps),
        grid=(Mp // tr,),
        in_specs=[
            pl.BlockSpec((tr, D), lambda i: (i, 0)),
            pl.BlockSpec((tr, D), lambda i: (i, 0)),
            pl.BlockSpec((1, D), lambda i: (0, 0)),
            pl.BlockSpec((1, D), lambda i: (0, 0)),
        ],
        out_specs=pl.BlockSpec((tr, D), lambda i: (i, 0)),
        out_shape=jax.ShapeDtypeStruct((Mp, D), jnp.float32),
        compiler_params=pltpu.CompilerParams(dimension_semantics=("parallel",)),
        cost_estimate=cost,
    )(x2, y2, gamma.reshape(1, D), beta.reshape(1, D))
    return out[:M].reshape(B, T, D)


# ----------------------------------------------------------------------------
# Flash-style scaled-dot-product attention with in-kernel mask generation
# ----------------------------------------------------------------------------
def _attn_kernel(qv_ref, kv_ref, q_ref, k_ref, v_ref, o_ref,
                 m_sc, l_sc, acc_sc, *, scale, causal, tq, tk):
    ki = pl.program_id(2)

    @pl.when(ki == 0)
    def _():
        m_sc[...] = jnp.full_like(m_sc, -jnp.inf)
        l_sc[...] = jnp.zeros_like(l_sc)
        acc_sc[...] = jnp.zeros_like(acc_sc)

    q = q_ref[0]  # [H, tq, dh]
    k = k_ref[0]  # [H, tk, dh]
    v = v_ref[0]  # [H, tk, dh]

    # scores: contract last dims directly (no explicit transpose of k)
    s = jnp.einsum("hqd,hkd->hqk", q, k,
                   preferred_element_type=jnp.float32) * scale  # [H, tq, tk]

    # build the pad (+ causal) mask on the VPU from per-row validity vectors
    qvalid = qv_ref[0] > 0.5                     # [tq, 1]
    kvalid = kv_ref[0] > 0.5                     # [1, tk]
    mask = jnp.logical_and(qvalid, kvalid)       # [tq, tk]
    if causal:
        qi = pl.program_id(1)
        q_pos = qi * tq + jax.lax.broadcasted_iota(jnp.int32, (tq, tk), 0)
        k_pos = ki * tk + jax.lax.broadcasted_iota(jnp.int32, (tq, tk), 1)
        mask = jnp.logical_and(mask, q_pos >= k_pos)
    s = jnp.where(mask[None, :, :], s, jnp.float32(-10000.0))

    # online softmax update
    m_prev = m_sc[...]                                   # [H, tq, 1]
    m_new = jnp.maximum(m_prev, jnp.max(s, axis=-1, keepdims=True))
    alpha = jnp.exp(m_prev - m_new)
    p = jnp.exp(s - m_new)                               # [H, tq, tk]
    l_sc[...] = alpha * l_sc[...] + jnp.sum(p, axis=-1, keepdims=True)
    acc_sc[...] = alpha * acc_sc[...] + jnp.einsum(
        "hqk,hkd->hqd", p, v, preferred_element_type=jnp.float32)
    m_sc[...] = m_new

    @pl.when(ki == pl.num_programs(2) - 1)
    def _():
        inv = pl.reciprocal(l_sc[...], approx=False)
        o_ref[0] = (acc_sc[...] * inv).astype(o_ref.dtype)


def scaled_dot_attention(q, k, v, q_valid, k_valid, causal):
    """q: [B,H,Tq,dh], k/v: [B,H,Tk,dh], q_valid: [B,Tq], k_valid: [B,Tk]."""
    B, H, Tq, dh = q.shape
    Tk = k.shape[2]
    scale = 1.0 / math.sqrt(dh)

    # Only tile T when it divides evenly (keeps masked-row semantics exact).
    tq = 128 if Tq % 128 == 0 else Tq
    tk = 128 if Tk % 128 == 0 else Tk
    nq, nk = Tq // tq, Tk // tk

    qv = q_valid.reshape(B, Tq, 1).astype(jnp.float32)
    kv = k_valid.reshape(B, 1, Tk).astype(jnp.float32)

    cost = pl.CostEstimate(
        flops=int(4 * B * H * Tq * Tk * dh),
        transcendentals=int(B * H * Tq * Tk),
        bytes_accessed=int(4 * (2 * B * H * Tq * dh + 2 * B * H * Tk * dh
                                + B * (Tq + Tk))),
    )
    return pl.pallas_call(
        functools.partial(_attn_kernel, scale=scale, causal=causal, tq=tq, tk=tk),
        grid=(B, nq, nk),
        in_specs=[
            pl.BlockSpec((1, tq, 1), lambda b, qi, ki: (b, qi, 0)),
            pl.BlockSpec((1, 1, tk), lambda b, qi, ki: (b, 0, ki)),
            pl.BlockSpec((1, H, tq, dh), lambda b, qi, ki: (b, 0, qi, 0)),
            pl.BlockSpec((1, H, tk, dh), lambda b, qi, ki: (b, 0, ki, 0)),
            pl.BlockSpec((1, H, tk, dh), lambda b, qi, ki: (b, 0, ki, 0)),
        ],
        out_specs=pl.BlockSpec((1, H, tq, dh), lambda b, qi, ki: (b, 0, qi, 0)),
        out_shape=jax.ShapeDtypeStruct((B, H, Tq, dh), jnp.float32),
        scratch_shapes=[
            pltpu.VMEM((H, tq, 1), jnp.float32),
            pltpu.VMEM((H, tq, 1), jnp.float32),
            pltpu.VMEM((H, tq, dh), jnp.float32),
        ],
        compiler_params=pltpu.CompilerParams(
            dimension_semantics=("parallel", "parallel", "arbitrary")),
        cost_estimate=cost,
    )(qv, kv, q, k, v)


# ----------------------------------------------------------------------------
# Model glue (plain JAX around the Pallas kernels)
# ----------------------------------------------------------------------------
def multi_head_attention(q_in, kv_in, q_valid, k_valid, causal, p, n_head):
    B, Tq, D = q_in.shape
    Tk = kv_in.shape[1]
    dh = D // n_head

    if q_in is kv_in:
        # fused Q|K|V projection: one matmul with N = 3D
        w = jnp.concatenate([p["wq"], p["wk"], p["wv"]], axis=1)
        bias = jnp.concatenate([p["bq"], p["bk"], p["bv"]], axis=0)
        qkv = linear(q_in.reshape(B * Tq, D), w, bias)
        q2d, k2d, v2d = jnp.split(qkv, 3, axis=1)
    else:
        q2d = linear(q_in.reshape(B * Tq, D), p["wq"], p["bq"])
        wkv = jnp.concatenate([p["wk"], p["wv"]], axis=1)
        bkv = jnp.concatenate([p["bk"], p["bv"]], axis=0)
        kv2d = linear(kv_in.reshape(B * Tk, D), wkv, bkv)
        k2d, v2d = jnp.split(kv2d, 2, axis=1)

    q = q2d.reshape(B, Tq, n_head, dh).transpose(0, 2, 1, 3)
    k = k2d.reshape(B, Tk, n_head, dh).transpose(0, 2, 1, 3)
    v = v2d.reshape(B, Tk, n_head, dh).transpose(0, 2, 1, 3)

    o = scaled_dot_attention(q, k, v, q_valid, k_valid, causal)  # [B,H,Tq,dh]
    o = o.transpose(0, 2, 1, 3).reshape(B * Tq, D)
    return linear(o, p["wo"], p["bo"]).reshape(B, Tq, D)


def feed_forward(x, p, act):
    B, T, D = x.shape
    h = linear(x.reshape(B * T, D), p["w1"], p["b1"], act=act)
    y = linear(h, p["w2"], p["b2"])
    return y.reshape(B, T, D)


def sinusoidal_pe(max_len, d_model):
    pos = jnp.arange(max_len, dtype=jnp.float32)[:, None]
    i = jnp.arange(0, d_model, 2, dtype=jnp.float32)
    angles = pos / jnp.power(10000.0, i / d_model)
    pe = jnp.zeros((max_len, d_model), jnp.float32)
    pe = pe.at[:, 0::2].set(jnp.sin(angles))
    pe = pe.at[:, 1::2].set(jnp.cos(angles))
    return pe


def encoder_layer(x, src_valid, p, n_head, act):
    a = multi_head_attention(x, x, src_valid, src_valid, False, p["attn"], n_head)
    x = add_layernorm(x, a, p["ln1_g"], p["ln1_b"])
    f = feed_forward(x, p["ffn"], act)
    x = add_layernorm(x, f, p["ln2_g"], p["ln2_b"])
    return x


def decoder_layer(y, enc, trg_valid, src_valid, p, n_head, act):
    a = multi_head_attention(y, y, trg_valid, trg_valid, True, p["self_attn"], n_head)
    y = add_layernorm(y, a, p["ln1_g"], p["ln1_b"])
    # Faithful to the reference: the cross-attention mask is make_pad_mask(src, src),
    # i.e. both query-row and key validity come from src (requires Ts == Tt).
    # TODO(synk): build the cross mask from (trg, src) if Ts != Tt support is needed.
    c = multi_head_attention(y, enc, src_valid, src_valid, False, p["cross_attn"], n_head)
    y = add_layernorm(y, c, p["ln2_g"], p["ln2_b"])
    f = feed_forward(y, p["ffn"], act)
    y = add_layernorm(y, f, p["ln3_g"], p["ln3_b"])
    return y


def transformer_forward(params, src, trg, *, n_head, act,
                        src_pad_idx, trg_pad_idx):
    # per-row validity vectors replace the materialized [B,1,T,T] masks
    src_valid = (src != src_pad_idx).astype(jnp.float32)   # [B, Ts]
    trg_valid = (trg != trg_pad_idx).astype(jnp.float32)   # [B, Tt]

    # Encoder
    Ts = src.shape[1]
    x = params["enc"]["tok_emb"][src] + params["enc"]["pe"][:Ts]
    for lp in params["enc"]["layers"]:
        x = encoder_layer(x, src_valid, lp, n_head, act)
    enc = x

    # Decoder
    Tt = trg.shape[1]
    y = params["dec"]["tok_emb"][trg] + params["dec"]["pe"][:Tt]
    for lp in params["dec"]["layers"]:
        y = decoder_layer(y, enc, trg_valid, src_valid, lp, n_head, act)

    B, T, D = y.shape
    out = linear(y.reshape(B * T, D), params["dec"]["out_w"], params["dec"]["out_b"])
    return out.reshape(B, T, -1)


# ----------------------------------------------------------------------------
# Deterministic parameter init
# ----------------------------------------------------------------------------
def init_params(key, enc_voc, dec_voc, max_len, d_model, d_ff, n_layers):
    keys = iter(jax.random.split(key, 512))

    def dense(din, dout):
        w = jax.random.normal(next(keys), (din, dout), jnp.float32) / math.sqrt(din)
        b = jnp.zeros((dout,), jnp.float32)
        return w, b

    def attn_params():
        wq, bq = dense(d_model, d_model)
        wk, bk = dense(d_model, d_model)
        wv, bv = dense(d_model, d_model)
        wo, bo = dense(d_model, d_model)
        return dict(wq=wq, bq=bq, wk=wk, bk=bk, wv=wv, bv=bv, wo=wo, bo=bo)

    def ffn_params():
        w1, b1 = dense(d_model, d_ff)
        w2, b2 = dense(d_ff, d_model)
        return dict(w1=w1, b1=b1, w2=w2, b2=b2)

    ln = lambda: (jnp.ones((d_model,), jnp.float32), jnp.zeros((d_model,), jnp.float32))

    pe = sinusoidal_pe(max_len, d_model)

    enc_layers = []
    for _ in range(n_layers):
        g1, b1 = ln(); g2, b2 = ln()
        enc_layers.append(dict(attn=attn_params(), ffn=ffn_params(),
                               ln1_g=g1, ln1_b=b1, ln2_g=g2, ln2_b=b2))
    enc = dict(tok_emb=jax.random.normal(next(keys), (enc_voc, d_model), jnp.float32) * 0.02,
               pe=pe, layers=enc_layers)

    dec_layers = []
    for _ in range(n_layers):
        g1, b1 = ln(); g2, b2 = ln(); g3, b3 = ln()
        dec_layers.append(dict(self_attn=attn_params(), cross_attn=attn_params(),
                               ffn=ffn_params(),
                               ln1_g=g1, ln1_b=b1, ln2_g=g2, ln2_b=b2,
                               ln3_g=g3, ln3_b=b3))
    out_w, out_b = dense(d_model, dec_voc)
    dec = dict(tok_emb=jax.random.normal(next(keys), (dec_voc, d_model), jnp.float32) * 0.02,
               pe=pe, layers=dec_layers, out_w=out_w, out_b=out_b)

    return dict(enc=enc, dec=dec)


# ----------------------------------------------------------------------------
if __name__ == "__main__":
    # Small shapes consistent with the module's forward:
    B, T = 2, 8
    enc_voc = dec_voc = 16
    max_len = 8
    d_model, n_head, d_ff, n_layers = 32, 4, 64, 2
    src_pad_idx = trg_pad_idx = 0
    activation = "relu"

    key = jax.random.PRNGKey(0)
    k_param, k_src, k_trg = jax.random.split(key, 3)
    params = init_params(k_param, enc_voc, dec_voc, max_len, d_model, d_ff, n_layers)

    src = jax.random.randint(k_src, (B, T), 1, enc_voc, dtype=jnp.int32)
    trg = jax.random.randint(k_trg, (B, T), 1, dec_voc, dtype=jnp.int32)
    # add a couple of pad tokens so the pad masks actually do something
    src = src.at[:, -2:].set(src_pad_idx)
    trg = trg.at[:, -1:].set(trg_pad_idx)

    fwd = jax.jit(functools.partial(transformer_forward, n_head=n_head, act=activation,
                                    src_pad_idx=src_pad_idx, trg_pad_idx=trg_pad_idx))
    out = fwd(params, src, trg)
    out = jax.block_until_ready(out)

    assert out.shape == (B, T, dec_voc)
    assert bool(jnp.all(jnp.isfinite(out)))
    print("KERNEL_OK")
</pallas_src>

<mosaic_0001>
module attributes {stable_mosaic.version = 11 : i64} {
  func.func @_linear_kernel(%arg0: i32, %arg1: i32, %arg2: i32, %arg3: memref<16x128xf32, #tpu.memory_space<vmem>>, %arg4: memref<128x128xf32, #tpu.memory_space<vmem>>, %arg5: memref<1x128xf32, #tpu.memory_space<vmem>>, %arg6: memref<16x128xf32, #tpu.memory_space<vmem>>, %arg7: memref<16x128xf32, #tpu.memory_space<vmem>>) attributes {dimension_semantics = [#tpu.dimension_semantics<parallel>, #tpu.dimension_semantics<parallel>, #tpu.dimension_semantics<arbitrary>], iteration_bounds = array<i64: 1, 1, 1>, scalar_prefetch = 0 : i64, scratch_operands = 1 : i64, tpu.core_type = #tpu.core_type<tc>, window_params = [{transform_indices = @transform_0, window_bounds = array<i64: 16, 128>}, {transform_indices = @transform_1, window_bounds = array<i64: 128, 128>}, {transform_indices = @transform_2, window_bounds = array<i64: 1, 128>}, {transform_indices = @transform_3, window_bounds = array<i64: 16, 128>}]} {
    %c0_i32 = arith.constant 0 : i32
    %0 = arith.cmpi eq, %arg2, %c0_i32 : i32
    %1 = arith.extui %0 : i1 to i32
    %c0_i32_0 = arith.constant 0 : i32
    %2 = arith.cmpi ne, %1, %c0_i32_0 : i32
    scf.if %2 {
      %cst_10 = arith.constant 0.000000e+00 : f32
      %12 = vector.broadcast %cst_10 : f32 to vector<16x128xf32>
      %c0_11 = arith.constant 0 : index
      %c0_12 = arith.constant 0 : index
      %13 = vector.load %arg7[%c0_11, %c0_12] : memref<16x128xf32, #tpu.memory_space<vmem>>, vector<16x128xf32>
      tpu.vector_store %arg7[%c0_11, %c0_12], %12 {strides = array<i32>} : memref<16x128xf32, #tpu.memory_space<vmem>>, vector<16x128xf32>,
    } else {
    }
    %c0 = arith.constant 0 : index
    %c0_1 = arith.constant 0 : index
    %3 = vector.load %arg7[%c0, %c0_1] : memref<16x128xf32, #tpu.memory_space<vmem>>, vector<16x128xf32>
    %c0_2 = arith.constant 0 : index
    %c0_3 = arith.constant 0 : index
    %4 = vector.load %arg3[%c0_2, %c0_3] : memref<16x128xf32, #tpu.memory_space<vmem>>, vector<16x128xf32>
    %c0_4 = arith.constant 0 : index
    %c0_5 = arith.constant 0 : index
    %5 = vector.load %arg4[%c0_4, %c0_5] : memref<128x128xf32, #tpu.memory_space<vmem>>, vector<128x128xf32>
    %cst = arith.constant dense<0.000000e+00> : vector<16x128xf32>
    %6 = tpu.matmul %4, %5, %cst {dimension_numbers = #tpu.dot_dimension_numbers<[1], [0], [0], [1], [0, 0, 1, 1], [], []>} : vector<16x128xf32>, vector<128x128xf32>, vector<16x128xf32> -> vector<16x128xf32>
    %7 = arith.addf %3, %6 : vector<16x128xf32>
    %c0_6 = arith.constant 0 : index
    %c0_7 = arith.constant 0 : index
    %8 = vector.load %arg7[%c0_6, %c0_7] : memref<16x128xf32, #tpu.memory_space<vmem>>, vector<16x128xf32>
    tpu.vector_store %arg7[%c0_6, %c0_7], %7 {strides = array<i32>} : memref<16x128xf32, #tpu.memory_space<vmem>>, vector<16x128xf32>,
    %c0_i32_8 = arith.constant 0 : i32
    %9 = arith.cmpi eq, %arg2, %c0_i32_8 : i32
    %10 = arith.extui %9 : i1 to i32
    %c0_i32_9 = arith.constant 0 : i32
    %11 = arith.cmpi ne, %10, %c0_i32_9 : i32
    scf.if %11 {
      %c0_10 = arith.constant 0 : index
      %c0_11 = arith.constant 0 : index
      %12 = vector.load %arg7[%c0_10, %c0_11] : memref<16x128xf32, #tpu.memory_space<vmem>>, vector<16x128xf32>
      %c0_12 = arith.constant 0 : index
      %c0_13 = arith.constant 0 : index
      %13 = vector.load %arg5[%c0_12, %c0_13] : memref<1x128xf32, #tpu.memory_space<vmem>>, vector<1x128xf32>
      %14 = vector.broadcast %13 : vector<1x128xf32> to vector<16x128xf32>
      %15 = arith.addf %12, %14 : vector<16x128xf32>
      %c0_14 = arith.constant 0 : index
      %c0_15 = arith.constant 0 : index
      %16 = vector.load %arg6[%c0_14, %c0_15] : memref<16x128xf32, #tpu.memory_space<vmem>>, vector<16x128xf32>
      tpu.vector_store %arg6[%c0_14, %c0_15], %15 {strides = array<i32>} : memref<16x128xf32, #tpu.memory_space<vmem>>, vector<16x128xf32>,
    } else {
    }
    return
  }
  func.func @transform_0(%arg0: i32, %arg1: i32, %arg2: i32) -> (i32, i32) {
    %c0_i32 = arith.constant 0 : i32
    return %arg0, %arg2 : i32, i32
  }
  func.func @transform_1(%arg0: i32, %arg1: i32, %arg2: i32) -> (i32, i32) {
    %c0_i32 = arith.constant 0 : i32
    return %arg2, %arg1 : i32, i32
  }
  func.func @transform_2(%arg0: i32, %arg1: i32, %arg2: i32) -> (i32, i32) {
    %c0_i32 = arith.constant 0 : i32
    %c0_i32_0 = arith.constant 0 : i32
    return %c0_i32, %arg1 : i32, i32
  }
  func.func @transform_3(%arg0: i32, %arg1: i32, %arg2: i32) -> (i32, i32) {
    %c0_i32 = arith.constant 0 : i32
    return %arg0, %arg1 : i32, i32
  }
}

module attributes {stable_mosaic.version = 11 : i64} {
  func.func @_attn_kernel(%arg0: i32, %arg1: i32, %arg2: i32, %arg3: memref<1x8x1xf32, #tpu.memory_space<vmem>>, %arg4: memref<1x1x8xf32, #tpu.memory_space<vmem>>, %arg5: memref<1x4x8x8xf32, #tpu.memory_space<vmem>>, %arg6: memref<1x4x8x8xf32, #tpu.memory_space<vmem>>, %arg7: memref<1x4x8x8xf32, #tpu.memory_space<vmem>>, %arg8: memref<1x4x8x8xf32, #tpu.memory_space<vmem>>, %arg9: memref<4x8x1xf32, #tpu.memory_space<vmem>>, %arg10: memref<4x8x1xf32, #tpu.memory_space<vmem>>, %arg11: memref<4x8x8xf32, #tpu.memory_space<vmem>>) attributes {dimension_semantics = [#tpu.dimension_semantics<parallel>, #tpu.dimension_semantics<parallel>, #tpu.dimension_semantics<arbitrary>], iteration_bounds = array<i64: 2, 1, 1>, scalar_prefetch = 0 : i64, scratch_operands = 3 : i64, tpu.core_type = #tpu.core_type<tc>, window_params = [{transform_indices = @transform_0, window_bounds = array<i64: 1, 8, 1>}, {transform_indices = @transform_1, window_bounds = array<i64: 1, 1, 8>}, {transform_indices = @transform_2, window_bounds = array<i64: 1, 4, 8, 8>}, {transform_indices = @transform_3, window_bounds = array<i64: 1, 4, 8, 8>}, {transform_indices = @transform_4, window_bounds = array<i64: 1, 4, 8, 8>}, {transform_indices = @transform_5, window_bounds = array<i64: 1, 4, 8, 8>}]} {
    %c0_i32 = arith.constant 0 : i32
    %0 = arith.cmpi eq, %arg2, %c0_i32 : i32
    %1 = arith.extui %0 : i1 to i32
    %c0_i32_0 = arith.constant 0 : i32
    %2 = arith.cmpi ne, %1, %c0_i32_0 : i32
    scf.if %2 {
      %cst_45 = arith.constant 0xFF800000 : f32
      %53 = vector.broadcast %cst_45 : f32 to vector<4x8x1xf32>
      %c0_46 = arith.constant 0 : index
      %c0_47 = arith.constant 0 : index
      %c0_48 = arith.constant 0 : index
      %54 = vector.load %arg9[%c0_46, %c0_47, %c0_48] : memref<4x8x1xf32, #tpu.memory_space<vmem>>, vector<4x8x1xf32>
      tpu.vector_store %arg9[%c0_46, %c0_47, %c0_48], %53 {strides = array<i32>} : memref<4x8x1xf32, #tpu.memory_space<vmem>>, vector<4x8x1xf32>,
      %cst_49 = arith.constant 0.000000e+00 : f32
      %55 = vector.broadcast %cst_49 : f32 to vector<4x8x1xf32>
      %c0_50 = arith.constant 0 : index
      %c0_51 = arith.constant 0 : index
      %c0_52 = arith.constant 0 : index
      %56 = vector.load %arg10[%c0_50, %c0_51, %c0_52] : memref<4x8x1xf32, #tpu.memory_space<vmem>>, vector<4x8x1xf32>
      tpu.vector_store %arg10[%c0_50, %c0_51, %c0_52], %55 {strides = array<i32>} : memref<4x8x1xf32, #tpu.memory_space<vmem>>, vector<4x8x1xf32>,
      %cst_53 = arith.constant 0.000000e+00 : f32
      %57 = vector.broadcast %cst_53 : f32 to vector<4x8x8xf32>
      %c0_54 = arith.constant 0 : index
      %c0_55 = arith.constant 0 : index
      %c0_56 = arith.constant 0 : index
      %58 = vector.load %arg11[%c0_54, %c0_55, %c0_56] : memref<4x8x8xf32, #tpu.memory_space<vmem>>, vector<4x8x8xf32>
      tpu.vector_store %arg11[%c0_54, %c0_55, %c0_56], %57 {strides = array<i32>} : memref<4x8x8xf32, #tpu.memory_space<vmem>>, vector<4x8x8xf32>,
    } else {
    }
    %c0 = arith.constant 0 : index
    %c0_1 = arith.constant 0 : index
    %c0_2 = arith.constant 0 : index
    %c0_3 = arith.constant 0 : index
    %3 = vector.load %arg5[%c0, %c0_1, %c0_2, %c0_3] : memref<1x4x8x8xf32, #tpu.memory_space<vmem>>, vector<1x4x8x8xf32>
    %4 = vector.shape_cast %3 : vector<1x4x8x8xf32> to vector<4x8x8xf32>
    %c0_4 = arith.constant 0 : index
    %c0_5 = arith.constant 0 : index
    %c0_6 = arith.constant 0 : index
    %c0_7 = arith.constant 0 : index
    %5 = vector.load %arg6[%c0_4, %c0_5, %c0_6, %c0_7] : memref<1x4x8x8xf32, #tpu.memory_space<vmem>>, vector<1x4x8x8xf32>
    %6 = vector.shape_cast %5 : vector<1x4x8x8xf32> to vector<4x8x8xf32>
    %c0_8 = arith.constant 0 : index
    %c0_9 = arith.constant 0 : index
    %c0_10 = arith.constant 0 : index
    %c0_11 = arith.constant 0 : index
    %7 = vector.load %arg7[%c0_8, %c0_9, %c0_10, %c0_11] : memref<1x4x8x8xf32, #tpu.memory_space<vmem>>, vector<1x4x8x8xf32>
    %8 = vector.shape_cast %7 : vector<1x4x8x8xf32> to vector<4x8x8xf32>
    "tpu.trace_start"() <{level = 10 : i32, message = "hqd,hkd->hqk"}> : () -> ()
    %cst = arith.constant dense<0.000000e+00> : vector<4x8x8xf32>
    %9 = tpu.matmul %4, %6, %cst {dimension_numbers = #tpu.dot_dimension_numbers<[2], [2], [1], [1], [0, 0, 0, 1, 1, 1], [0], [0]>} : vector<4x8x8xf32>, vector<4x8x8xf32>, vector<4x8x8xf32> -> vector<4x8x8xf32>
    "tpu.trace_stop"() : () -> ()
    %cst_12 = arith.constant 0.353553385 : f32
    %10 = vector.broadcast %cst_12 : f32 to vector<4x8x8xf32>
    %11 = arith.mulf %9, %10 : vector<4x8x8xf32>
    %c0_13 = arith.constant 0 : index
    %c0_14 = arith.constant 0 : index
    %c0_15 = arith.constant 0 : index
    %12 = vector.load %arg3[%c0_13, %c0_14, %c0_15] : memref<1x8x1xf32, #tpu.memory_space<vmem>>, vector<1x8x1xf32>
    %13 = vector.shape_cast %12 : vector<1x8x1xf32> to vector<8x1xf32>
    %cst_16 = arith.constant 5.000000e-01 : f32
    %14 = vector.broadcast %cst_16 : f32 to vector<8x1xf32>
    %15 = arith.cmpf ogt, %13, %14 : vector<8x1xf32>
    %c0_17 = arith.constant 0 : index
    %c0_18 = arith.constant 0 : index
    %c0_19 = arith.constant 0 : index
    %16 = vector.load %arg4[%c0_17, %c0_18, %c0_19] : memref<1x1x8xf32, #tpu.memory_space<vmem>>, vector<1x1x8xf32>
    %17 = vector.shape_cast %16 : vector<1x1x8xf32> to vector<1x8xf32>
    %cst_20 = arith.constant 5.000000e-01 : f32
    %18 = vector.broadcast %cst_20 : f32 to vector<1x8xf32>
    %19 = arith.cmpf ogt, %17, %18 : vector<1x8xf32>
    %20 = vector.broadcast %15 : vector<8x1xi1> to vector<8x8xi1>
    %21 = vector.broadcast %19 : vector<1x8xi1> to vector<8x8xi1>
    %22 = arith.andi %20, %21 : vector<8x8xi1>
    %23 = vector.shape_cast %22 : vector<8x8xi1> to vector<1x8x8xi1>
    %cst_21 = arith.constant -1.000000e+04 : f32
    %24 = vector.shape_cast %23 : vector<1x8x8xi1> to vector<1x8x8xi1>
    %25 = vector.broadcast %24 : vector<1x8x8xi1> to vector<4x8x8xi1>
    %26 = vector.broadcast %cst_21 : f32 to vector<4x8x8xf32>
    %27 = arith.select %25, %11, %26 : vector<4x8x8xi1>, vector<4x8x8xf32>
    %c0_22 = arith.constant 0 : index
    %c0_23 = arith.constant 0 : index
    %c0_24 = arith.constant 0 : index
    %28 = vector.load %arg9[%c0_22, %c0_23, %c0_24] : memref<4x8x1xf32, #tpu.memory_space<vmem>>, vector<4x8x1xf32>
    %cst_25 = arith.constant dense<0xFF800000> : vector<4x8xf32>
    %29 = vector.multi_reduction <maximumf>, %27, %cst_25 [2] : vector<4x8x8xf32> to vector<4x8xf32>
    %30 = vector.shape_cast %29 : vector<4x8xf32> to vector<4x8x1xf32>
    %31 = arith.maximumf %28, %30 : vector<4x8x1xf32>
    %32 = arith.subf %28, %31 : vector<4x8x1xf32>
    %33 = math.exp %32 : vector<4x8x1xf32>
    %34 = vector.broadcast %31 : vector<4x8x1xf32> to vector<4x8x8xf32>
    %35 = arith.subf %27, %34 : vector<4x8x8xf32>
    %36 = math.exp %35 : vector<4x8x8xf32>
    %c0_26 = arith.constant 0 : index
    %c0_27 = arith.constant 0 : index
    %c0_28 = arith.constant 0 : index
    %37 = vector.load %arg10[%c0_26, %c0_27, %c0_28] : memref<4x8x1xf32, #tpu.memory_space<vmem>>, vector<4x8x1xf32>
    %38 = arith.mulf %33, %37 : vector<4x8x1xf32>
    %cst_29 = arith.constant dense<0.000000e+00> : vector<4x8xf32>
    %39 = vector.multi_reduction <add>, %36, %cst_29 [2] : vector<4x8x8xf32> to vector<4x8xf32>
    %40 = vector.shape_cast %39 : vector<4x8xf32> to vector<4x8x1xf32>
    %41 = arith.addf %38, %40 : vector<4x8x1xf32>
    %c0_30 = arith.constant 0 : index
    %c0_31 = arith.constant 0 : index
    %c0_32 = arith.constant 0 : index
    %42 = vector.load %arg10[%c0_30, %c0_31, %c0_32] : memref<4x8x1xf32, #tpu.memory_space<vmem>>, vector<4x8x1xf32>
    tpu.vector_store %arg10[%c0_30, %c0_31, %c0_32], %41 {strides = array<i32>} : memref<4x8x1xf32, #tpu.memory_space<vmem>>, vector<4x8x1xf32>,
    %c0_33 = arith.constant 0 : index
    %c0_34 = arith.constant 0 : index
    %c0_35 = arith.constant 0 : index
    %43 = vector.load %arg11[%c0_33, %c0_34, %c0_35] : memref<4x8x8xf32, #tpu.memory_space<vmem>>, vector<4x8x8xf32>
    %44 = vector.broadcast %33 : vector<4x8x1xf32> to vector<4x8x8xf32>
    %45 = arith.mulf %44, %43 : vector<4x8x8xf32>
    "tpu.trace_start"() <{level = 10 : i32, message = "hqk,hkd->hqd"}> : () -> ()
    %cst_36 = arith.constant dense<0.000000e+00> : vector<4x8x8xf32>
    %46 = tpu.matmul %36, %8, %cst_36 {dimension_numbers = #tpu.dot_dimension_numbers<[2], [1], [1], [2], [0, 0, 0, 1, 1, 2], [0], [0]>} : vector<4x8x8xf32>, vector<4x8x8xf32>, vector<4x8x8xf32> -> vector<4x8x8xf32>
    "tpu.trace_stop"() : () -> ()
    %47 = arith.addf %45, %46 : vector<4x8x8xf32>
    %c0_37 = arith.constant 0 : index
    %c0_38 = arith.constant 0 : index
    %c0_39 = arith.constant 0 : index
    %48 = vector.load %arg11[%c0_37, %c0_38, %c0_39] : memref<4x8x8xf32, #tpu.memory_space<vmem>>, vector<4x8x8xf32>
    tpu.vector_store %arg11[%c0_37, %c0_38, %c0_39], %47 {strides = array<i32>} : memref<4x8x8xf32, #tpu.memory_space<vmem>>, vector<4x8x8xf32>,
    %c0_40 = arith.constant 0 : index
    %c0_41 = arith.constant 0 : index
    %c0_42 = arith.constant 0 : index
    %49 = vector.load %arg9[%c0_40, %c0_41, %c0_42] : memref<4x8x1xf32, #tpu.memory_space<vmem>>, vector<4x8x1xf32>
    tpu.vector_store %arg9[%c0_40, %c0_41, %c0_42], %31 {strides = array<i32>} : memref<4x8x1xf32, #tpu.memory_space<vmem>>, vector<4x8x1xf32>,
    %c0_i32_43 = arith.constant 0 : i32
    %50 = arith.cmpi eq, %arg2, %c0_i32_43 : i32
    %51 = arith.extui %50 : i1 to i32
    %c0_i32_44 = arith.constant 0 : i32
    %52 = arith.cmpi ne, %51, %c0_i32_44 : i32
    scf.if %52 {
      %c0_45 = arith.constant 0 : index
      %c0_46 = arith.constant 0 : index
      %c0_47 = arith.constant 0 : index
      %53 = vector.load %arg10[%c0_45, %c0_46, %c0_47] : memref<4x8x1xf32, #tpu.memory_space<vmem>>, vector<4x8x1xf32>
      %54 = tpu.reciprocal %53 : vector<4x8x1xf32> -> vector<4x8x1xf32>
      %c0_48 = arith.constant 0 : index
      %c0_49 = arith.constant 0 : index
      %c0_50 = arith.constant 0 : index
      %55 = vector.load %arg11[%c0_48, %c0_49, %c0_50] : memref<4x8x8xf32, #tpu.memory_space<vmem>>, vector<4x8x8xf32>
      %56 = vector.broadcast %54 : vector<4x8x1xf32> to vector<4x8x8xf32>
      %57 = arith.mulf %55, %56 : vector<4x8x8xf32>
      %c0_51 = arith.constant 0 : index
      %c0_52 = arith.constant 0 : index
      %c0_53 = arith.constant 0 : index
      %c0_54 = arith.constant 0 : index
      %58 = vector.load %arg8[%c0_51, %c0_52, %c0_53, %c0_54] : memref<1x4x8x8xf32, #tpu.memory_space<vmem>>, vector<1x4x8x8xf32>
      %59 = vector.shape_cast %58 : vector<1x4x8x8xf32> to vector<4x8x8xf32>
      %60 = vector.shape_cast %57 : vector<4x8x8xf32> to vector<1x4x8x8xf32>
      tpu.vector_store %arg8[%c0_51, %c0_52, %c0_53, %c0_54], %60 {strides = array<i32>} : memref<1x4x8x8xf32, #tpu.memory_space<vmem>>, vector<1x4x8x8xf32>,
    } else {
    }
    return
  }
  func.func @transform_0(%arg0: i32, %arg1: i32, %arg2: i32) -> (i32, i32, i32) {
    %c0_i32 = arith.constant 0 : i32
    %c0_i32_0 = arith.constant 0 : i32
    return %arg0, %arg1, %c0_i32 : i32, i32, i32
  }
  func.func @transform_1(%arg0: i32, %arg1: i32, %arg2: i32) -> (i32, i32, i32) {
    %c0_i32 = arith.constant 0 : i32
    %c0_i32_0 = arith.constant 0 : i32
    return %arg0, %c0_i32, %arg2 : i32, i32, i32
  }
  func.func @transform_2(%arg0: i32, %arg1: i32, %arg2: i32) -> (i32, i32, i32, i32) {
    %c0_i32 = arith.constant 0 : i32
    %c0_i32_0 = arith.constant 0 : i32
    %c0_i32_1 = arith.constant 0 : i32
    return %arg0, %c0_i32, %arg1, %c0_i32_0 : i32, i32, i32, i32
  }
  func.func @transform_3(%arg0: i32, %arg1: i32, %arg2: i32) -> (i32, i32, i32, i32) {
    %c0_i32 = arith.constant 0 : i32
    %c0_i32_0 = arith.constant 0 : i32
    %c0_i32_1 = arith.constant 0 : i32
    return %arg0, %c0_i32, %arg2, %c0_i32_0 : i32, i32, i32, i32
  }
  func.func @transform_4(%arg0: i32, %arg1: i32, %arg2: i32) -> (i32, i32, i32, i32) {
    %c0_i32 = arith.constant 0 : i32
    %c0_i32_0 = arith.constant 0 : i32
    %c0_i32_1 = arith.constant 0 : i32
    return %arg0, %c0_i32, %arg2, %c0_i32_0 : i32, i32, i32, i32
  }
  func.func @transform_5(%arg0: i32, %arg1: i32, %arg2: i32) -> (i32, i32, i32, i32) {
    %c0_i32 = arith.constant 0 : i32
    %c0_i32_0 = arith.constant 0 : i32
    %c0_i32_1 = arith.constant 0 : i32
    return %arg0, %c0_i32, %arg1, %c0_i32_0 : i32, i32, i32, i32
  }
}

module attributes {stable_mosaic.version = 11 : i64} {
  func.func @_add_layernorm_kernel(%arg0: i32, %arg1: memref<16x32xf32, #tpu.memory_space<vmem>>, %arg2: memref<16x32xf32, #tpu.memory_space<vmem>>, %arg3: memref<1x32xf32, #tpu.memory_space<vmem>>, %arg4: memref<1x32xf32, #tpu.memory_space<vmem>>, %arg5: memref<16x32xf32, #tpu.memory_space<vmem>>) attributes {dimension_semantics = [#tpu.dimension_semantics<parallel>], iteration_bounds = array<i64: 1>, scalar_prefetch = 0 : i64, scratch_operands = 0 : i64, tpu.core_type = #tpu.core_type<tc>, window_params = [{transform_indices = @transform_0, window_bounds = array<i64: 16, 32>}, {transform_indices = @transform_1, window_bounds = array<i64: 16, 32>}, {pipeline_mode = #tpu.pipeline_mode<synchronous>, transform_indices = @transform_2, window_bounds = array<i64: 1, 32>}, {pipeline_mode = #tpu.pipeline_mode<synchronous>, transform_indices = @transform_3, window_bounds = array<i64: 1, 32>}, {transform_indices = @transform_4, window_bounds = array<i64: 16, 32>}]} {
    %c0 = arith.constant 0 : index
    %c0_0 = arith.constant 0 : index
    %0 = vector.load %arg1[%c0, %c0_0] : memref<16x32xf32, #tpu.memory_space<vmem>>, vector<16x32xf32>
    %c0_1 = arith.constant 0 : index
    %c0_2 = arith.constant 0 : index
    %1 = vector.load %arg2[%c0_1, %c0_2] : memref<16x32xf32, #tpu.memory_space<vmem>>, vector<16x32xf32>
    %2 = arith.addf %0, %1 : vector<16x32xf32>
    %cst = arith.constant dense<0.000000e+00> : vector<16xf32>
    %3 = vector.multi_reduction <add>, %2, %cst [1] : vector<16x32xf32> to vector<16xf32>
    %4 = vector.shape_cast %3 : vector<16xf32> to vector<16x1xf32>
    %cst_3 = arith.constant 3.200000e+01 : f32
    %5 = vector.broadcast %cst_3 : f32 to vector<16x1xf32>
    %6 = arith.divf %4, %5 : vector<16x1xf32>
    %7 = vector.broadcast %6 : vector<16x1xf32> to vector<16x32xf32>
    %8 = arith.subf %2, %7 : vector<16x32xf32>
    %9 = arith.mulf %8, %8 : vector<16x32xf32>
    %cst_4 = arith.constant dense<0.000000e+00> : vector<16xf32>
    %10 = vector.multi_reduction <add>, %9, %cst_4 [1] : vector<16x32xf32> to vector<16xf32>
    %11 = vector.shape_cast %10 : vector<16xf32> to vector<16x1xf32>
    %cst_5 = arith.constant 3.200000e+01 : f32
    %12 = vector.broadcast %cst_5 : f32 to vector<16x1xf32>
    %13 = arith.divf %11, %12 : vector<16x1xf32>
    %cst_6 = arith.constant 9.99999996E-13 : f32
    %14 = vector.broadcast %cst_6 : f32 to vector<16x1xf32>
    %15 = arith.addf %13, %14 : vector<16x1xf32>
    %16 = math.rsqrt %15 : vector<16x1xf32>
    %17 = vector.broadcast %6 : vector<16x1xf32> to vector<16x32xf32>
    %18 = arith.subf %2, %17 : vector<16x32xf32>
    %19 = vector.broadcast %16 : vector<16x1xf32> to vector<16x32xf32>
    %20 = arith.mulf %18, %19 : vector<16x32xf32>
    %c0_7 = arith.constant 0 : index
    %c0_8 = arith.constant 0 : index
    %21 = vector.load %arg3[%c0_7, %c0_8] : memref<1x32xf32, #tpu.memory_space<vmem>>, vector<1x32xf32>
    %22 = vector.broadcast %21 : vector<1x32xf32> to vector<16x32xf32>
    %23 = arith.mulf %20, %22 : vector<16x32xf32>
    %c0_9 = arith.constant 0 : index
    %c0_10 = arith.constant 0 : index
    %24 = vector.load %arg4[%c0_9, %c0_10] : memref<1x32xf32, #tpu.memory_space<vmem>>, vector<1x32xf32>
    %25 = vector.broadcast %24 : vector<1x32xf32> to vector<16x32xf32>
    %26 = arith.addf %23, %25 : vector<16x32xf32>
    %c0_11 = arith.constant 0 : index
    %c0_12 = arith.constant 0 : index
    %27 = vector.load %arg5[%c0_11, %c0_12] : memref<16x32xf32, #tpu.memory_space<vmem>>, vector<16x32xf32>
    tpu.vector_store %arg5[%c0_11, %c0_12], %26 {strides = array<i32>} : memref<16x32xf32, #tpu.memory_space<vmem>>, vector<16x32xf32>,
    return
  }
  func.func @transform_0(%arg0: i32) -> (i32, i32) {
    %c0_i32 = arith.constant 0 : i32
    %c0_i32_0 = arith.constant 0 : i32
    return %arg0, %c0_i32 : i32, i32
  }
  func.func @transform_1(%arg0: i32) -> (i32, i32) {
    %c0_i32 = arith.constant 0 : i32
    %c0_i32_0 = arith.constant 0 : i32
    return %arg0, %c0_i32 : i32, i32
  }
  func.func @transform_2(%arg0: i32) -> (i32, i32) {
    %c0_i32 = arith.constant 0 : i32
    %c0_i32_0 = arith.constant 0 : i32
    %c0_i32_1 = arith.constant 0 : i32
    return %c0_i32, %c0_i32_0 : i32, i32
  }
  func.func @transform_3(%arg0: i32) -> (i32, i32) {
    %c0_i32 = arith.constant 0 : i32
    %c0_i32_0 = arith.constant 0 : i32
    %c0_i32_1 = arith.constant 0 : i32
    return %c0_i32, %c0_i32_0 : i32, i32
  }
  func.func @transform_4(%arg0: i32) -> (i32, i32) {
    %c0_i32 = arith.constant 0 : i32
    %c0_i32_0 = arith.constant 0 : i32
    return %arg0, %c0_i32 : i32, i32
  }
}

module attributes {stable_mosaic.version = 11 : i64} {
  func.func @_linear_kernel(%arg0: i32, %arg1: i32, %arg2: i32, %arg3: memref<16x128xf32, #tpu.memory_space<vmem>>, %arg4: memref<128x128xf32, #tpu.memory_space<vmem>>, %arg5: memref<1x128xf32, #tpu.memory_space<vmem>>, %arg6: memref<16x128xf32, #tpu.memory_space<vmem>>, %arg7: memref<16x128xf32, #tpu.memory_space<vmem>>) attributes {dimension_semantics = [#tpu.dimension_semantics<parallel>, #tpu.dimension_semantics<parallel>, #tpu.dimension_semantics<arbitrary>], iteration_bounds = array<i64: 1, 1, 1>, scalar_prefetch = 0 : i64, scratch_operands = 1 : i64, tpu.core_type = #tpu.core_type<tc>, window_params = [{transform_indices = @transform_0, window_bounds = array<i64: 16, 128>}, {transform_indices = @transform_1, window_bounds = array<i64: 128, 128>}, {transform_indices = @transform_2, window_bounds = array<i64: 1, 128>}, {transform_indices = @transform_3, window_bounds = array<i64: 16, 128>}]} {
    %c0_i32 = arith.constant 0 : i32
    %0 = arith.cmpi eq, %arg2, %c0_i32 : i32
    %1 = arith.extui %0 : i1 to i32
    %c0_i32_0 = arith.constant 0 : i32
    %2 = arith.cmpi ne, %1, %c0_i32_0 : i32
    scf.if %2 {
      %cst_10 = arith.constant 0.000000e+00 : f32
      %12 = vector.broadcast %cst_10 : f32 to vector<16x128xf32>
      %c0_11 = arith.constant 0 : index
      %c0_12 = arith.constant 0 : index
      %13 = vector.load %arg7[%c0_11, %c0_12] : memref<16x128xf32, #tpu.memory_space<vmem>>, vector<16x128xf32>
      tpu.vector_store %arg7[%c0_11, %c0_12], %12 {strides = array<i32>} : memref<16x128xf32, #tpu.memory_space<vmem>>, vector<16x128xf32>,
    } else {
    }
    %c0 = arith.constant 0 : index
    %c0_1 = arith.constant 0 : index
    %3 = vector.load %arg7[%c0, %c0_1] : memref<16x128xf32, #tpu.memory_space<vmem>>, vector<16x128xf32>
    %c0_2 = arith.constant 0 : index
    %c0_3 = arith.constant 0 : index
    %4 = vector.load %arg3[%c0_2, %c0_3] : memref<16x128xf32, #tpu.memory_space<vmem>>, vector<16x128xf32>
    %c0_4 = arith.constant 0 : index
    %c0_5 = arith.constant 0 : index
    %5 = vector.load %arg4[%c0_4, %c0_5] : memref<128x128xf32, #tpu.memory_space<vmem>>, vector<128x128xf32>
    %cst = arith.constant dense<0.000000e+00> : vector<16x128xf32>
    %6 = tpu.matmul %4, %5, %cst {dimension_numbers = #tpu.dot_dimension_numbers<[1], [0], [0], [1], [0, 0, 1, 1], [], []>} : vector<16x128xf32>, vector<128x128xf32>, vector<16x128xf32> -> vector<16x128xf32>
    %7 = arith.addf %3, %6 : vector<16x128xf32>
    %c0_6 = arith.constant 0 : index
    %c0_7 = arith.constant 0 : index
    %8 = vector.load %arg7[%c0_6, %c0_7] : memref<16x128xf32, #tpu.memory_space<vmem>>, vector<16x128xf32>
    tpu.vector_store %arg7[%c0_6, %c0_7], %7 {strides = array<i32>} : memref<16x128xf32, #tpu.memory_space<vmem>>, vector<16x128xf32>,
    %c0_i32_8 = arith.constant 0 : i32
    %9 = arith.cmpi eq, %arg2, %c0_i32_8 : i32
    %10 = arith.extui %9 : i1 to i32
    %c0_i32_9 = arith.constant 0 : i32
    %11 = arith.cmpi ne, %10, %c0_i32_9 : i32
    scf.if %11 {
      %c0_10 = arith.constant 0 : index
      %c0_11 = arith.constant 0 : index
      %12 = vector.load %arg7[%c0_10, %c0_11] : memref<16x128xf32, #tpu.memory_space<vmem>>, vector<16x128xf32>
      %c0_12 = arith.constant 0 : index
      %c0_13 = arith.constant 0 : index
      %13 = vector.load %arg5[%c0_12, %c0_13] : memref<1x128xf32, #tpu.memory_space<vmem>>, vector<1x128xf32>
      %14 = vector.broadcast %13 : vector<1x128xf32> to vector<16x128xf32>
      %15 = arith.addf %12, %14 : vector<16x128xf32>
      %cst_14 = arith.constant 0.000000e+00 : f32
      %16 = vector.broadcast %cst_14 : f32 to vector<16x128xf32>
      %17 = arith.maximumf %15, %16 : vector<16x128xf32>
      %c0_15 = arith.constant 0 : index
      %c0_16 = arith.constant 0 : index
      %18 = vector.load %arg6[%c0_15, %c0_16] : memref<16x128xf32, #tpu.memory_space<vmem>>, vector<16x128xf32>
      tpu.vector_store %arg6[%c0_15, %c0_16], %17 {strides = array<i32>} : memref<16x128xf32, #tpu.memory_space<vmem>>, vector<16x128xf32>,
    } else {
    }
    return
  }
  func.func @transform_0(%arg0: i32, %arg1: i32, %arg2: i32) -> (i32, i32) {
    %c0_i32 = arith.constant 0 : i32
    return %arg0, %arg2 : i32, i32
  }
  func.func @transform_1(%arg0: i32, %arg1: i32, %arg2: i32) -> (i32, i32) {
    %c0_i32 = arith.constant 0 : i32
    return %arg2, %arg1 : i32, i32
  }
  func.func @transform_2(%arg0: i32, %arg1: i32, %arg2: i32) -> (i32, i32) {
    %c0_i32 = arith.constant 0 : i32
    %c0_i32_0 = arith.constant 0 : i32
    return %c0_i32, %arg1 : i32, i32
  }
  func.func @transform_3(%arg0: i32, %arg1: i32, %arg2: i32) -> (i32, i32) {
    %c0_i32 = arith.constant 0 : i32
    return %arg0, %arg1 : i32, i32
  }
}

module attributes {stable_mosaic.version = 11 : i64} {
  func.func @_attn_kernel(%arg0: i32, %arg1: i32, %arg2: i32, %arg3: memref<1x8x1xf32, #tpu.memory_space<vmem>>, %arg4: memref<1x1x8xf32, #tpu.memory_space<vmem>>, %arg5: memref<1x4x8x8xf32, #tpu.memory_space<vmem>>, %arg6: memref<1x4x8x8xf32, #tpu.memory_space<vmem>>, %arg7: memref<1x4x8x8xf32, #tpu.memory_space<vmem>>, %arg8: memref<1x4x8x8xf32, #tpu.memory_space<vmem>>, %arg9: memref<4x8x1xf32, #tpu.memory_space<vmem>>, %arg10: memref<4x8x1xf32, #tpu.memory_space<vmem>>, %arg11: memref<4x8x8xf32, #tpu.memory_space<vmem>>) attributes {dimension_semantics = [#tpu.dimension_semantics<parallel>, #tpu.dimension_semantics<parallel>, #tpu.dimension_semantics<arbitrary>], iteration_bounds = array<i64: 2, 1, 1>, scalar_prefetch = 0 : i64, scratch_operands = 3 : i64, tpu.core_type = #tpu.core_type<tc>, window_params = [{transform_indices = @transform_0, window_bounds = array<i64: 1, 8, 1>}, {transform_indices = @transform_1, window_bounds = array<i64: 1, 1, 8>}, {transform_indices = @transform_2, window_bounds = array<i64: 1, 4, 8, 8>}, {transform_indices = @transform_3, window_bounds = array<i64: 1, 4, 8, 8>}, {transform_indices = @transform_4, window_bounds = array<i64: 1, 4, 8, 8>}, {transform_indices = @transform_5, window_bounds = array<i64: 1, 4, 8, 8>}]} {
    %c0_i32 = arith.constant 0 : i32
    %0 = arith.cmpi eq, %arg2, %c0_i32 : i32
    %1 = arith.extui %0 : i1 to i32
    %c0_i32_0 = arith.constant 0 : i32
    %2 = arith.cmpi ne, %1, %c0_i32_0 : i32
    scf.if %2 {
      %cst_46 = arith.constant 0xFF800000 : f32
      %63 = vector.broadcast %cst_46 : f32 to vector<4x8x1xf32>
      %c0_47 = arith.constant 0 : index
      %c0_48 = arith.constant 0 : index
      %c0_49 = arith.constant 0 : index
      %64 = vector.load %arg9[%c0_47, %c0_48, %c0_49] : memref<4x8x1xf32, #tpu.memory_space<vmem>>, vector<4x8x1xf32>
      tpu.vector_store %arg9[%c0_47, %c0_48, %c0_49], %63 {strides = array<i32>} : memref<4x8x1xf32, #tpu.memory_space<vmem>>, vector<4x8x1xf32>,
      %cst_50 = arith.constant 0.000000e+00 : f32
      %65 = vector.broadcast %cst_50 : f32 to vector<4x8x1xf32>
      %c0_51 = arith.constant 0 : index
      %c0_52 = arith.constant 0 : index
      %c0_53 = arith.constant 0 : index
      %66 = vector.load %arg10[%c0_51, %c0_52, %c0_53] : memref<4x8x1xf32, #tpu.memory_space<vmem>>, vector<4x8x1xf32>
      tpu.vector_store %arg10[%c0_51, %c0_52, %c0_53], %65 {strides = array<i32>} : memref<4x8x1xf32, #tpu.memory_space<vmem>>, vector<4x8x1xf32>,
      %cst_54 = arith.constant 0.000000e+00 : f32
      %67 = vector.broadcast %cst_54 : f32 to vector<4x8x8xf32>
      %c0_55 = arith.constant 0 : index
      %c0_56 = arith.constant 0 : index
      %c0_57 = arith.constant 0 : index
      %68 = vector.load %arg11[%c0_55, %c0_56, %c0_57] : memref<4x8x8xf32, #tpu.memory_space<vmem>>, vector<4x8x8xf32>
      tpu.vector_store %arg11[%c0_55, %c0_56, %c0_57], %67 {strides = array<i32>} : memref<4x8x8xf32, #tpu.memory_space<vmem>>, vector<4x8x8xf32>,
    } else {
    }
    %c0 = arith.constant 0 : index
    %c0_1 = arith.constant 0 : index
    %c0_2 = arith.constant 0 : index
    %c0_3 = arith.constant 0 : index
    %3 = vector.load %arg5[%c0, %c0_1, %c0_2, %c0_3] : memref<1x4x8x8xf32, #tpu.memory_space<vmem>>, vector<1x4x8x8xf32>
    %4 = vector.shape_cast %3 : vector<1x4x8x8xf32> to vector<4x8x8xf32>
    %c0_4 = arith.constant 0 : index
    %c0_5 = arith.constant 0 : index
    %c0_6 = arith.constant 0 : index
    %c0_7 = arith.constant 0 : index
    %5 = vector.load %arg6[%c0_4, %c0_5, %c0_6, %c0_7] : memref<1x4x8x8xf32, #tpu.memory_space<vmem>>, vector<1x4x8x8xf32>
    %6 = vector.shape_cast %5 : vector<1x4x8x8xf32> to vector<4x8x8xf32>
    %c0_8 = arith.constant 0 : index
    %c0_9 = arith.constant 0 : index
    %c0_10 = arith.constant 0 : index
    %c0_11 = arith.constant 0 : index
    %7 = vector.load %arg7[%c0_8, %c0_9, %c0_10, %c0_11] : memref<1x4x8x8xf32, #tpu.memory_space<vmem>>, vector<1x4x8x8xf32>
    %8 = vector.shape_cast %7 : vector<1x4x8x8xf32> to vector<4x8x8xf32>
    "tpu.trace_start"() <{level = 10 : i32, message = "hqd,hkd->hqk"}> : () -> ()
    %cst = arith.constant dense<0.000000e+00> : vector<4x8x8xf32>
    %9 = tpu.matmul %4, %6, %cst {dimension_numbers = #tpu.dot_dimension_numbers<[2], [2], [1], [1], [0, 0, 0, 1, 1, 1], [0], [0]>} : vector<4x8x8xf32>, vector<4x8x8xf32>, vector<4x8x8xf32> -> vector<4x8x8xf32>
    "tpu.trace_stop"() : () -> ()
    %cst_12 = arith.constant 0.353553385 : f32
    %10 = vector.broadcast %cst_12 : f32 to vector<4x8x8xf32>
    %11 = arith.mulf %9, %10 : vector<4x8x8xf32>
    %c0_13 = arith.constant 0 : index
    %c0_14 = arith.constant 0 : index
    %c0_15 = arith.constant 0 : index
    %12 = vector.load %arg3[%c0_13, %c0_14, %c0_15] : memref<1x8x1xf32, #tpu.memory_space<vmem>>, vector<1x8x1xf32>
    %13 = vector.shape_cast %12 : vector<1x8x1xf32> to vector<8x1xf32>
    %cst_16 = arith.constant 5.000000e-01 : f32
    %14 = vector.broadcast %cst_16 : f32 to vector<8x1xf32>
    %15 = arith.cmpf ogt, %13, %14 : vector<8x1xf32>
    %c0_17 = arith.constant 0 : index
    %c0_18 = arith.constant 0 : index
    %c0_19 = arith.constant 0 : index
    %16 = vector.load %arg4[%c0_17, %c0_18, %c0_19] : memref<1x1x8xf32, #tpu.memory_space<vmem>>, vector<1x1x8xf32>
    %17 = vector.shape_cast %16 : vector<1x1x8xf32> to vector<1x8xf32>
    %cst_20 = arith.constant 5.000000e-01 : f32
    %18 = vector.broadcast %cst_20 : f32 to vector<1x8xf32>
    %19 = arith.cmpf ogt, %17, %18 : vector<1x8xf32>
    %20 = vector.broadcast %15 : vector<8x1xi1> to vector<8x8xi1>
    %21 = vector.broadcast %19 : vector<1x8xi1> to vector<8x8xi1>
    %22 = arith.andi %20, %21 : vector<8x8xi1>
    %c8_i32 = arith.constant 8 : i32
    %23 = arith.muli %arg1, %c8_i32 : i32
    %24 = tpu.iota {dimensions = array<i32: 0>} : vector<8x8xi32>
    %25 = vector.broadcast %23 : i32 to vector<8x8xi32>
    %26 = arith.addi %25, %24 : vector<8x8xi32>
    %c8_i32_21 = arith.constant 8 : i32
    %27 = arith.muli %arg2, %c8_i32_21 : i32
    %28 = tpu.iota {dimensions = array<i32: 1>} : vector<8x8xi32>
    %29 = vector.broadcast %27 : i32 to vector<8x8xi32>
    %30 = arith.addi %29, %28 : vector<8x8xi32>
    %31 = arith.cmpi sge, %26, %30 : vector<8x8xi32>
    %32 = arith.andi %22, %31 : vector<8x8xi1>
    %33 = vector.shape_cast %32 : vector<8x8xi1> to vector<1x8x8xi1>
    %cst_22 = arith.constant -1.000000e+04 : f32
    %34 = vector.shape_cast %33 : vector<1x8x8xi1> to vector<1x8x8xi1>
    %35 = vector.broadcast %34 : vector<1x8x8xi1> to vector<4x8x8xi1>
    %36 = vector.broadcast %cst_22 : f32 to vector<4x8x8xf32>
    %37 = arith.select %35, %11, %36 : vector<4x8x8xi1>, vector<4x8x8xf32>
    %c0_23 = arith.constant 0 : index
    %c0_24 = arith.constant 0 : index
    %c0_25 = arith.constant 0 : index
    %38 = vector.load %arg9[%c0_23, %c0_24, %c0_25] : memref<4x8x1xf32, #tpu.memory_space<vmem>>, vector<4x8x1xf32>
    %cst_26 = arith.constant dense<0xFF800000> : vector<4x8xf32>
    %39 = vector.multi_reduction <maximumf>, %37, %cst_26 [2] : vector<4x8x8xf32> to vector<4x8xf32>
    %40 = vector.shape_cast %39 : vector<4x8xf32> to vector<4x8x1xf32>
    %41 = arith.maximumf %38, %40 : vector<4x8x1xf32>
    %42 = arith.subf %38, %41 : vector<4x8x1xf32>
    %43 = math.exp %42 : vector<4x8x1xf32>
    %44 = vector.broadcast %41 : vector<4x8x1xf32> to vector<4x8x8xf32>
    %45 = arith.subf %37, %44 : vector<4x8x8xf32>
    %46 = math.exp %45 : vector<4x8x8xf32>
    %c0_27 = arith.constant 0 : index
    %c0_28 = arith.constant 0 : index
    %c0_29 = arith.constant 0 : index
    %47 = vector.load %arg10[%c0_27, %c0_28, %c0_29] : memref<4x8x1xf32, #tpu.memory_space<vmem>>, vector<4x8x1xf32>
    %48 = arith.mulf %43, %47 : vector<4x8x1xf32>
    %cst_30 = arith.constant dense<0.000000e+00> : vector<4x8xf32>
    %49 = vector.multi_reduction <add>, %46, %cst_30 [2] : vector<4x8x8xf32> to vector<4x8xf32>
    %50 = vector.shape_cast %49 : vector<4x8xf32> to vector<4x8x1xf32>
    %51 = arith.addf %48, %50 : vector<4x8x1xf32>
    %c0_31 = arith.constant 0 : index
    %c0_32 = arith.constant 0 : index
    %c0_33 = arith.constant 0 : index
    %52 = vector.load %arg10[%c0_31, %c0_32, %c0_33] : memref<4x8x1xf32, #tpu.memory_space<vmem>>, vector<4x8x1xf32>
    tpu.vector_store %arg10[%c0_31, %c0_32, %c0_33], %51 {strides = array<i32>} : memref<4x8x1xf32, #tpu.memory_space<vmem>>, vector<4x8x1xf32>,
    %c0_34 = arith.constant 0 : index
    %c0_35 = arith.constant 0 : index
    %c0_36 = arith.constant 0 : index
    %53 = vector.load %arg11[%c0_34, %c0_35, %c0_36] : memref<4x8x8xf32, #tpu.memory_space<vmem>>, vector<4x8x8xf32>
    %54 = vector.broadcast %43 : vector<4x8x1xf32> to vector<4x8x8xf32>
    %55 = arith.mulf %54, %53 : vector<4x8x8xf32>
    "tpu.trace_start"() <{level = 10 : i32, message = "hqk,hkd->hqd"}> : () -> ()
    %cst_37 = arith.constant dense<0.000000e+00> : vector<4x8x8xf32>
    %56 = tpu.matmul %46, %8, %cst_37 {dimension_numbers = #tpu.dot_dimension_numbers<[2], [1], [1], [2], [0, 0, 0, 1, 1, 2], [0], [0]>} : vector<4x8x8xf32>, vector<4x8x8xf32>, vector<4x8x8xf32> -> vector<4x8x8xf32>
    "tpu.trace_stop"() : () -> ()
    %57 = arith.addf %55, %56 : vector<4x8x8xf32>
    %c0_38 = arith.constant 0 : index
    %c0_39 = arith.constant 0 : index
    %c0_40 = arith.constant 0 : index
    %58 = vector.load %arg11[%c0_38, %c0_39, %c0_40] : memref<4x8x8xf32, #tpu.memory_space<vmem>>, vector<4x8x8xf32>
    tpu.vector_store %arg11[%c0_38, %c0_39, %c0_40], %57 {strides = array<i32>} : memref<4x8x8xf32, #tpu.memory_space<vmem>>, vector<4x8x8xf32>,
    %c0_41 = arith.constant 0 : index
    %c0_42 = arith.constant 0 : index
    %c0_43 = arith.constant 0 : index
    %59 = vector.load %arg9[%c0_41, %c0_42, %c0_43] : memref<4x8x1xf32, #tpu.memory_space<vmem>>, vector<4x8x1xf32>
    tpu.vector_store %arg9[%c0_41, %c0_42, %c0_43], %41 {strides = array<i32>} : memref<4x8x1xf32, #tpu.memory_space<vmem>>, vector<4x8x1xf32>,
    %c0_i32_44 = arith.constant 0 : i32
    %60 = arith.cmpi eq, %arg2, %c0_i32_44 : i32
    %61 = arith.extui %60 : i1 to i32
    %c0_i32_45 = arith.constant 0 : i32
    %62 = arith.cmpi ne, %61, %c0_i32_45 : i32
    scf.if %62 {
      %c0_46 = arith.constant 0 : index
      %c0_47 = arith.constant 0 : index
      %c0_48 = arith.constant 0 : index
      %63 = vector.load %arg10[%c0_46, %c0_47, %c0_48] : memref<4x8x1xf32, #tpu.memory_space<vmem>>, vector<4x8x1xf32>
      %64 = tpu.reciprocal %63 : vector<4x8x1xf32> -> vector<4x8x1xf32>
      %c0_49 = arith.constant 0 : index
      %c0_50 = arith.constant 0 : index
      %c0_51 = arith.constant 0 : index
      %65 = vector.load %arg11[%c0_49, %c0_50, %c0_51] : memref<4x8x8xf32, #tpu.memory_space<vmem>>, vector<4x8x8xf32>
      %66 = vector.broadcast %64 : vector<4x8x1xf32> to vector<4x8x8xf32>
      %67 = arith.mulf %65, %66 : vector<4x8x8xf32>
      %c0_52 = arith.constant 0 : index
      %c0_53 = arith.constant 0 : index
      %c0_54 = arith.constant 0 : index
      %c0_55 = arith.constant 0 : index
      %68 = vector.load %arg8[%c0_52, %c0_53, %c0_54, %c0_55] : memref<1x4x8x8xf32, #tpu.memory_space<vmem>>, vector<1x4x8x8xf32>
      %69 = vector.shape_cast %68 : vector<1x4x8x8xf32> to vector<4x8x8xf32>
      %70 = vector.shape_cast %67 : vector<4x8x8xf32> to vector<1x4x8x8xf32>
      tpu.vector_store %arg8[%c0_52, %c0_53, %c0_54, %c0_55], %70 {strides = array<i32>} : memref<1x4x8x8xf32, #tpu.memory_space<vmem>>, vector<1x4x8x8xf32>,
    } else {
    }
    return
  }
  func.func @transform_0(%arg0: i32, %arg1: i32, %arg2: i32) -> (i32, i32, i32) {
    %c0_i32 = arith.constant 0 : i32
    %c0_i32_0 = arith.constant 0 : i32
    return %arg0, %arg1, %c0_i32 : i32, i32, i32
  }
  func.func @transform_1(%arg0: i32, %arg1: i32, %arg2: i32) -> (i32, i32, i32) {
    %c0_i32 = arith.constant 0 : i32
    %c0_i32_0 = arith.constant 0 : i32
    return %arg0, %c0_i32, %arg2 : i32, i32, i32
  }
  func.func @transform_2(%arg0: i32, %arg1: i32, %arg2: i32) -> (i32, i32, i32, i32) {
    %c0_i32 = arith.constant 0 : i32
    %c0_i32_0 = arith.constant 0 : i32
    %c0_i32_1 = arith.constant 0 : i32
    return %arg0, %c0_i32, %arg1, %c0_i32_0 : i32, i32, i32, i32
  }
  func.func @transform_3(%arg0: i32, %arg1: i32, %arg2: i32) -> (i32, i32, i32, i32) {
    %c0_i32 = arith.constant 0 : i32
    %c0_i32_0 = arith.constant 0 : i32
    %c0_i32_1 = arith.constant 0 : i32
    return %arg0, %c0_i32, %arg2, %c0_i32_0 : i32, i32, i32, i32
  }
  func.func @transform_4(%arg0: i32, %arg1: i32, %arg2: i32) -> (i32, i32, i32, i32) {
    %c0_i32 = arith.constant 0 : i32
    %c0_i32_0 = arith.constant 0 : i32
    %c0_i32_1 = arith.constant 0 : i32
    return %arg0, %c0_i32, %arg2, %c0_i32_0 : i32, i32, i32, i32
  }
  func.func @transform_5(%arg0: i32, %arg1: i32, %arg2: i32) -> (i32, i32, i32, i32) {
    %c0_i32 = arith.constant 0 : i32
    %c0_i32_0 = arith.constant 0 : i32
    %c0_i32_1 = arith.constant 0 : i32
    return %arg0, %c0_i32, %arg1, %c0_i32_0 : i32, i32, i32, i32
  }
}

</mosaic_0001>

<llo_original>
// kernel: transformer_forward.39
$region0: #{transformer_forward.39}
  #allocation0 [shape = 'u32[]', space=smem, size = 0x4, offset = 0x4, fixed_abs, tag = 'smem constant byte address 0x4 - core index']
  #allocation1 [shape = 'u32[144,128]{1,0:T(1,128)}', space=vmem, size = 0x12000, scoped, tag = 'internal scratch']
  #allocation2 [shape = 'f32[16,128]{1,0:T(8,128)}', space=vmem, size = 0x2000, scoped, tag = 'scratch operand']
  %s0 = inlined_call_operand.vmem [shape: f32[16,128], index: 0, kind: input, shape index: {}]
  %s1 = inlined_call_operand.vmem [shape: f32[128,128], index: 1, kind: input, shape index: {}]
  %s2 = inlined_call_operand.vmem [shape: f32[1,128], index: 2, kind: input, shape index: {}]
  %s3 = inlined_call_operand.vmem [shape: f32[16,128], index: 3, kind: output, shape index: {}]
  %s4 = sld [smem:[#allocation0]]
  $region30: #{transformer_forward.39} parent=0
    _
  %s6 = ssub.s32 1, %s4
  %s7 = scalar_select 0, %s6, %s4
  // Predicated region
  $region2: #{transformer_forward.39} parent=0 // pred_check
    _
  $region3: #{transformer_forward.39} parent=0 // pred_check_branch
    %9 = sbr.rel (0) target = $region5
  $region4: #{transformer_forward.39} parent=0 // pred_region
    _
  $region5: #{transformer_forward.39} parent=0 // pred_fallthru
    _
  // Predicated region
  $region6: #{transformer_forward.39} parent=0 // pred_check
    _
  $region7: #{transformer_forward.39} parent=0 // pred_check_branch
    %11 = sbr.rel (0) target = $region9
  $region8: #{transformer_forward.39} parent=0 // pred_region
    _
  $region9: #{transformer_forward.39} parent=0 // pred_fallthru
    _
  // Predicated region
  $region10: #{transformer_forward.39} parent=0 // pred_check
    _
  $region11: #{transformer_forward.39} parent=0 // pred_check_branch
    %13 = sbr.rel (0) target = $region13
  $region12: #{transformer_forward.39} parent=0 // pred_region
    _
  $region13: #{transformer_forward.39} parent=0 // pred_fallthru
    _
  %p14 = scmp.eq.s32.totalorder 0, 0
  // Predicated region
  $region14: #{transformer_forward.39} parent=0 // pred_check
    %p15 = pneg %p14
  $region15: #{transformer_forward.39} parent=0 // pred_check_branch
    %17 = sbr.rel (%p15) target = $region17
  $region16: #{transformer_forward.39} parent=0 // pred_region
    %18 = vst [vmem:[#allocation2] sm:$0xff] 0.0
    %19 = vst [vmem:[#allocation2 + $0x8] sm:$0xff] 0.0
  $region17: #{transformer_forward.39} parent=0 // pred_fallthru
    _
  %v20 = vld [vmem:[#allocation2] sm:$0xff]
  %v21 = vld [vmem:[#allocation2 + $0x8] sm:$0xff]
  %v22 = vld [vmem:[%s0] sm:$0xff]
  %v23 = vld [vmem:[%s0 + $0x8] sm:$0xff]
  %v24 = vld [vmem:[%s1] sm:$0xff]
  %v25 = vld [vmem:[%s1 + $0x8] sm:$0xff]
  %v26 = vld [vmem:[%s1 + $0x10] sm:$0xff]
  %v27 = vld [vmem:[%s1 + $0x18] sm:$0xff]
  %v28 = vld [vmem:[%s1 + $0x20] sm:$0xff]
  %v29 = vld [vmem:[%s1 + $0x28] sm:$0xff]
  %v30 = vld [vmem:[%s1 + $0x30] sm:$0xff]
  %v31 = vld [vmem:[%s1 + $0x38] sm:$0xff]
  %v32 = vld [vmem:[%s1 + $0x40] sm:$0xff]
  %v33 = vld [vmem:[%s1 + $0x48] sm:$0xff]
  %v34 = vld [vmem:[%s1 + $0x50] sm:$0xff]
  %v35 = vld [vmem:[%s1 + $0x58] sm:$0xff]
  %v36 = vld [vmem:[%s1 + $0x60] sm:$0xff]
  %v37 = vld [vmem:[%s1 + $0x68] sm:$0xff]
  %v38 = vld [vmem:[%s1 + $0x70] sm:$0xff]
  %v39 = vld [vmem:[%s1 + $0x78] sm:$0xff]
  %40 = vmatprep.subr.mxu0 0.0
  %41 = vmatpush1.msra.mxu0 %v24
  %42 = vmatprep.subr.mxu0 0.0
  %43 = vmatpush1.msra.mxu0 %v25
  %44 = vmatprep.subr.mxu0 0.0
  %45 = vmatpush1.msra.mxu0 %v26
  %46 = vmatprep.subr.mxu0 0.0
  %47 = vmatpush1.msra.mxu0 %v27
  %48 = vmatprep.subr.mxu0 0.0
  %49 = vmatpush1.msra.mxu0 %v28
  %50 = vmatprep.subr.mxu0 0.0
  %51 = vmatpush1.msra.mxu0 %v29
  %52 = vmatprep.subr.mxu0 0.0
  %53 = vmatpush1.msra.mxu0 %v30
  %54 = vmatprep.subr.mxu0 0.0
  %55 = vmatpush1.msra.mxu0 %v31
  %56 = vmatprep.subr.mxu0 0.0
  %57 = vmatpush1.msra.mxu0 %v32
  %58 = vmatprep.subr.mxu0 0.0
  %59 = vmatpush1.msra.mxu0 %v33
  %60 = vmatprep.subr.mxu0 0.0
  %61 = vmatpush1.msra.mxu0 %v34
  %62 = vmatprep.subr.mxu0 0.0
  %63 = vmatpush1.msra.mxu0 %v35
  %64 = vmatprep.subr.mxu0 0.0
  %65 = vmatpush1.msra.mxu0 %v36
  %66 = vmatprep.subr.mxu0 0.0
  %67 = vmatpush1.msra.mxu0 %v37
  %68 = vmatprep.subr.mxu0 0.0
  %69 = vmatpush1.msra.mxu0 %v38
  %70 = vmatprep.subr.mxu0 0.0
  %71 = vmatpush1.msra.mxu0 %v39
  %72 = vmatprep.subr.mxu0 0.0
  %73 = vmatpush1.msra.mxu0 0.0
  %74 = vmatprep.subr.mxu0 0.0
  %75 = vmatpush1.msra.mxu0 0.0
  %76 = vmatprep.subr.mxu0 0.0
  %77 = vmatpush1.msra.mxu0 0.0
  %78 = vmatprep.subr.mxu0 0.0
  %79 = vmatpush1.msra.mxu0 0.0
  %80 = vmatprep.subr.mxu0 0.0
  %81 = vmatpush1.msra.mxu0 0.0
  %82 = vmatprep.subr.mxu0 0.0
  %83 = vmatpush1.msra.mxu0 0.0
  %84 = vmatprep.subr.mxu0 0.0
  %85 = vmatpush1.msra.mxu0 0.0
  %86 = vmatprep.subr.mxu0 0.0
  %87 = vmatpush1.msra.mxu0 0.0
  %88 = vmatprep.subr.mxu0 0.0
  %89 = vmatpush1.msra.mxu0 0.0
  %90 = vmatprep.subr.mxu0 0.0
  %91 = vmatpush1.msra.mxu0 0.0
  %92 = vmatprep.subr.mxu0 0.0
  %93 = vmatpush1.msra.mxu0 0.0
  %94 = vmatprep.subr.mxu0 0.0
  %95 = vmatpush1.msra.mxu0 0.0
  %96 = vmatprep.subr.mxu0 0.0
  %97 = vmatpush1.msra.mxu0 0.0
  %98 = vmatprep.subr.mxu0 0.0
  %99 = vmatpush1.msra.mxu0 0.0
  %100 = vmatprep.subr.mxu0 0.0
  %101 = vmatpush1.msra.mxu0 0.0
  %102 = vmatprep.subr.mxu0 0.0
  %103 = vmatpush1.msra.mxu0 0.0
  %104 = vmatprep.mubr.f32.mxu0 0.0
  %105 = vmatmul.mubr.f32.gmra.mrb[0].mxu0 %v22
  %v106 = vpop.f32.mrb[0].mxu0
  %v107 = vadd.f32 0.0, %v106
  %v108 = vpop.f32.mrb[0].mxu0
  %109 = vmatprep.mubr.f32.mxu0 0.0
  %110 = vmatmul.mubr.f32.gmra.mrb[0].mxu0 %v23
  %v111 = vpop.f32.mrb[0].mxu0
  %v112 = vadd.f32 0.0, %v111
  %v113 = vpop.f32.mrb[0].mxu0
  %114 = vdwg.mxu0
  %v115 = vadd.f32 %v20, %v107
  %v116 = vadd.f32 %v21, %v112
  %117 = vst [vmem:[#allocation2] sm:$0xff] %v115
  %118 = vst [vmem:[#allocation2 + $0x8] sm:$0xff] %v116
  // Predicated region
  $region18: #{transformer_forward.39} parent=0 // pred_check
    %p119 = pneg %p14
  $region19: #{transformer_forward.39} parent=0 // pred_check_branch
    %121 = sbr.rel (%p119) target = $region21
  $region20: #{transformer_forward.39} parent=0 // pred_region
    %v122 = vld [vmem:[#allocation2] sm:$0xff]
    %v123 = vld [vmem:[#allocation2 + $0x8] sm:$0xff]
    %v124 = vld [vmem:[%s2] sm:$0x1]
    %v126 = vlaneseq
    %v127 = vshrl.u32 %v126, 7
    %v128 = vsub.s32 0, %v127
    %v129 = vrot.slane %v124, %v128
    %v131 = vadd.f32 %v122, %v129
    %v132 = vadd.f32 %v123, %v129
    %133 = vst [vmem:[%s3] sm:$0xff] %v131
    %134 = vst [vmem:[%s3 + $0x8] sm:$0xff] %v132
  $region21: #{transformer_forward.39} parent=0 // pred_fallthru
    _
  // Predicated region
  $region22: #{transformer_forward.39} parent=0 // pred_check
    _
  $region23: #{transformer_forward.39} parent=0 // pred_check_branch
    %136 = sbr.rel (0) target = $region25
  $region24: #{transformer_forward.39} parent=0 // pred_region
    _
  $region25: #{transformer_forward.39} parent=0 // pred_fallthru
    _
  // Predicated region
  $region26: #{transformer_forward.39} parent=0 // pred_check
    _
  $region27: #{transformer_forward.39} parent=0 // pred_check_branch
    %138 = sbr.rel (0) target = $region29
  $region28: #{transformer_forward.39} parent=0 // pred_region
    _
  $region29: #{transformer_forward.39} parent=0 // pred_fallthru
    _

// kernel: transformer_forward.43
$region0: #{transformer_forward.43}
  #allocation0 [shape = 'u32[]', space=smem, size = 0x4, offset = 0x4, fixed_abs, tag = 'smem constant byte address 0x4 - core index']
  #allocation1 [shape = 'u32[144,128]{1,0:T(1,128)}', space=vmem, size = 0x12000, scoped, tag = 'internal scratch']
  #allocation2 [shape = 'f32[16,128]{1,0:T(8,128)}', space=vmem, size = 0x2000, scoped, tag = 'scratch operand']
  %s0 = inlined_call_operand.vmem [shape: f32[16,128], index: 0, kind: input, shape index: {}]
  %s1 = inlined_call_operand.vmem [shape: f32[128,128], index: 1, kind: input, shape index: {}]
  %s2 = inlined_call_operand.vmem [shape: f32[1,128], index: 2, kind: input, shape index: {}]
  %s3 = inlined_call_operand.vmem [shape: f32[16,128], index: 3, kind: output, shape index: {}]
  %s4 = sld [smem:[#allocation0]]
  $region30: #{transformer_forward.43} parent=0
    _
  %s6 = ssub.s32 1, %s4
  %s7 = scalar_select 0, %s6, %s4
  // Predicated region
  $region2: #{transformer_forward.43} parent=0 // pred_check
    _
  $region3: #{transformer_forward.43} parent=0 // pred_check_branch
    %9 = sbr.rel (0) target = $region5
  $region4: #{transformer_forward.43} parent=0 // pred_region
    _
  $region5: #{transformer_forward.43} parent=0 // pred_fallthru
    _
  // Predicated region
  $region6: #{transformer_forward.43} parent=0 // pred_check
    _
  $region7: #{transformer_forward.43} parent=0 // pred_check_branch
    %11 = sbr.rel (0) target = $region9
  $region8: #{transformer_forward.43} parent=0 // pred_region
    _
  $region9: #{transformer_forward.43} parent=0 // pred_fallthru
    _
  // Predicated region
  $region10: #{transformer_forward.43} parent=0 // pred_check
    _
  $region11: #{transformer_forward.43} parent=0 // pred_check_branch
    %13 = sbr.rel (0) target = $region13
  $region12: #{transformer_forward.43} parent=0 // pred_region
    _
  $region13: #{transformer_forward.43} parent=0 // pred_fallthru
    _
  %p14 = scmp.eq.s32.totalorder 0, 0
  // Predicated region
  $region14: #{transformer_forward.43} parent=0 // pred_check
    %p15 = pneg %p14
  $region15: #{transformer_forward.43} parent=0 // pred_check_branch
    %17 = sbr.rel (%p15) target = $region17
  $region16: #{transformer_forward.43} parent=0 // pred_region
    %18 = vst [vmem:[#allocation2] sm:$0xff] 0.0
    %19 = vst [vmem:[#allocation2 + $0x8] sm:$0xff] 0.0
  $region17: #{transformer_forward.43} parent=0 // pred_fallthru
    _
  %v20 = vld [vmem:[#allocation2] sm:$0xff]
  %v21 = vld [vmem:[#allocation2 + $0x8] sm:$0xff]
  %v22 = vld [vmem:[%s0] sm:$0xff]
  %v23 = vld [vmem:[%s0 + $0x8] sm:$0xff]
  %v24 = vld [vmem:[%s1] sm:$0xff]
  %v25 = vld [vmem:[%s1 + $0x8] sm:$0xff]
  %v26 = vld [vmem:[%s1 + $0x10] sm:$0xff]
  %v27 = vld [vmem:[%s1 + $0x18] sm:$0xff]
  %v28 = vld [vmem:[%s1 + $0x20] sm:$0xff]
  %v29 = vld [vmem:[%s1 + $0x28] sm:$0xff]
  %v30 = vld [vmem:[%s1 + $0x30] sm:$0xff]
  %v31 = vld [vmem:[%s1 + $0x38] sm:$0xff]
  %v32 = vld [vmem:[%s1 + $0x40] sm:$0xff]
  %v33 = vld [vmem:[%s1 + $0x48] sm:$0xff]
  %v34 = vld [vmem:[%s1 + $0x50] sm:$0xff]
  %v35 = vld [vmem:[%s1 + $0x58] sm:$0xff]
  %v36 = vld [vmem:[%s1 + $0x60] sm:$0xff]
  %v37 = vld [vmem:[%s1 + $0x68] sm:$0xff]
  %v38 = vld [vmem:[%s1 + $0x70] sm:$0xff]
  %v39 = vld [vmem:[%s1 + $0x78] sm:$0xff]
  %40 = vmatprep.subr.mxu0 0.0
  %41 = vmatpush1.msra.mxu0 %v24
  %42 = vmatprep.subr.mxu0 0.0
  %43 = vmatpush1.msra.mxu0 %v25
  %44 = vmatprep.subr.mxu0 0.0
  %45 = vmatpush1.msra.mxu0 %v26
  %46 = vmatprep.subr.mxu0 0.0
  %47 = vmatpush1.msra.mxu0 %v27
  %48 = vmatprep.subr.mxu0 0.0
  %49 = vmatpush1.msra.mxu0 %v28
  %50 = vmatprep.subr.mxu0 0.0
  %51 = vmatpush1.msra.mxu0 %v29
  %52 = vmatprep.subr.mxu0 0.0
  %53 = vmatpush1.msra.mxu0 %v30
  %54 = vmatprep.subr.mxu0 0.0
  %55 = vmatpush1.msra.mxu0 %v31
  %56 = vmatprep.subr.mxu0 0.0
  %57 = vmatpush1.msra.mxu0 %v32
  %58 = vmatprep.subr.mxu0 0.0
  %59 = vmatpush1.msra.mxu0 %v33
  %60 = vmatprep.subr.mxu0 0.0
  %61 = vmatpush1.msra.mxu0 %v34
  %62 = vmatprep.subr.mxu0 0.0
  %63 = vmatpush1.msra.mxu0 %v35
  %64 = vmatprep.subr.mxu0 0.0
  %65 = vmatpush1.msra.mxu0 %v36
  %66 = vmatprep.subr.mxu0 0.0
  %67 = vmatpush1.msra.mxu0 %v37
  %68 = vmatprep.subr.mxu0 0.0
  %69 = vmatpush1.msra.mxu0 %v38
  %70 = vmatprep.subr.mxu0 0.0
  %71 = vmatpush1.msra.mxu0 %v39
  %72 = vmatprep.subr.mxu0 0.0
  %73 = vmatpush1.msra.mxu0 0.0
  %74 = vmatprep.subr.mxu0 0.0
  %75 = vmatpush1.msra.mxu0 0.0
  %76 = vmatprep.subr.mxu0 0.0
  %77 = vmatpush1.msra.mxu0 0.0
  %78 = vmatprep.subr.mxu0 0.0
  %79 = vmatpush1.msra.mxu0 0.0
  %80 = vmatprep.subr.mxu0 0.0
  %81 = vmatpush1.msra.mxu0 0.0
  %82 = vmatprep.subr.mxu0 0.0
  %83 = vmatpush1.msra.mxu0 0.0
  %84 = vmatprep.subr.mxu0 0.0
  %85 = vmatpush1.msra.mxu0 0.0
  %86 = vmatprep.subr.mxu0 0.0
  %87 = vmatpush1.msra.mxu0 0.0
  %88 = vmatprep.subr.mxu0 0.0
  %89 = vmatpush1.msra.mxu0 0.0
  %90 = vmatprep.subr.mxu0 0.0
  %91 = vmatpush1.msra.mxu0 0.0
  %92 = vmatprep.subr.mxu0 0.0
  %93 = vmatpush1.msra.mxu0 0.0
  %94 = vmatprep.subr.mxu0 0.0
  %95 = vmatpush1.msra.mxu0 0.0
  %96 = vmatprep.subr.mxu0 0.0
  %97 = vmatpush1.msra.mxu0 0.0
  %98 = vmatprep.subr.mxu0 0.0
  %99 = vmatpush1.msra.mxu0 0.0
  %100 = vmatprep.subr.mxu0 0.0
  %101 = vmatpush1.msra.mxu0 0.0
  %102 = vmatprep.subr.mxu0 0.0
  %103 = vmatpush1.msra.mxu0 0.0
  %104 = vmatprep.mubr.f32.mxu0 0.0
  %105 = vmatmul.mubr.f32.gmra.mrb[0].mxu0 %v22
  %v106 = vpop.f32.mrb[0].mxu0
  %v107 = vadd.f32 0.0, %v106
  %v108 = vpop.f32.mrb[0].mxu0
  %109 = vmatprep.mubr.f32.mxu0 0.0
  %110 = vmatmul.mubr.f32.gmra.mrb[0].mxu0 %v23
  %v111 = vpop.f32.mrb[0].mxu0
  %v112 = vadd.f32 0.0, %v111
  %v113 = vpop.f32.mrb[0].mxu0
  %114 = vdwg.mxu0
  %v115 = vadd.f32 %v20, %v107
  %v116 = vadd.f32 %v21, %v112
  %117 = vst [vmem:[#allocation2] sm:$0xff] %v115
  %118 = vst [vmem:[#allocation2 + $0x8] sm:$0xff] %v116
  // Predicated region
  $region18: #{transformer_forward.43} parent=0 // pred_check
    %p119 = pneg %p14
  $region19: #{transformer_forward.43} parent=0 // pred_check_branch
    %121 = sbr.rel (%p119) target = $region21
  $region20: #{transformer_forward.43} parent=0 // pred_region
    %v122 = vld [vmem:[#allocation2] sm:$0xff]
    %v123 = vld [vmem:[#allocation2 + $0x8] sm:$0xff]
    %v124 = vld [vmem:[%s2] sm:$0x1]
    %v126 = vlaneseq
    %v127 = vshrl.u32 %v126, 7
    %v128 = vsub.s32 0, %v127
    %v129 = vrot.slane %v124, %v128
    %v131 = vadd.f32 %v122, %v129
    %v132 = vadd.f32 %v123, %v129
    %v133 = vmax.f32 %v131, 0.0
    %v134 = vmax.f32 %v132, 0.0
    %135 = vst [vmem:[%s3] sm:$0xff] %v133
    %136 = vst [vmem:[%s3 + $0x8] sm:$0xff] %v134
  $region21: #{transformer_forward.43} parent=0 // pred_fallthru
    _
  // Predicated region
  $region22: #{transformer_forward.43} parent=0 // pred_check
    _
  $region23: #{transformer_forward.43} parent=0 // pred_check_branch
    %138 = sbr.rel (0) target = $region25
  $region24: #{transformer_forward.43} parent=0 // pred_region
    _
  $region25: #{transformer_forward.43} parent=0 // pred_fallthru
    _
  // Predicated region
  $region26: #{transformer_forward.43} parent=0 // pred_check
    _
  $region27: #{transformer_forward.43} parent=0 // pred_check_branch
    %140 = sbr.rel (0) target = $region29
  $region28: #{transformer_forward.43} parent=0 // pred_region
    _
  $region29: #{transformer_forward.43} parent=0 // pred_fallthru
    _

// kernel: transformer_forward.42
$region0: #{transformer_forward.42}
  #allocation0 [shape = 'u32[]', space=smem, size = 0x4, offset = 0x4, fixed_abs, tag = 'smem constant byte address 0x4 - core index']
  #allocation1 [shape = 'u32[144,128]{1,0:T(1,128)}', space=vmem, size = 0x12000, scoped, tag = 'internal scratch']
  %s0 = inlined_call_operand.vmem [shape: f32[16,32], index: 0, kind: input, shape index: {}]
  %s1 = inlined_call_operand.vmem [shape: f32[16,32], index: 1, kind: input, shape index: {}]
  %s2 = inlined_call_operand.vmem [shape: f32[1,32], index: 2, kind: input, shape index: {}]
  %s3 = inlined_call_operand.vmem [shape: f32[1,32], index: 3, kind: input, shape index: {}]
  %s4 = inlined_call_operand.vmem [shape: f32[16,32], index: 4, kind: output, shape index: {}]
  %s5 = sld [smem:[#allocation0]]
  $region26: #{transformer_forward.42} parent=0
    _
  %s7 = ssub.s32 1, %s5
  %s8 = scalar_select 0, %s7, %s5
  // Predicated region
  $region2: #{transformer_forward.42} parent=0 // pred_check
    _
  $region3: #{transformer_forward.42} parent=0 // pred_check_branch
    %10 = sbr.rel (0) target = $region5
  $region4: #{transformer_forward.42} parent=0 // pred_region
    _
  $region5: #{transformer_forward.42} parent=0 // pred_fallthru
    _
  // Predicated region
  $region6: #{transformer_forward.42} parent=0 // pred_check
    _
  $region7: #{transformer_forward.42} parent=0 // pred_check_branch
    %12 = sbr.rel (0) target = $region9
  $region8: #{transformer_forward.42} parent=0 // pred_region
    _
  $region9: #{transformer_forward.42} parent=0 // pred_fallthru
    _
  // Predicated region
  $region10: #{transformer_forward.42} parent=0 // pred_check
    _
  $region11: #{transformer_forward.42} parent=0 // pred_check_branch
    %14 = sbr.rel (0) target = $region13
  $region12: #{transformer_forward.42} parent=0 // pred_region
    _
  $region13: #{transformer_forward.42} parent=0 // pred_fallthru
    _
  // Predicated region
  $region14: #{transformer_forward.42} parent=0 // pred_check
    _
  $region15: #{transformer_forward.42} parent=0 // pred_check_branch
    %16 = sbr.rel (0) target = $region17
  $region16: #{transformer_forward.42} parent=0 // pred_region
    _
  $region17: #{transformer_forward.42} parent=0 // pred_fallthru
    _
  %v17 = vld [vmem:[%s0] sm:$0xff]
  %v18 = vld [vmem:[%s0 + $0x8] sm:$0xff]
  %v19 = vld [vmem:[%s1] sm:$0xff]
  %v20 = vld [vmem:[%s1 + $0x8] sm:$0xff]
  %v21 = vadd.f32 %v17, %v19
  %v22 = vadd.f32 %v18, %v20
  %vm23 = vcmask 261120
  %v24 = vsel %vm23, %v21, 0.0
  %25 = vadd.xlane.f32.xlu0 %v24
  %v26 = vpop.xlane.xlu0 %25
  %v27 = vsel %vm23, %v22, 0.0
  %28 = vadd.xlane.f32.xlu0 %v27
  %v29 = vpop.xlane.xlu0 %28
  %v30 = vrcp.pop 32.0
  %v31 = vmul.f32 %v26, %v30
  %v32 = vmul.f32 %v29, %v30
  %v33 = vsub.f32 %v21, %v31
  %v34 = vsub.f32 %v22, %v32
  %v35 = vmul.f32 %v33, %v33
  %v36 = vmul.f32 %v34, %v34
  %v37 = vsel %vm23, %v35, 0.0
  %38 = vadd.xlane.f32.xlu0 %v37
  %v39 = vpop.xlane.xlu0 %38
  %v40 = vsel %vm23, %v36, 0.0
  %41 = vadd.xlane.f32.xlu0 %v40
  %v42 = vpop.xlane.xlu0 %41
  %v43 = vmul.f32 %v39, %v30
  %v44 = vmul.f32 %v42, %v30
  %v45 = vadd.f32 %v43, 1e-12
  %v46 = vadd.f32 %v44, 1e-12
  %v47 = vrsqrt.pop %v45
  %v48 = vrsqrt.pop %v46
  %v49 = vmul.f32 %v33, %v47
  %v50 = vmul.f32 %v34, %v48
  %v51 = vld [vmem:[%s2] sm:$0x1]
  %v53 = vlaneseq
  %v54 = vshrl.u32 %v53, 7
  %v55 = vsub.s32 0, %v54
  %v56 = vrot.slane %v51, %v55
  %v58 = vmul.f32 %v49, %v56
  %v59 = vmul.f32 %v50, %v56
  %v60 = vld [vmem:[%s3] sm:$0x1]
  %v62 = vlaneseq
  %v63 = vshrl.u32 %v62, 7
  %v64 = vsub.s32 0, %v63
  %v65 = vrot.slane %v60, %v64
  %v67 = vadd.f32 %v58, %v65
  %v68 = vadd.f32 %v59, %v65
  %69 = vst.msk [vmem:[%s4] sm:$0xff] %vm23, %v67
  %70 = vst.msk [vmem:[%s4 + $0x8] sm:$0xff] %vm23, %v68
  // Predicated region
  $region18: #{transformer_forward.42} parent=0 // pred_check
    _
  $region19: #{transformer_forward.42} parent=0 // pred_check_branch
    %72 = sbr.rel (0) target = $region21
  $region20: #{transformer_forward.42} parent=0 // pred_region
    _
  $region21: #{transformer_forward.42} parent=0 // pred_fallthru
    _
  // Predicated region
  $region22: #{transformer_forward.42} parent=0 // pred_check
    _
  $region23: #{transformer_forward.42} parent=0 // pred_check_branch
    %74 = sbr.rel (0) target = $region25
  $region24: #{transformer_forward.42} parent=0 // pred_region
    _
  $region25: #{transformer_forward.42} parent=0 // pred_fallthru
    _

// kernel: transformer_forward.40
$region0: #{transformer_forward.40}
  #allocation0 [shape = 'u32[]', space=smem, size = 0x4, offset = 0x4, fixed_abs, tag = 'smem constant byte address 0x4 - core index']
  #allocation1 [shape = 'u32[144,128]{1,0:T(1,128)}', space=vmem, size = 0x12000, scoped, tag = 'internal scratch']
  #allocation2 [shape = 'f32[4,8,1]{2,1,0:T(8,128)}', space=vmem, size = 0x4000, scoped, tag = 'scratch operand']
  #allocation3 [shape = 'f32[4,8,1]{2,1,0:T(8,128)}', space=vmem, size = 0x4000, scoped, tag = 'scratch operand']
  #allocation4 [shape = 'f32[4,8,8]{2,1,0:T(8,128)}', space=vmem, size = 0x4000, scoped, tag = 'scratch operand']
  %s0 = inlined_call_operand.vmem [shape: f32[2,8,1], index: 0, kind: input, shape index: {}]
  %s1 = inlined_call_operand.vmem [shape: f32[2,1,8], index: 1, kind: input, shape index: {}]
  %s2 = inlined_call_operand.vmem [shape: f32[2,4,8,8], index: 2, kind: input, shape index: {}]
  %s3 = inlined_call_operand.vmem [shape: f32[2,4,8,8], index: 3, kind: input, shape index: {}]
  %s4 = inlined_call_operand.vmem [shape: f32[2,4,8,8], index: 4, kind: input, shape index: {}]
  %s5 = inlined_call_operand.vmem [shape: f32[2,4,8,8], index: 5, kind: output, shape index: {}]
  %s6 = sld [smem:[#allocation0]]
  $region61: #{transformer_forward.40} parent=0
    _
  %s8 = ssub.s32 1, %s6
  %s9 = scalar_select 0, %s8, %s6
  loop: start=0, step=1, limit=4
  $region2: #{transformer_forward.40} parent=0 // loop_pre_header
    _
  $region3: #{transformer_forward.40} parent=0 // loop_header
    %s11 = sphi 0, %s15
    %p12 = scmp.ge.s32.totalorder %s11, 4
    %s18 = sphi 0, %s37
    %s19 = sphi 0, %s33
    %s20 = sphi 0, %s29
    %s21 = sphi 0, %s18
    %s22 = sphi 0, %s19
    %s23 = sphi 0, %s20
    %s24 = sphi 0, %s21
    %s25 = sphi 0, %s22
    %s26 = sphi 0, %s23
    %s42 = sphi 0, %s44
    %s45 = sphi 0, %s42
    %s46 = sphi 0, %s45
    %s62 = sphi 0, %s46
    %s70 = sphi 0, %s72
    %s73 = sphi 0, %s70
    %s74 = sphi 0, %s73
    %s90 = sphi 0, %s74
    %s98 = sphi 0, %s100
    %s101 = sphi 0, %s98
    %s102 = sphi 0, %s101
    %s118 = sphi 0, %s102
    %s126 = sphi 0, %s128
    %s129 = sphi 0, %s126
    %s130 = sphi 0, %s129
    %s146 = sphi 0, %s130
    %s154 = sphi 0, %s156
    %s157 = sphi 0, %s154
    %s158 = sphi 0, %s157
    %s174 = sphi 0, %s158
    %s182 = sphi 0, %s184
    %s185 = sphi 0, %s182
    %s186 = sphi 0, %s185
    %s202 = sphi 0, %s186
  $region4: #{transformer_forward.40} parent=0 // loop_header_branch
    %14 = sbr.rel (%p12) target = $region8
  $region5: #{transformer_forward.40} parent=0 // loop_body
    %s16 = ssub.s32 %s11, 1
    %s17 = ssub.s32 %s11, 2
    %s27 = sadd.s32 1, %s20
    %p28 = scmp.ge.s32.totalorder %s27, 1
    %s29 = scalar_select %p28, 0, %s27
    %s30 = sadd.s32 1, %s19
    %s31 = scalar_select %p28, %s30, %s19
    %p32 = scmp.ge.s32.totalorder %s31, 1
    %s33 = scalar_select %p32, 0, %s31
    %s34 = sadd.s32 1, %s18
    %s35 = scalar_select %p32, %s34, %s18
    %p36 = scmp.ge.s32.totalorder %s35, 2
    %s37 = scalar_select %p36, 0, %s35
    %s38 = ssub.s32 %s18, %s37
    %s39 = ssub.s32 %s19, %s33
    %s40 = sor.u32 %s38, %s39
    %p41 = scmp.eq.s32.totalorder %s40, 0
    %s43 = sadd.s32 %s42, 1
    %s44 = scalar_select %p41, %s42, %s43
    %p47 = pneg %p41
    %p48 = scmp.eq.s32.totalorder %s11, 1
    %p49 = por %p47, %p48
    %p50 = scmp.ne.s32.totalorder %s42, %s45
    %p51 = scmp.eq.s32.totalorder %s11, 0
    %p52 = por %p50, %p51
    %p53 = scmp.ne.s32.totalorder %s42, %s45
    %p54 = scmp.eq.s32.totalorder %s16, 1
    %p55 = por %p53, %p54
    %p56 = scmp.ne.s32.totalorder %s45, %s46
    %p57 = scmp.eq.s32.totalorder %s16, 0
    %p58 = por %p56, %p57
    %p59 = scmp.ne.s32.totalorder %s45, %s46
    %p60 = scmp.eq.s32.totalorder %s17, 1
    %p61 = por %p59, %p60
    %p63 = scmp.ne.s32.totalorder %s46, %s62
    %p64 = scmp.eq.s32.totalorder %s17, 0
    %p65 = por %p63, %p64
    %s66 = ssub.s32 %s18, %s37
    %s67 = ssub.s32 %s20, %s29
    %s68 = sor.u32 %s66, %s67
    %p69 = scmp.eq.s32.totalorder %s68, 0
    %s71 = sadd.s32 %s70, 1
    %s72 = scalar_select %p69, %s70, %s71
    %p75 = pneg %p69
    %p76 = scmp.eq.s32.totalorder %s11, 1
    %p77 = por %p75, %p76
    %p78 = scmp.ne.s32.totalorder %s70, %s73
    %p79 = scmp.eq.s32.totalorder %s11, 0
    %p80 = por %p78, %p79
    %p81 = scmp.ne.s32.totalorder %s70, %s73
    %p82 = scmp.eq.s32.totalorder %s16, 1
    %p83 = por %p81, %p82
    %p84 = scmp.ne.s32.totalorder %s73, %s74
    %p85 = scmp.eq.s32.totalorder %s16, 0
    %p86 = por %p84, %p85
    %p87 = scmp.ne.s32.totalorder %s73, %s74
    %p88 = scmp.eq.s32.totalorder %s17, 1
    %p89 = por %p87, %p88
    %p91 = scmp.ne.s32.totalorder %s74, %s90
    %p92 = scmp.eq.s32.totalorder %s17, 0
    %p93 = por %p91, %p92
    %s94 = ssub.s32 %s18, %s37
    %s95 = ssub.s32 %s19, %s33
    %s96 = sor.u32 %s94, %s95
    %p97 = scmp.eq.s32.totalorder %s96, 0
    %s99 = sadd.s32 %s98, 1
    %s100 = scalar_select %p97, %s98, %s99
    %p103 = pneg %p97
    %p104 = scmp.eq.s32.totalorder %s11, 1
    %p105 = por %p103, %p104
    %p106 = scmp.ne.s32.totalorder %s98, %s101
    %p107 = scmp.eq.s32.totalorder %s11, 0
    %p108 = por %p106, %p107
    %p109 = scmp.ne.s32.totalorder %s98, %s101
    %p110 = scmp.eq.s32.totalorder %s16, 1
    %p111 = por %p109, %p110
    %p112 = scmp.ne.s32.totalorder %s101, %s102
    %p113 = scmp.eq.s32.totalorder %s16, 0
    %p114 = por %p112, %p113
    %p115 = scmp.ne.s32.totalorder %s101, %s102
    %p116 = scmp.eq.s32.totalorder %s17, 1
    %p117 = por %p115, %p116
    %p119 = scmp.ne.s32.totalorder %s102, %s118
    %p120 = scmp.eq.s32.totalorder %s17, 0
    %p121 = por %p119, %p120
    %s122 = ssub.s32 %s18, %s37
    %s123 = ssub.s32 %s20, %s29
    %s124 = sor.u32 %s122, %s123
    %p125 = scmp.eq.s32.totalorder %s124, 0
    %s127 = sadd.s32 %s126, 1
    %s128 = scalar_select %p125, %s126, %s127
    %p131 = pneg %p125
    %p132 = scmp.eq.s32.totalorder %s11, 1
    %p133 = por %p131, %p132
    %p134 = scmp.ne.s32.totalorder %s126, %s129
    %p135 = scmp.eq.s32.totalorder %s11, 0
    %p136 = por %p134, %p135
    %p137 = scmp.ne.s32.totalorder %s126, %s129
    %p138 = scmp.eq.s32.totalorder %s16, 1
    %p139 = por %p137, %p138
    %p140 = scmp.ne.s32.totalorder %s129, %s130
    %p141 = scmp.eq.s32.totalorder %s16, 0
    %p142 = por %p140, %p141
    %p143 = scmp.ne.s32.totalorder %s129, %s130
    %p144 = scmp.eq.s32.totalorder %s17, 1
    %p145 = por %p143, %p144
    %p147 = scmp.ne.s32.totalorder %s130, %s146
    %p148 = scmp.eq.s32.totalorder %s17, 0
    %p149 = por %p147, %p148
    %s150 = ssub.s32 %s18, %s37
    %s151 = ssub.s32 %s20, %s29
    %s152 = sor.u32 %s150, %s151
    %p153 = scmp.eq.s32.totalorder %s152, 0
    %s155 = sadd.s32 %s154, 1
    %s156 = scalar_select %p153, %s154, %s155
    %p159 = pneg %p153
    %p160 = scmp.eq.s32.totalorder %s11, 1
    %p161 = por %p159, %p160
    %p162 = scmp.ne.s32.totalorder %s154, %s157
    %p163 = scmp.eq.s32.totalorder %s11, 0
    %p164 = por %p162, %p163
    %p165 = scmp.ne.s32.totalorder %s154, %s157
    %p166 = scmp.eq.s32.totalorder %s16, 1
    %p167 = por %p165, %p166
    %p168 = scmp.ne.s32.totalorder %s157, %s158
    %p169 = scmp.eq.s32.totalorder %s16, 0
    %p170 = por %p168, %p169
    %p171 = scmp.ne.s32.totalorder %s157, %s158
    %p172 = scmp.eq.s32.totalorder %s17, 1
    %p173 = por %p171, %p172
    %p175 = scmp.ne.s32.totalorder %s158, %s174
    %p176 = scmp.eq.s32.totalorder %s17, 0
    %p177 = por %p175, %p176
    %s178 = ssub.s32 %s18, %s37
    %s179 = ssub.s32 %s19, %s33
    %s180 = sor.u32 %s178, %s179
    %p181 = scmp.eq.s32.totalorder %s180, 0
    %s183 = sadd.s32 %s182, 1
    %s184 = scalar_select %p181, %s182, %s183
    %p187 = pneg %p181
    %p188 = scmp.eq.s32.totalorder %s11, 1
    %p189 = por %p187, %p188
    %p190 = scmp.ne.s32.totalorder %s182, %s185
    %p191 = scmp.eq.s32.totalorder %s11, 0
    %p192 = por %p190, %p191
    %p193 = scmp.ne.s32.totalorder %s182, %s185
    %p194 = scmp.eq.s32.totalorder %s16, 1
    %p195 = por %p193, %p194
    %p196 = scmp.ne.s32.totalorder %s185, %s186
    %p197 = scmp.eq.s32.totalorder %s16, 0
    %p198 = por %p196, %p197
    %p199 = scmp.ne.s32.totalorder %s185, %s186
    %p200 = scmp.eq.s32.totalorder %s17, 1
    %p201 = por %p199, %p200
    %p203 = scmp.ne.s32.totalorder %s186, %s202
    %p204 = scmp.eq.s32.totalorder %s17, 0
    %p205 = por %p203, %p204
    %p206 = scmp.le.s32.totalorder 1, %s11
    %p207 = scmp.lt.s32.totalorder %s11, 3
    %p208 = pnand %p206, %p207
    %p209 = pneg %p208
    // Predicated region
    $region9: #{transformer_forward.40} parent=5 // pred_check
      _
    $region10: #{transformer_forward.40} parent=5 // pred_check_branch
      %211 = sbr.rel (%p208) target = $region12
    $region11: #{transformer_forward.40} parent=5 // pred_region
      %s212 = ssub.s32 %s11, 1
    $region12: #{transformer_forward.40} parent=5 // pred_fallthru
      _
    %p213 = scmp.lt.s32.totalorder %s11, 2
    // Predicated region
    $region13: #{transformer_forward.40} parent=5 // pred_check
      %p214 = pneg %p213
    $region14: #{transformer_forward.40} parent=5 // pred_check_branch
      %216 = sbr.rel (%p214) target = $region16
    $region15: #{transformer_forward.40} parent=5 // pred_region
      // Predicated region
      $region17: #{transformer_forward.40} parent=15 // pred_check
        %p217 = pneg %p52
      $region18: #{transformer_forward.40} parent=15 // pred_check_branch
        %219 = sbr.rel (%p217) target = $region20
      $region19: #{transformer_forward.40} parent=15 // pred_region
        %p220 = scmp.lt.s32.totalorder %s18, 1
        %s221 = scalar_select %p220, %s18, 1
        %p222 = scmp.lt.s32.totalorder %s19, 0
        %s223 = scalar_select %p222, %s19, 0
        %s224 = sadd.s32 %s223, %s221
        %s225 = smul.addr %s224, 8
        %s226 = scalar_lea.vmem %s0, %s225
      $region20: #{transformer_forward.40} parent=15 // pred_fallthru
        _
      // Predicated region
      $region21: #{transformer_forward.40} parent=15 // pred_check
        %p227 = pneg %p80
      $region22: #{transformer_forward.40} parent=15 // pred_check_branch
        %229 = sbr.rel (%p227) target = $region24
      $region23: #{transformer_forward.40} parent=15 // pred_region
        %p230 = scmp.lt.s32.totalorder %s18, 1
        %s231 = scalar_select %p230, %s18, 1
        %p232 = scmp.lt.s32.totalorder %s20, 0
        %s233 = scalar_select %p232, %s20, 0
        %s234 = sadd.s32 %s233, %s231
        %s235 = scalar_lea.vmem %s1, %s234
      $region24: #{transformer_forward.40} parent=15 // pred_fallthru
        _
      // Predicated region
      $region25: #{transformer_forward.40} parent=15 // pred_check
        %p236 = pneg %p108
      $region26: #{transformer_forward.40} parent=15 // pred_check_branch
        %238 = sbr.rel (%p236) target = $region28
      $region27: #{transformer_forward.40} parent=15 // pred_region
        %p239 = scmp.lt.s32.totalorder %s18, 1
        %s240 = scalar_select %p239, %s18, 1
        %p241 = scmp.lt.s32.totalorder %s19, 0
        %s242 = scalar_select %p241, %s19, 0
        %s243 = smul.addr %s240, 4
        %s244 = sadd.s32 %s242, %s243
        %s245 = smul.addr %s244, 8
        %s246 = scalar_lea.vmem %s2, %s245
      $region28: #{transformer_forward.40} parent=15 // pred_fallthru
        _
      // Predicated region
      $region29: #{transformer_forward.40} parent=15 // pred_check
        %p247 = pneg %p136
      $region30: #{transformer_forward.40} parent=15 // pred_check_branch
        %249 = sbr.rel (%p247) target = $region32
      $region31: #{transformer_forward.40} parent=15 // pred_region
        %p250 = scmp.lt.s32.totalorder %s18, 1
        %s251 = scalar_select %p250, %s18, 1
        %p252 = scmp.lt.s32.totalorder %s20, 0
        %s253 = scalar_select %p252, %s20, 0
        %s254 = smul.addr %s251, 4
        %s255 = sadd.s32 %s253, %s254
        %s256 = smul.addr %s255, 8
        %s257 = scalar_lea.vmem %s3, %s256
      $region32: #{transformer_forward.40} parent=15 // pred_fallthru
        _
      // Predicated region
      $region33: #{transformer_forward.40} parent=15 // pred_check
        %p258 = pneg %p164
      $region34: #{transformer_forward.40} parent=15 // pred_check_branch
        %260 = sbr.rel (%p258) target = $region36
      $region35: #{transformer_forward.40} parent=15 // pred_region
        %p261 = scmp.lt.s32.totalorder %s18, 1
        %s262 = scalar_select %p261, %s18, 1
        %p263 = scmp.lt.s32.totalorder %s20, 0
        %s264 = scalar_select %p263, %s20, 0
        %s265 = smul.addr %s262, 4
        %s266 = sadd.s32 %s264, %s265
        %s267 = smul.addr %s266, 8
        %s268 = scalar_lea.vmem %s4, %s267
      $region36: #{transformer_forward.40} parent=15 // pred_fallthru
        _
    $region16: #{transformer_forward.40} parent=5 // pred_fallthru
      _
    %p269 = scmp.le.s32.totalorder 1, %s11
    %p270 = scmp.lt.s32.totalorder %s11, 3
    %p271 = pnand %p269, %p270
    %p272 = pneg %p271
    // Predicated region
    $region37: #{transformer_forward.40} parent=5 // pred_check
      _
    $region38: #{transformer_forward.40} parent=5 // pred_check_branch
      %274 = sbr.rel (%p271) target = $region40
    $region39: #{transformer_forward.40} parent=5 // pred_region
      %s275 = ssub.s32 %s11, 1
      %p276 = scmp.lt.s32.totalorder %s21, 1
      %s277 = scalar_select %p276, %s21, 1
      %p278 = scmp.lt.s32.totalorder %s22, 0
      %s279 = scalar_select %p278, %s22, 0
      %s280 = sadd.s32 %s279, %s277
      %s281 = smul.addr %s280, 8
      %s282 = scalar_lea.vmem %s0, %s281
      %p283 = pneg %p58
      %p284 = pneg %p55
      %p285 = scmp.lt.s32.totalorder %s21, 1
      %s286 = scalar_select %p285, %s21, 1
      %p287 = scmp.lt.s32.totalorder %s23, 0
      %s288 = scalar_select %p287, %s23, 0
      %s289 = sadd.s32 %s288, %s286
      %s290 = scalar_lea.vmem %s1, %s289
      %p291 = pneg %p86
      %p292 = pneg %p83
      %p293 = scmp.lt.s32.totalorder %s21, 1
      %s294 = scalar_select %p293, %s21, 1
      %p295 = scmp.lt.s32.totalorder %s22, 0
      %s296 = scalar_select %p295, %s22, 0
      %s297 = smul.addr %s294, 4
      %s298 = sadd.s32 %s296, %s297
      %s299 = smul.addr %s298, 8
      %s300 = scalar_lea.vmem %s2, %s299
      %p301 = pneg %p114
      %p302 = pneg %p111
      %p303 = scmp.lt.s32.totalorder %s21, 1
      %s304 = scalar_select %p303, %s21, 1
      %p305 = scmp.lt.s32.totalorder %s23, 0
      %s306 = scalar_select %p305, %s23, 0
      %s307 = smul.addr %s304, 4
      %s308 = sadd.s32 %s306, %s307
      %s309 = smul.addr %s308, 8
      %s310 = scalar_lea.vmem %s3, %s309
      %p311 = pneg %p142
      %p312 = pneg %p139
      %p313 = scmp.lt.s32.totalorder %s21, 1
      %s314 = scalar_select %p313, %s21, 1
      %p315 = scmp.lt.s32.totalorder %s23, 0
      %s316 = scalar_select %p315, %s23, 0
      %s317 = smul.addr %s314, 4
      %s318 = sadd.s32 %s316, %s317
      %s319 = smul.addr %s318, 8
      %s320 = scalar_lea.vmem %s4, %s319
      %p321 = pneg %p170
      %p322 = pneg %p167
      %p323 = pneg %p198
      %p324 = pneg %p195
      %p325 = scmp.lt.s32.totalorder %s21, 1
      %s326 = scalar_select %p325, %s21, 1
      %p327 = scmp.lt.s32.totalorder %s22, 0
      %s328 = scalar_select %p327, %s22, 0
      %s329 = smul.addr %s326, 4
      %s330 = sadd.s32 %s328, %s329
      %s331 = smul.addr %s330, 8
      %s332 = scalar_lea.vmem %s5, %s331
      %p333 = scmp.lt.s32.totalorder %s21, 1
      %s334 = scalar_select %p333, %s21, 1
      %p335 = scmp.lt.s32.totalorder %s22, 0
      %s336 = scalar_select %p335, %s22, 0
      %s337 = sadd.s32 %s336, %s334
      %s338 = smul.addr %s337, 8
      %s339 = scalar_lea.vmem %s0, %s338
      %p340 = scmp.lt.s32.totalorder %s21, 1
      %s341 = scalar_select %p340, %s21, 1
      %p342 = scmp.lt.s32.totalorder %s23, 0
      %s343 = scalar_select %p342, %s23, 0
      %s344 = sadd.s32 %s343, %s341
      %s345 = scalar_lea.vmem %s1, %s344
      %p346 = scmp.lt.s32.totalorder %s21, 1
      %s347 = scalar_select %p346, %s21, 1
      %p348 = scmp.lt.s32.totalorder %s22, 0
      %s349 = scalar_select %p348, %s22, 0
      %s350 = smul.addr %s347, 4
      %s351 = sadd.s32 %s349, %s350
      %s352 = smul.addr %s351, 8
      %s353 = scalar_lea.vmem %s2, %s352
      %p354 = scmp.lt.s32.totalorder %s21, 1
      %s355 = scalar_select %p354, %s21, 1
      %p356 = scmp.lt.s32.totalorder %s23, 0
      %s357 = scalar_select %p356, %s23, 0
      %s358 = smul.addr %s355, 4
      %s359 = sadd.s32 %s357, %s358
      %s360 = smul.addr %s359, 8
      %s361 = scalar_lea.vmem %s3, %s360
      %p362 = scmp.lt.s32.totalorder %s21, 1
      %s363 = scalar_select %p362, %s21, 1
      %p364 = scmp.lt.s32.totalorder %s23, 0
      %s365 = scalar_select %p364, %s23, 0
      %s366 = smul.addr %s363, 4
      %s367 = sadd.s32 %s365, %s366
      %s368 = smul.addr %s367, 8
      %s369 = scalar_lea.vmem %s4, %s368
      %p370 = scmp.lt.s32.totalorder %s21, 1
      %s371 = scalar_select %p370, %s21, 1
      %p372 = scmp.lt.s32.totalorder %s22, 0
      %s373 = scalar_select %p372, %s22, 0
      %s374 = smul.addr %s371, 4
      %s375 = sadd.s32 %s373, %s374
      %s376 = smul.addr %s375, 8
      %s377 = scalar_lea.vmem %s5, %s376
      %p378 = scmp.eq.s32.totalorder %s23, 0
      // Predicated region
      $region41: #{transformer_forward.40} parent=39 // pred_check
        %p379 = pneg %p378
      $region42: #{transformer_forward.40} parent=39 // pred_check_branch
        %381 = sbr.rel (%p379) target = $region44
      $region43: #{transformer_forward.40} parent=39 // pred_region
        %vm382 = vcmask 7168
        %383 = vst.msk [vmem:[#allocation2] sm:$0xff] %vm382, -inf
        %384 = vst.msk [vmem:[#allocation2 + $0x8] sm:$0xff] %vm382, -inf
        %385 = vst.msk [vmem:[#allocation2 + $0x10] sm:$0xff] %vm382, -inf
        %386 = vst.msk [vmem:[#allocation2 + $0x18] sm:$0xff] %vm382, -inf
        %387 = vst.msk [vmem:[#allocation3] sm:$0xff] %vm382, 0.0
        %388 = vst.msk [vmem:[#allocation3 + $0x8] sm:$0xff] %vm382, 0.0
        %389 = vst.msk [vmem:[#allocation3 + $0x10] sm:$0xff] %vm382, 0.0
        %390 = vst.msk [vmem:[#allocation3 + $0x18] sm:$0xff] %vm382, 0.0
        %vm391 = vcmask 64512
        %392 = vst.msk [vmem:[#allocation4] sm:$0xff] %vm391, 0.0
        %393 = vst.msk [vmem:[#allocation4 + $0x8] sm:$0xff] %vm391, 0.0
        %394 = vst.msk [vmem:[#allocation4 + $0x10] sm:$0xff] %vm391, 0.0
        %395 = vst.msk [vmem:[#allocation4 + $0x18] sm:$0xff] %vm391, 0.0
      $region44: #{transformer_forward.40} parent=39 // pred_fallthru
        _
      %v396 = vld [vmem:[%s353] sm:$0xff]
      %v397 = vld [vmem:[%s353 + $0x8] sm:$0xff]
      %v398 = vld [vmem:[%s353 + $0x10] sm:$0xff]
      %v399 = vld [vmem:[%s353 + $0x18] sm:$0xff]
      %v400 = vld [vmem:[%s361] sm:$0xff]
      %v401 = vld [vmem:[%s361 + $0x8] sm:$0xff]
      %v402 = vld [vmem:[%s361 + $0x10] sm:$0xff]
      %v403 = vld [vmem:[%s361 + $0x18] sm:$0xff]
      %v404 = vld [vmem:[%s369] sm:$0xff]
      %v405 = vld [vmem:[%s369 + $0x8] sm:$0xff]
      %v406 = vld [vmem:[%s369 + $0x10] sm:$0xff]
      %v407 = vld [vmem:[%s369 + $0x18] sm:$0xff]
      %vm408 = vcmask 64512
      %v410 = vsel %vm408, %v396, 0
      %v413 = vsel %vm408, %v400, 0
      %415 = vmatprep.subr.mxu0 0.0
      %416 = vmatpush1.xpose.msra.mxu0 %v413
      %417 = vmatprep.subr.mxu0 0.0
      %418 = vmatpush1.xpose.msra.mxu0 0.0
      %419 = vmatprep.subr.mxu0 0.0
      %420 = vmatpush1.xpose.msra.mxu0 0.0
      %421 = vmatprep.subr.mxu0 0.0
      %422 = vmatpush1.xpose.msra.mxu0 0.0
      %423 = vmatprep.subr.mxu0 0.0
      %424 = vmatpush1.xpose.msra.mxu0 0.0
      %425 = vmatprep.subr.mxu0 0.0
      %426 = vmatpush1.xpose.msra.mxu0 0.0
      %427 = vmatprep.subr.mxu0 0.0
      %428 = vmatpush1.xpose.msra.mxu0 0.0
      %429 = vmatprep.subr.mxu0 0.0
      %430 = vmatpush1.xpose.msra.mxu0 0.0
      %431 = vmatprep.subr.mxu0 0.0
      %432 = vmatpush1.xpose.msra.mxu0 0.0
      %433 = vmatprep.subr.mxu0 0.0
      %434 = vmatpush1.xpose.msra.mxu0 0.0
      %435 = vmatprep.subr.mxu0 0.0
      %436 = vmatpush1.xpose.msra.mxu0 0.0
      %437 = vmatprep.subr.mxu0 0.0
      %438 = vmatpush1.xpose.msra.mxu0 0.0
      %439 = vmatprep.subr.mxu0 0.0
      %440 = vmatpush1.xpose.msra.mxu0 0.0
      %441 = vmatprep.subr.mxu0 0.0
      %442 = vmatpush1.xpose.msra.mxu0 0.0
      %443 = vmatprep.subr.mxu0 0.0
      %444 = vmatpush1.xpose.msra.mxu0 0.0
      %445 = vmatprep.subr.mxu0 0.0
      %446 = vmatpush1.xpose.msra.mxu0 0.0
      %447 = vmatprep.subr.mxu0 0.0
      %448 = vmatpush1.xpose.msra.mxu0 0.0
      %449 = vmatprep.subr.mxu0 0.0
      %450 = vmatpush1.xpose.msra.mxu0 0.0
      %451 = vmatprep.subr.mxu0 0.0
      %452 = vmatpush1.xpose.msra.mxu0 0.0
      %453 = vmatprep.subr.mxu0 0.0
      %454 = vmatpush1.xpose.msra.mxu0 0.0
      %455 = vmatprep.subr.mxu0 0.0
      %456 = vmatpush1.xpose.msra.mxu0 0.0
      %457 = vmatprep.subr.mxu0 0.0
      %458 = vmatpush1.xpose.msra.mxu0 0.0
      %459 = vmatprep.subr.mxu0 0.0
      %460 = vmatpush1.xpose.msra.mxu0 0.0
      %461 = vmatprep.subr.mxu0 0.0
      %462 = vmatpush1.xpose.msra.mxu0 0.0
      %463 = vmatprep.subr.mxu0 0.0
      %464 = vmatpush1.xpose.msra.mxu0 0.0
      %465 = vmatprep.subr.mxu0 0.0
      %466 = vmatpush1.xpose.msra.mxu0 0.0
      %467 = vmatprep.subr.mxu0 0.0
      %468 = vmatpush1.xpose.msra.mxu0 0.0
      %469 = vmatprep.subr.mxu0 0.0
      %470 = vmatpush1.xpose.msra.mxu0 0.0
      %471 = vmatprep.subr.mxu0 0.0
      %472 = vmatpush1.xpose.msra.mxu0 0.0
      %473 = vmatprep.subr.mxu0 0.0
      %474 = vmatpush1.xpose.msra.mxu0 0.0
      %475 = vmatprep.subr.mxu0 0.0
      %476 = vmatpush1.xpose.msra.mxu0 0.0
      %477 = vmatprep.subr.mxu0 0.0
      %478 = vmatpush1.xpose.msra.mxu0 0.0
      %479 = vmatprep.mubr.f32.mxu0 0.0
      %480 = vmatmul.mubr.f32.gmra.mrb[0].mxu0 %v410
      %v481 = vpop.f32.mrb[0].mxu0
      %v482 = vadd.f32 0.0, %v481
      %v483 = vpop.f32.mrb[0].mxu0
      %484 = vdwg.mxu0
      %v486 = vsel %vm408, %v397, 0
      %v489 = vsel %vm408, %v401, 0
      %491 = vmatprep.subr.mxu0 0.0
      %492 = vmatpush1.xpose.msra.mxu0 %v489
      %493 = vmatprep.subr.mxu0 0.0
      %494 = vmatpush1.xpose.msra.mxu0 0.0
      %495 = vmatprep.subr.mxu0 0.0
      %496 = vmatpush1.xpose.msra.mxu0 0.0
      %497 = vmatprep.subr.mxu0 0.0
      %498 = vmatpush1.xpose.msra.mxu0 0.0
      %499 = vmatprep.subr.mxu0 0.0
      %500 = vmatpush1.xpose.msra.mxu0 0.0
      %501 = vmatprep.subr.mxu0 0.0
      %502 = vmatpush1.xpose.msra.mxu0 0.0
      %503 = vmatprep.subr.mxu0 0.0
      %504 = vmatpush1.xpose.msra.mxu0 0.0
      %505 = vmatprep.subr.mxu0 0.0
      %506 = vmatpush1.xpose.msra.mxu0 0.0
      %507 = vmatprep.subr.mxu0 0.0
      %508 = vmatpush1.xpose.msra.mxu0 0.0
      %509 = vmatprep.subr.mxu0 0.0
      %510 = vmatpush1.xpose.msra.mxu0 0.0
      %511 = vmatprep.subr.mxu0 0.0
      %512 = vmatpush1.xpose.msra.mxu0 0.0
      %513 = vmatprep.subr.mxu0 0.0
      %514 = vmatpush1.xpose.msra.mxu0 0.0
      %515 = vmatprep.subr.mxu0 0.0
      %516 = vmatpush1.xpose.msra.mxu0 0.0
      %517 = vmatprep.subr.mxu0 0.0
      %518 = vmatpush1.xpose.msra.mxu0 0.0
      %519 = vmatprep.subr.mxu0 0.0
      %520 = vmatpush1.xpose.msra.mxu0 0.0
      %521 = vmatprep.subr.mxu0 0.0
      %522 = vmatpush1.xpose.msra.mxu0 0.0
      %523 = vmatprep.subr.mxu0 0.0
      %524 = vmatpush1.xpose.msra.mxu0 0.0
      %525 = vmatprep.subr.mxu0 0.0
      %526 = vmatpush1.xpose.msra.mxu0 0.0
      %527 = vmatprep.subr.mxu0 0.0
      %528 = vmatpush1.xpose.msra.mxu0 0.0
      %529 = vmatprep.subr.mxu0 0.0
      %530 = vmatpush1.xpose.msra.mxu0 0.0
      %531 = vmatprep.subr.mxu0 0.0
      %532 = vmatpush1.xpose.msra.mxu0 0.0
      %533 = vmatprep.subr.mxu0 0.0
      %534 = vmatpush1.xpose.msra.mxu0 0.0
      %535 = vmatprep.subr.mxu0 0.0
      %536 = vmatpush1.xpose.msra.mxu0 0.0
      %537 = vmatprep.subr.mxu0 0.0
      %538 = vmatpush1.xpose.msra.mxu0 0.0
      %539 = vmatprep.subr.mxu0 0.0
      %540 = vmatpush1.xpose.msra.mxu0 0.0
      %541 = vmatprep.subr.mxu0 0.0
      %542 = vmatpush1.xpose.msra.mxu0 0.0
      %543 = vmatprep.subr.mxu0 0.0
      %544 = vmatpush1.xpose.msra.mxu0 0.0
      %545 = vmatprep.subr.mxu0 0.0
      %546 = vmatpush1.xpose.msra.mxu0 0.0
      %547 = vmatprep.subr.mxu0 0.0
      %548 = vmatpush1.xpose.msra.mxu0 0.0
      %549 = vmatprep.subr.mxu0 0.0
      %550 = vmatpush1.xpose.msra.mxu0 0.0
      %551 = vmatprep.subr.mxu0 0.0
      %552 = vmatpush1.xpose.msra.mxu0 0.0
      %553 = vmatprep.subr.mxu0 0.0
      %554 = vmatpush1.xpose.msra.mxu0 0.0
      %555 = vmatprep.mubr.f32.mxu0 0.0
      %556 = vmatmul.mubr.f32.gmra.mrb[0].mxu0 %v486
      %v557 = vpop.f32.mrb[0].mxu0
      %v558 = vadd.f32 0.0, %v557
      %v559 = vpop.f32.mrb[0].mxu0
      %560 = vdwg.mxu0
      %v562 = vsel %vm408, %v398, 0
      %v565 = vsel %vm408, %v402, 0
      %567 = vmatprep.subr.mxu0 0.0
      %568 = vmatpush1.xpose.msra.mxu0 %v565
      %569 = vmatprep.subr.mxu0 0.0
      %570 = vmatpush1.xpose.msra.mxu0 0.0
      %571 = vmatprep.subr.mxu0 0.0
      %572 = vmatpush1.xpose.msra.mxu0 0.0
      %573 = vmatprep.subr.mxu0 0.0
      %574 = vmatpush1.xpose.msra.mxu0 0.0
      %575 = vmatprep.subr.mxu0 0.0
      %576 = vmatpush1.xpose.msra.mxu0 0.0
      %577 = vmatprep.subr.mxu0 0.0
      %578 = vmatpush1.xpose.msra.mxu0 0.0
      %579 = vmatprep.subr.mxu0 0.0
      %580 = vmatpush1.xpose.msra.mxu0 0.0
      %581 = vmatprep.subr.mxu0 0.0
      %582 = vmatpush1.xpose.msra.mxu0 0.0
      %583 = vmatprep.subr.mxu0 0.0
      %584 = vmatpush1.xpose.msra.mxu0 0.0
      %585 = vmatprep.subr.mxu0 0.0
      %586 = vmatpush1.xpose.msra.mxu0 0.0
      %587 = vmatprep.subr.mxu0 0.0
      %588 = vmatpush1.xpose.msra.mxu0 0.0
      %589 = vmatprep.subr.mxu0 0.0
      %590 = vmatpush1.xpose.msra.mxu0 0.0
      %591 = vmatprep.subr.mxu0 0.0
      %592 = vmatpush1.xpose.msra.mxu0 0.0
      %593 = vmatprep.subr.mxu0 0.0
      %594 = vmatpush1.xpose.msra.mxu0 0.0
      %595 = vmatprep.subr.mxu0 0.0
      %596 = vmatpush1.xpose.msra.mxu0 0.0
      %597 = vmatprep.subr.mxu0 0.0
      %598 = vmatpush1.xpose.msra.mxu0 0.0
      %599 = vmatprep.subr.mxu0 0.0
      %600 = vmatpush1.xpose.msra.mxu0 0.0
      %601 = vmatprep.subr.mxu0 0.0
      %602 = vmatpush1.xpose.msra.mxu0 0.0
      %603 = vmatprep.subr.mxu0 0.0
      %604 = vmatpush1.xpose.msra.mxu0 0.0
      %605 = vmatprep.subr.mxu0 0.0
      %606 = vmatpush1.xpose.msra.mxu0 0.0
      %607 = vmatprep.subr.mxu0 0.0
      %608 = vmatpush1.xpose.msra.mxu0 0.0
      %609 = vmatprep.subr.mxu0 0.0
      %610 = vmatpush1.xpose.msra.mxu0 0.0
      %611 = vmatprep.subr.mxu0 0.0
      %612 = vmatpush1.xpose.msra.mxu0 0.0
      %613 = vmatprep.subr.mxu0 0.0
      %614 = vmatpush1.xpose.msra.mxu0 0.0
      %615 = vmatprep.subr.mxu0 0.0
      %616 = vmatpush1.xpose.msra.mxu0 0.0
      %617 = vmatprep.subr.mxu0 0.0
      %618 = vmatpush1.xpose.msra.mxu0 0.0
      %619 = vmatprep.subr.mxu0 0.0
      %620 = vmatpush1.xpose.msra.mxu0 0.0
      %621 = vmatprep.subr.mxu0 0.0
      %622 = vmatpush1.xpose.msra.mxu0 0.0
      %623 = vmatprep.subr.mxu0 0.0
      %624 = vmatpush1.xpose.msra.mxu0 0.0
      %625 = vmatprep.subr.mxu0 0.0
      %626 = vmatpush1.xpose.msra.mxu0 0.0
      %627 = vmatprep.subr.mxu0 0.0
      %628 = vmatpush1.xpose.msra.mxu0 0.0
      %629 = vmatprep.subr.mxu0 0.0
      %630 = vmatpush1.xpose.msra.mxu0 0.0
      %631 = vmatprep.mubr.f32.mxu0 0.0
      %632 = vmatmul.mubr.f32.gmra.mrb[0].mxu0 %v562
      %v633 = vpop.f32.mrb[0].mxu0
      %v634 = vadd.f32 0.0, %v633
      %v635 = vpop.f32.mrb[0].mxu0
      %636 = vdwg.mxu0
      %v638 = vsel %vm408, %v399, 0
      %v641 = vsel %vm408, %v403, 0
      %643 = vmatprep.subr.mxu0 0.0
      %644 = vmatpush1.xpose.msra.mxu0 %v641
      %645 = vmatprep.subr.mxu0 0.0
      %646 = vmatpush1.xpose.msra.mxu0 0.0
      %647 = vmatprep.subr.mxu0 0.0
      %648 = vmatpush1.xpose.msra.mxu0 0.0
      %649 = vmatprep.subr.mxu0 0.0
      %650 = vmatpush1.xpose.msra.mxu0 0.0
      %651 = vmatprep.subr.mxu0 0.0
      %652 = vmatpush1.xpose.msra.mxu0 0.0
      %653 = vmatprep.subr.mxu0 0.0
      %654 = vmatpush1.xpose.msra.mxu0 0.0
      %655 = vmatprep.subr.mxu0 0.0
      %656 = vmatpush1.xpose.msra.mxu0 0.0
      %657 = vmatprep.subr.mxu0 0.0
      %658 = vmatpush1.xpose.msra.mxu0 0.0
      %659 = vmatprep.subr.mxu0 0.0
      %660 = vmatpush1.xpose.msra.mxu0 0.0
      %661 = vmatprep.subr.mxu0 0.0
      %662 = vmatpush1.xpose.msra.mxu0 0.0
      %663 = vmatprep.subr.mxu0 0.0
      %664 = vmatpush1.xpose.msra.mxu0 0.0
      %665 = vmatprep.subr.mxu0 0.0
      %666 = vmatpush1.xpose.msra.mxu0 0.0
      %667 = vmatprep.subr.mxu0 0.0
      %668 = vmatpush1.xpose.msra.mxu0 0.0
      %669 = vmatprep.subr.mxu0 0.0
      %670 = vmatpush1.xpose.msra.mxu0 0.0
      %671 = vmatprep.subr.mxu0 0.0
      %672 = vmatpush1.xpose.msra.mxu0 0.0
      %673 = vmatprep.subr.mxu0 0.0
      %674 = vmatpush1.xpose.msra.mxu0 0.0
      %675 = vmatprep.subr.mxu0 0.0
      %676 = vmatpush1.xpose.msra.mxu0 0.0
      %677 = vmatprep.subr.mxu0 0.0
      %678 = vmatpush1.xpose.msra.mxu0 0.0
      %679 = vmatprep.subr.mxu0 0.0
      %680 = vmatpush1.xpose.msra.mxu0 0.0
      %681 = vmatprep.subr.mxu0 0.0
      %682 = vmatpush1.xpose.msra.mxu0 0.0
      %683 = vmatprep.subr.mxu0 0.0
      %684 = vmatpush1.xpose.msra.mxu0 0.0
      %685 = vmatprep.subr.mxu0 0.0
      %686 = vmatpush1.xpose.msra.mxu0 0.0
      %687 = vmatprep.subr.mxu0 0.0
      %688 = vmatpush1.xpose.msra.mxu0 0.0
      %689 = vmatprep.subr.mxu0 0.0
      %690 = vmatpush1.xpose.msra.mxu0 0.0
      %691 = vmatprep.subr.mxu0 0.0
      %692 = vmatpush1.xpose.msra.mxu0 0.0
      %693 = vmatprep.subr.mxu0 0.0
      %694 = vmatpush1.xpose.msra.mxu0 0.0
      %695 = vmatprep.subr.mxu0 0.0
      %696 = vmatpush1.xpose.msra.mxu0 0.0
      %697 = vmatprep.subr.mxu0 0.0
      %698 = vmatpush1.xpose.msra.mxu0 0.0
      %699 = vmatprep.subr.mxu0 0.0
      %700 = vmatpush1.xpose.msra.mxu0 0.0
      %701 = vmatprep.subr.mxu0 0.0
      %702 = vmatpush1.xpose.msra.mxu0 0.0
      %703 = vmatprep.subr.mxu0 0.0
      %704 = vmatpush1.xpose.msra.mxu0 0.0
      %705 = vmatprep.subr.mxu0 0.0
      %706 = vmatpush1.xpose.msra.mxu0 0.0
      %707 = vmatprep.mubr.f32.mxu0 0.0
      %708 = vmatmul.mubr.f32.gmra.mrb[0].mxu0 %v638
      %v709 = vpop.f32.mrb[0].mxu0
      %v710 = vadd.f32 0.0, %v709
      %v711 = vpop.f32.mrb[0].mxu0
      %712 = vdwg.mxu0
      %v713 = vmul.f32 %v482, 0.35355338
      %v714 = vmul.f32 %v558, 0.35355338
      %v715 = vmul.f32 %v634, 0.35355338
      %v716 = vmul.f32 %v710, 0.35355338
      %v717 = vld [vmem:[%s339] sm:$0xff]
      %vm718 = vcmp.gt.f32.partialorder %v717, 0.5
      %v719 = vld [vmem:[%s345] sm:$0x1]
      %vm720 = vcmp.gt.f32.partialorder %v719, 0.5
      %v721 = vsel %vm718, 1, 0
      %722 = vset.pattern.permute.xlu0 0
      %723 = vperm.xlu0 %722, %v721
      %v724 = vpop.permute.xlu0 %723
      %vm725 = vcmp.eq.s32.totalorder %v724, 1
      %v726 = vsel %vm720, 1, 0
      %v727 = vlaneseq
      %v728 = vshrl.u32 %v727, 7
      %v729 = vsub.s32 0, %v728
      %v730 = vrot.slane %v726, %v729
      %vm731 = vcmp.eq.s32.totalorder %v730, 1
      %vm732 = vmand %vm725, %vm731
      %v733 = vsel %vm732, 1, 0
      %vm734 = vcmp.eq.s32.totalorder %v733, 1
      %v735 = vsel %vm734, %v713, -10000.0
      %v736 = vsel %vm734, %v714, -10000.0
      %v737 = vsel %vm734, %v715, -10000.0
      %v738 = vsel %vm734, %v716, -10000.0
      %v739 = vld [vmem:[#allocation2] sm:$0xff]
      %v740 = vld [vmem:[#allocation2 + $0x8] sm:$0xff]
      %v741 = vld [vmem:[#allocation2 + $0x10] sm:$0xff]
      %v742 = vld [vmem:[#allocation2 + $0x18] sm:$0xff]
      %v743 = vsel %vm408, %v735, -inf
      %744 = vmax.xlane.f32.xlu0 %v743
      %v745 = vpop.xlane.xlu0 %744
      %v746 = vsel %vm408, %v736, -inf
      %747 = vmax.xlane.f32.xlu0 %v746
      %v748 = vpop.xlane.xlu0 %747
      %v749 = vsel %vm408, %v737, -inf
      %750 = vmax.xlane.f32.xlu0 %v749
      %v751 = vpop.xlane.xlu0 %750
      %v752 = vsel %vm408, %v738, -inf
      %753 = vmax.xlane.f32.xlu0 %v752
      %v754 = vpop.xlane.xlu0 %753
      %v755 = vmax.f32 %v739, %v745
      %v756 = vmax.f32 %v740, %v748
      %v757 = vmax.f32 %v741, %v751
      %v758 = vmax.f32 %v742, %v754
      %v759 = vsub.f32 %v739, %v755
      %v760 = vsub.f32 %v740, %v756
      %v761 = vsub.f32 %v741, %v757
      %v762 = vsub.f32 %v742, %v758
      %v763 = vmul.f32 %v759, 1.442695
      %v764 = vpow.pop %v763
      %v765 = vmul.f32 %v760, 1.442695
      %v766 = vpow.pop %v765
      %v767 = vmul.f32 %v761, 1.442695
      %v768 = vpow.pop %v767
      %v769 = vmul.f32 %v762, 1.442695
      %v770 = vpow.pop %v769
      %772 = vset.pattern.permute.xlu0 0
      %773 = vperm.xlu0 %772, %v755
      %v774 = vpop.permute.xlu0 %773
      %777 = vset.pattern.permute.xlu0 0
      %778 = vperm.xlu0 %777, %v756
      %v779 = vpop.permute.xlu0 %778
      %782 = vset.pattern.permute.xlu0 0
      %783 = vperm.xlu0 %782, %v757
      %v784 = vpop.permute.xlu0 %783
      %787 = vset.pattern.permute.xlu0 0
      %788 = vperm.xlu0 %787, %v758
      %v789 = vpop.permute.xlu0 %788
      %v791 = vsub.f32 %v735, %v774
      %v792 = vsub.f32 %v736, %v779
      %v793 = vsub.f32 %v737, %v784
      %v794 = vsub.f32 %v738, %v789
      %v795 = vmul.f32 %v791, 1.442695
      %v796 = vpow.pop %v795
      %v797 = vmul.f32 %v792, 1.442695
      %v798 = vpow.pop %v797
      %v799 = vmul.f32 %v793, 1.442695
      %v800 = vpow.pop %v799
      %v801 = vmul.f32 %v794, 1.442695
      %v802 = vpow.pop %v801
      %v803 = vld [vmem:[#allocation3] sm:$0xff]
      %v804 = vld [vmem:[#allocation3 + $0x8] sm:$0xff]
      %v805 = vld [vmem:[#allocation3 + $0x10] sm:$0xff]
      %v806 = vld [vmem:[#allocation3 + $0x18] sm:$0xff]
      %v807 = vmul.f32 %v764, %v803
      %v808 = vmul.f32 %v766, %v804
      %v809 = vmul.f32 %v768, %v805
      %v810 = vmul.f32 %v770, %v806
      %v811 = vsel %vm408, %v796, 0.0
      %812 = vadd.xlane.f32.xlu0 %v811
      %v813 = vpop.xlane.xlu0 %812
      %v814 = vsel %vm408, %v798, 0.0
      %815 = vadd.xlane.f32.xlu0 %v814
      %v816 = vpop.xlane.xlu0 %815
      %v817 = vsel %vm408, %v800, 0.0
      %818 = vadd.xlane.f32.xlu0 %v817
      %v819 = vpop.xlane.xlu0 %818
      %v820 = vsel %vm408, %v802, 0.0
      %821 = vadd.xlane.f32.xlu0 %v820
      %v822 = vpop.xlane.xlu0 %821
      %v823 = vadd.f32 %v807, %v813
      %v824 = vadd.f32 %v808, %v816
      %v825 = vadd.f32 %v809, %v819
      %v826 = vadd.f32 %v810, %v822
      %vm827 = vcmask 7168
      %828 = vst.msk [vmem:[#allocation3] sm:$0xff] %vm827, %v823
      %829 = vst.msk [vmem:[#allocation3 + $0x8] sm:$0xff] %vm827, %v824
      %830 = vst.msk [vmem:[#allocation3 + $0x10] sm:$0xff] %vm827, %v825
      %831 = vst.msk [vmem:[#allocation3 + $0x18] sm:$0xff] %vm827, %v826
      %v832 = vld [vmem:[#allocation4] sm:$0xff]
      %v833 = vld [vmem:[#allocation4 + $0x8] sm:$0xff]
      %v834 = vld [vmem:[#allocation4 + $0x10] sm:$0xff]
      %v835 = vld [vmem:[#allocation4 + $0x18] sm:$0xff]
      %837 = vset.pattern.permute.xlu0 0
      %838 = vperm.xlu0 %837, %v764
      %v839 = vpop.permute.xlu0 %838
      %842 = vset.pattern.permute.xlu0 0
      %843 = vperm.xlu0 %842, %v766
      %v844 = vpop.permute.xlu0 %843
      %847 = vset.pattern.permute.xlu0 0
      %848 = vperm.xlu0 %847, %v768
      %v849 = vpop.permute.xlu0 %848
      %852 = vset.pattern.permute.xlu0 0
      %853 = vperm.xlu0 %852, %v770
      %v854 = vpop.permute.xlu0 %853
      %v856 = vmul.f32 %v839, %v832
      %v857 = vmul.f32 %v844, %v833
      %v858 = vmul.f32 %v849, %v834
      %v859 = vmul.f32 %v854, %v835
      %v861 = vsel %vm408, %v796, 0
      %863 = vmatprep.subr.mxu0 0.0
      %864 = vmatpush1.msra.mxu0 %v404
      %865 = vmatprep.subr.mxu0 0.0
      %866 = vmatpush1.msra.mxu0 0.0
      %867 = vmatprep.subr.mxu0 0.0
      %868 = vmatpush1.msra.mxu0 0.0
      %869 = vmatprep.subr.mxu0 0.0
      %870 = vmatpush1.msra.mxu0 0.0
      %871 = vmatprep.subr.mxu0 0.0
      %872 = vmatpush1.msra.mxu0 0.0
      %873 = vmatprep.subr.mxu0 0.0
      %874 = vmatpush1.msra.mxu0 0.0
      %875 = vmatprep.subr.mxu0 0.0
      %876 = vmatpush1.msra.mxu0 0.0
      %877 = vmatprep.subr.mxu0 0.0
      %878 = vmatpush1.msra.mxu0 0.0
      %879 = vmatprep.subr.mxu0 0.0
      %880 = vmatpush1.msra.mxu0 0.0
      %881 = vmatprep.subr.mxu0 0.0
      %882 = vmatpush1.msra.mxu0 0.0
      %883 = vmatprep.subr.mxu0 0.0
      %884 = vmatpush1.msra.mxu0 0.0
      %885 = vmatprep.subr.mxu0 0.0
      %886 = vmatpush1.msra.mxu0 0.0
      %887 = vmatprep.subr.mxu0 0.0
      %888 = vmatpush1.msra.mxu0 0.0
      %889 = vmatprep.subr.mxu0 0.0
      %890 = vmatpush1.msra.mxu0 0.0
      %891 = vmatprep.subr.mxu0 0.0
      %892 = vmatpush1.msra.mxu0 0.0
      %893 = vmatprep.subr.mxu0 0.0
      %894 = vmatpush1.msra.mxu0 0.0
      %895 = vmatprep.subr.mxu0 0.0
      %896 = vmatpush1.msra.mxu0 0.0
      %897 = vmatprep.subr.mxu0 0.0
      %898 = vmatpush1.msra.mxu0 0.0
      %899 = vmatprep.subr.mxu0 0.0
      %900 = vmatpush1.msra.mxu0 0.0
      %901 = vmatprep.subr.mxu0 0.0
      %902 = vmatpush1.msra.mxu0 0.0
      %903 = vmatprep.subr.mxu0 0.0
      %904 = vmatpush1.msra.mxu0 0.0
      %905 = vmatprep.subr.mxu0 0.0
      %906 = vmatpush1.msra.mxu0 0.0
      %907 = vmatprep.subr.mxu0 0.0
      %908 = vmatpush1.msra.mxu0 0.0
      %909 = vmatprep.subr.mxu0 0.0
      %910 = vmatpush1.msra.mxu0 0.0
      %911 = vmatprep.subr.mxu0 0.0
      %912 = vmatpush1.msra.mxu0 0.0
      %913 = vmatprep.subr.mxu0 0.0
      %914 = vmatpush1.msra.mxu0 0.0
      %915 = vmatprep.subr.mxu0 0.0
      %916 = vmatpush1.msra.mxu0 0.0
      %917 = vmatprep.subr.mxu0 0.0
      %918 = vmatpush1.msra.mxu0 0.0
      %919 = vmatprep.subr.mxu0 0.0
      %920 = vmatpush1.msra.mxu0 0.0
      %921 = vmatprep.subr.mxu0 0.0
      %922 = vmatpush1.msra.mxu0 0.0
      %923 = vmatprep.subr.mxu0 0.0
      %924 = vmatpush1.msra.mxu0 0.0
      %925 = vmatprep.subr.mxu0 0.0
      %926 = vmatpush1.msra.mxu0 0.0
      %927 = vmatprep.mubr.f32.mxu0 0.0
      %928 = vmatmul.mubr.f32.gmra.mrb[0].mxu0 %v861
      %v929 = vpop.f32.mrb[0].mxu0
      %v930 = vadd.f32 0.0, %v929
      %v931 = vpop.f32.mrb[0].mxu0
      %932 = vdwg.mxu0
      %v934 = vsel %vm408, %v798, 0
      %936 = vmatprep.subr.mxu0 0.0
      %937 = vmatpush1.msra.mxu0 %v405
      %938 = vmatprep.subr.mxu0 0.0
      %939 = vmatpush1.msra.mxu0 0.0
      %940 = vmatprep.subr.mxu0 0.0
      %941 = vmatpush1.msra.mxu0 0.0
      %942 = vmatprep.subr.mxu0 0.0
      %943 = vmatpush1.msra.mxu0 0.0
      %944 = vmatprep.subr.mxu0 0.0
      %945 = vmatpush1.msra.mxu0 0.0
      %946 = vmatprep.subr.mxu0 0.0
      %947 = vmatpush1.msra.mxu0 0.0
      %948 = vmatprep.subr.mxu0 0.0
      %949 = vmatpush1.msra.mxu0 0.0
      %950 = vmatprep.subr.mxu0 0.0
      %951 = vmatpush1.msra.mxu0 0.0
      %952 = vmatprep.subr.mxu0 0.0
      %953 = vmatpush1.msra.mxu0 0.0
      %954 = vmatprep.subr.mxu0 0.0
      %955 = vmatpush1.msra.mxu0 0.0
      %956 = vmatprep.subr.mxu0 0.0
      %957 = vmatpush1.msra.mxu0 0.0
      %958 = vmatprep.subr.mxu0 0.0
      %959 = vmatpush1.msra.mxu0 0.0
      %960 = vmatprep.subr.mxu0 0.0
      %961 = vmatpush1.msra.mxu0 0.0
      %962 = vmatprep.subr.mxu0 0.0
      %963 = vmatpush1.msra.mxu0 0.0
      %964 = vmatprep.subr.mxu0 0.0
      %965 = vmatpush1.msra.mxu0 0.0
      %966 = vmatprep.subr.mxu0 0.0
      %967 = vmatpush1.msra.mxu0 0.0
      %968 = vmatprep.subr.mxu0 0.0
      %969 = vmatpush1.msra.mxu0 0.0
      %970 = vmatprep.subr.mxu0 0.0
      %971 = vmatpush1.msra.mxu0 0.0
      %972 = vmatprep.subr.mxu0 0.0
      %973 = vmatpush1.msra.mxu0 0.0
      %974 = vmatprep.subr.mxu0 0.0
      %975 = vmatpush1.msra.mxu0 0.0
      %976 = vmatprep.subr.mxu0 0.0
      %977 = vmatpush1.msra.mxu0 0.0
      %978 = vmatprep.subr.mxu0 0.0
      %979 = vmatpush1.msra.mxu0 0.0
      %980 = vmatprep.subr.mxu0 0.0
      %981 = vmatpush1.msra.mxu0 0.0
      %982 = vmatprep.subr.mxu0 0.0
      %983 = vmatpush1.msra.mxu0 0.0
      %984 = vmatprep.subr.mxu0 0.0
      %985 = vmatpush1.msra.mxu0 0.0
      %986 = vmatprep.subr.mxu0 0.0
      %987 = vmatpush1.msra.mxu0 0.0
      %988 = vmatprep.subr.mxu0 0.0
      %989 = vmatpush1.msra.mxu0 0.0
      %990 = vmatprep.subr.mxu0 0.0
      %991 = vmatpush1.msra.mxu0 0.0
      %992 = vmatprep.subr.mxu0 0.0
      %993 = vmatpush1.msra.mxu0 0.0
      %994 = vmatprep.subr.mxu0 0.0
      %995 = vmatpush1.msra.mxu0 0.0
      %996 = vmatprep.subr.mxu0 0.0
      %997 = vmatpush1.msra.mxu0 0.0
      %998 = vmatprep.subr.mxu0 0.0
      %999 = vmatpush1.msra.mxu0 0.0
      %1000 = vmatprep.mubr.f32.mxu0 0.0
      %1001 = vmatmul.mubr.f32.gmra.mrb[0].mxu0 %v934
      %v1002 = vpop.f32.mrb[0].mxu0
      %v1003 = vadd.f32 0.0, %v1002
      %v1004 = vpop.f32.mrb[0].mxu0
      %1005 = vdwg.mxu0
      %v1007 = vsel %vm408, %v800, 0
      %1009 = vmatprep.subr.mxu0 0.0
      %1010 = vmatpush1.msra.mxu0 %v406
      %1011 = vmatprep.subr.mxu0 0.0
      %1012 = vmatpush1.msra.mxu0 0.0
      %1013 = vmatprep.subr.mxu0 0.0
      %1014 = vmatpush1.msra.mxu0 0.0
      %1015 = vmatprep.subr.mxu0 0.0
      %1016 = vmatpush1.msra.mxu0 0.0
      %1017 = vmatprep.subr.mxu0 0.0
      %1018 = vmatpush1.msra.mxu0 0.0
      %1019 = vmatprep.subr.mxu0 0.0
      %1020 = vmatpush1.msra.mxu0 0.0
      %1021 = vmatprep.subr.mxu0 0.0
      %1022 = vmatpush1.msra.mxu0 0.0
      %1023 = vmatprep.subr.mxu0 0.0
      %1024 = vmatpush1.msra.mxu0 0.0
      %1025 = vmatprep.subr.mxu0 0.0
      %1026 = vmatpush1.msra.mxu0 0.0
      %1027 = vmatprep.subr.mxu0 0.0
      %1028 = vmatpush1.msra.mxu0 0.0
      %1029 = vmatprep.subr.mxu0 0.0
      %1030 = vmatpush1.msra.mxu0 0.0
      %1031 = vmatprep.subr.mxu0 0.0
      %1032 = vmatpush1.msra.mxu0 0.0
      %1033 = vmatprep.subr.mxu0 0.0
      %1034 = vmatpush1.msra.mxu0 0.0
      %1035 = vmatprep.subr.mxu0 0.0
      %1036 = vmatpush1.msra.mxu0 0.0
      %1037 = vmatprep.subr.mxu0 0.0
      %1038 = vmatpush1.msra.mxu0 0.0
      %1039 = vmatprep.subr.mxu0 0.0
      %1040 = vmatpush1.msra.mxu0 0.0
      %1041 = vmatprep.subr.mxu0 0.0
      %1042 = vmatpush1.msra.mxu0 0.0
      %1043 = vmatprep.subr.mxu0 0.0
      %1044 = vmatpush1.msra.mxu0 0.0
      %1045 = vmatprep.subr.mxu0 0.0
      %1046 = vmatpush1.msra.mxu0 0.0
      %1047 = vmatprep.subr.mxu0 0.0
      %1048 = vmatpush1.msra.mxu0 0.0
      %1049 = vmatprep.subr.mxu0 0.0
      %1050 = vmatpush1.msra.mxu0 0.0
      %1051 = vmatprep.subr.mxu0 0.0
      %1052 = vmatpush1.msra.mxu0 0.0
      %1053 = vmatprep.subr.mxu0 0.0
      %1054 = vmatpush1.msra.mxu0 0.0
      %1055 = vmatprep.subr.mxu0 0.0
      %1056 = vmatpush1.msra.mxu0 0.0
      %1057 = vmatprep.subr.mxu0 0.0
      %1058 = vmatpush1.msra.mxu0 0.0
      %1059 = vmatprep.subr.mxu0 0.0
      %1060 = vmatpush1.msra.mxu0 0.0
      %1061 = vmatprep.subr.mxu0 0.0
      %1062 = vmatpush1.msra.mxu0 0.0
      %1063 = vmatprep.subr.mxu0 0.0
      %1064 = vmatpush1.msra.mxu0 0.0
      %1065 = vmatprep.subr.mxu0 0.0
      %1066 = vmatpush1.msra.mxu0 0.0
      %1067 = vmatprep.subr.mxu0 0.0
      %1068 = vmatpush1.msra.mxu0 0.0
      %1069 = vmatprep.subr.mxu0 0.0
      %1070 = vmatpush1.msra.mxu0 0.0
      %1071 = vmatprep.subr.mxu0 0.0
      %1072 = vmatpush1.msra.mxu0 0.0
      %1073 = vmatprep.mubr.f32.mxu0 0.0
      %1074 = vmatmul.mubr.f32.gmra.mrb[0].mxu0 %v1007
      %v1075 = vpop.f32.mrb[0].mxu0
      %v1076 = vadd.f32 0.0, %v1075
      %v1077 = vpop.f32.mrb[0].mxu0
      %1078 = vdwg.mxu0
      %v1080 = vsel %vm408, %v802, 0
      %1082 = vmatprep.subr.mxu0 0.0
      %1083 = vmatpush1.msra.mxu0 %v407
      %1084 = vmatprep.subr.mxu0 0.0
      %1085 = vmatpush1.msra.mxu0 0.0
      %1086 = vmatprep.subr.mxu0 0.0
      %1087 = vmatpush1.msra.mxu0 0.0
      %1088 = vmatprep.subr.mxu0 0.0
      %1089 = vmatpush1.msra.mxu0 0.0
      %1090 = vmatprep.subr.mxu0 0.0
      %1091 = vmatpush1.msra.mxu0 0.0
      %1092 = vmatprep.subr.mxu0 0.0
      %1093 = vmatpush1.msra.mxu0 0.0
      %1094 = vmatprep.subr.mxu0 0.0
      %1095 = vmatpush1.msra.mxu0 0.0
      %1096 = vmatprep.subr.mxu0 0.0
      %1097 = vmatpush1.msra.mxu0 0.0
      %1098 = vmatprep.subr.mxu0 0.0
      %1099 = vmatpush1.msra.mxu0 0.0
      %1100 = vmatprep.subr.mxu0 0.0
      %1101 = vmatpush1.msra.mxu0 0.0
      %1102 = vmatprep.subr.mxu0 0.0
      %1103 = vmatpush1.msra.mxu0 0.0
      %1104 = vmatprep.subr.mxu0 0.0
      %1105 = vmatpush1.msra.mxu0 0.0
      %1106 = vmatprep.subr.mxu0 0.0
      %1107 = vmatpush1.msra.mxu0 0.0
      %1108 = vmatprep.subr.mxu0 0.0
      %1109 = vmatpush1.msra.mxu0 0.0
      %1110 = vmatprep.subr.mxu0 0.0
      %1111 = vmatpush1.msra.mxu0 0.0
      %1112 = vmatprep.subr.mxu0 0.0
      %1113 = vmatpush1.msra.mxu0 0.0
      %1114 = vmatprep.subr.mxu0 0.0
      %1115 = vmatpush1.msra.mxu0 0.0
      %1116 = vmatprep.subr.mxu0 0.0
      %1117 = vmatpush1.msra.mxu0 0.0
      %1118 = vmatprep.subr.mxu0 0.0
      %1119 = vmatpush1.msra.mxu0 0.0
      %1120 = vmatprep.subr.mxu0 0.0
      %1121 = vmatpush1.msra.mxu0 0.0
      %1122 = vmatprep.subr.mxu0 0.0
      %1123 = vmatpush1.msra.mxu0 0.0
      %1124 = vmatprep.subr.mxu0 0.0
      %1125 = vmatpush1.msra.mxu0 0.0
      %1126 = vmatprep.subr.mxu0 0.0
      %1127 = vmatpush1.msra.mxu0 0.0
      %1128 = vmatprep.subr.mxu0 0.0
      %1129 = vmatpush1.msra.mxu0 0.0
      %1130 = vmatprep.subr.mxu0 0.0
      %1131 = vmatpush1.msra.mxu0 0.0
      %1132 = vmatprep.subr.mxu0 0.0
      %1133 = vmatpush1.msra.mxu0 0.0
      %1134 = vmatprep.subr.mxu0 0.0
      %1135 = vmatpush1.msra.mxu0 0.0
      %1136 = vmatprep.subr.mxu0 0.0
      %1137 = vmatpush1.msra.mxu0 0.0
      %1138 = vmatprep.subr.mxu0 0.0
      %1139 = vmatpush1.msra.mxu0 0.0
      %1140 = vmatprep.subr.mxu0 0.0
      %1141 = vmatpush1.msra.mxu0 0.0
      %1142 = vmatprep.subr.mxu0 0.0
      %1143 = vmatpush1.msra.mxu0 0.0
      %1144 = vmatprep.subr.mxu0 0.0
      %1145 = vmatpush1.msra.mxu0 0.0
      %1146 = vmatprep.mubr.f32.mxu0 0.0
      %1147 = vmatmul.mubr.f32.gmra.mrb[0].mxu0 %v1080
      %v1148 = vpop.f32.mrb[0].mxu0
      %v1149 = vadd.f32 0.0, %v1148
      %v1150 = vpop.f32.mrb[0].mxu0
      %1151 = vdwg.mxu0
      %v1152 = vadd.f32 %v856, %v930
      %v1153 = vadd.f32 %v857, %v1003
      %v1154 = vadd.f32 %v858, %v1076
      %v1155 = vadd.f32 %v859, %v1149
      %1156 = vst.msk [vmem:[#allocation4] sm:$0xff] %vm408, %v1152
      %1157 = vst.msk [vmem:[#allocation4 + $0x8] sm:$0xff] %vm408, %v1153
      %1158 = vst.msk [vmem:[#allocation4 + $0x10] sm:$0xff] %vm408, %v1154
      %1159 = vst.msk [vmem:[#allocation4 + $0x18] sm:$0xff] %vm408, %v1155
      %1160 = vst.msk [vmem:[#allocation2] sm:$0xff] %vm827, %v755
      %1161 = vst.msk [vmem:[#allocation2 + $0x8] sm:$0xff] %vm827, %v756
      %1162 = vst.msk [vmem:[#allocation2 + $0x10] sm:$0xff] %vm827, %v757
      %1163 = vst.msk [vmem:[#allocation2 + $0x18] sm:$0xff] %vm827, %v758
      // Predicated region
      $region45: #{transformer_forward.40} parent=39 // pred_check
        %p1164 = pneg %p378
      $region46: #{transformer_forward.40} parent=39 // pred_check_branch
        %1166 = sbr.rel (%p1164) target = $region48
      $region47: #{transformer_forward.40} parent=39 // pred_region
        %v1167 = vld [vmem:[#allocation3] sm:$0xff]
        %v1168 = vld [vmem:[#allocation3 + $0x8] sm:$0xff]
        %v1169 = vld [vmem:[#allocation3 + $0x10] sm:$0xff]
        %v1170 = vld [vmem:[#allocation3 + $0x18] sm:$0xff]
        %v1171 = vrcp.pop %v1167
        %v1172 = vrcp.pop %v1168
        %v1173 = vrcp.pop %v1169
        %v1174 = vrcp.pop %v1170
        %v1175 = vld [vmem:[#allocation4] sm:$0xff]
        %v1176 = vld [vmem:[#allocation4 + $0x8] sm:$0xff]
        %v1177 = vld [vmem:[#allocation4 + $0x10] sm:$0xff]
        %v1178 = vld [vmem:[#allocation4 + $0x18] sm:$0xff]
        %1180 = vset.pattern.permute.xlu0 0
        %1181 = vperm.xlu0 %1180, %v1171
        %v1182 = vpop.permute.xlu0 %1181
        %1185 = vset.pattern.permute.xlu0 0
        %1186 = vperm.xlu0 %1185, %v1172
        %v1187 = vpop.permute.xlu0 %1186
        %1190 = vset.pattern.permute.xlu0 0
        %1191 = vperm.xlu0 %1190, %v1173
        %v1192 = vpop.permute.xlu0 %1191
        %1195 = vset.pattern.permute.xlu0 0
        %1196 = vperm.xlu0 %1195, %v1174
        %v1197 = vpop.permute.xlu0 %1196
        %v1199 = vmul.f32 %v1175, %v1182
        %v1200 = vmul.f32 %v1176, %v1187
        %v1201 = vmul.f32 %v1177, %v1192
        %v1202 = vmul.f32 %v1178, %v1197
        %1203 = vst.msk [vmem:[%s377] sm:$0xff] %vm408, %v1199
        %1204 = vst.msk [vmem:[%s377 + $0x8] sm:$0xff] %vm408, %v1200
        %1205 = vst.msk [vmem:[%s377 + $0x10] sm:$0xff] %vm408, %v1201
        %1206 = vst.msk [vmem:[%s377 + $0x18] sm:$0xff] %vm408, %v1202
      $region48: #{transformer_forward.40} parent=39 // pred_fallthru
        _
      %p1207 = scmp.lt.s32.totalorder %s21, 1
      %s1208 = scalar_select %p1207, %s21, 1
      %p1209 = scmp.lt.s32.totalorder %s22, 0
      %s1210 = scalar_select %p1209, %s22, 0
      %s1211 = smul.addr %s1208, 4
      %s1212 = sadd.s32 %s1210, %s1211
      %s1213 = smul.addr %s1212, 8
      %s1214 = scalar_lea.vmem %s5, %s1213
      // Predicated region
      $region49: #{transformer_forward.40} parent=39 // pred_check
        %p1215 = pneg %p195
      $region50: #{transformer_forward.40} parent=39 // pred_check_branch
        %1217 = sbr.rel (%p1215) target = $region52
      $region51: #{transformer_forward.40} parent=39 // pred_region
        _
      $region52: #{transformer_forward.40} parent=39 // pred_fallthru
        _
    $region40: #{transformer_forward.40} parent=5 // pred_fallthru
      _
    %p1218 = scmp.le.s32.totalorder 2, %s11
    // Predicated region
    $region53: #{transformer_forward.40} parent=5 // pred_check
      %p1219 = pneg %p1218
    $region54: #{transformer_forward.40} parent=5 // pred_check_branch
      %1221 = sbr.rel (%p1219) target = $region56
    $region55: #{transformer_forward.40} parent=5 // pred_region
      %s1222 = ssub.s32 %s11, 2
      // Predicated region
      $region57: #{transformer_forward.40} parent=55 // pred_check
        %p1223 = pneg %p201
      $region58: #{transformer_forward.40} parent=55 // pred_check_branch
        %1225 = sbr.rel (%p1223) target = $region60
      $region59: #{transformer_forward.40} parent=55 // pred_region
        %p1226 = scmp.lt.s32.totalorder %s24, 1
        %s1227 = scalar_select %p1226, %s24, 1
        %p1228 = scmp.lt.s32.totalorder %s25, 0
        %s1229 = scalar_select %p1228, %s25, 0
        %s1230 = smul.addr %s1227, 4
        %s1231 = sadd.s32 %s1229, %s1230
        %s1232 = smul.addr %s1231, 8
        %s1233 = scalar_lea.vmem %s5, %s1232
      $region60: #{transformer_forward.40} parent=55 // pred_fallthru
        _
    $region56: #{transformer_forward.40} parent=5 // pred_fallthru
      _
  $region6: #{transformer_forward.40} parent=0 // loop_footer
    %s15 = sadd.s32 1, %s11
  $region7: #{transformer_forward.40} parent=0 // loop_footer_branch
    %10 = sbr.rel target = $region3
  $region8: #{transformer_forward.40} parent=0 // loop_exit
    _

// kernel: transformer_forward.54
$region0: #{transformer_forward.54}
  #allocation0 [shape = 'u32[]', space=smem, size = 0x4, offset = 0x4, fixed_abs, tag = 'smem constant byte address 0x4 - core index']
  #allocation1 [shape = 'u32[144,128]{1,0:T(1,128)}', space=vmem, size = 0x12000, scoped, tag = 'internal scratch']
  #allocation2 [shape = 'f32[4,8,1]{2,1,0:T(8,128)}', space=vmem, size = 0x4000, scoped, tag = 'scratch operand']
  #allocation3 [shape = 'f32[4,8,1]{2,1,0:T(8,128)}', space=vmem, size = 0x4000, scoped, tag = 'scratch operand']
  #allocation4 [shape = 'f32[4,8,8]{2,1,0:T(8,128)}', space=vmem, size = 0x4000, scoped, tag = 'scratch operand']
  %s0 = inlined_call_operand.vmem [shape: f32[2,8,1], index: 0, kind: input, shape index: {}]
  %s1 = inlined_call_operand.vmem [shape: f32[2,1,8], index: 1, kind: input, shape index: {}]
  %s2 = inlined_call_operand.vmem [shape: f32[2,4,8,8], index: 2, kind: input, shape index: {}]
  %s3 = inlined_call_operand.vmem [shape: f32[2,4,8,8], index: 3, kind: input, shape index: {}]
  %s4 = inlined_call_operand.vmem [shape: f32[2,4,8,8], index: 4, kind: input, shape index: {}]
  %s5 = inlined_call_operand.vmem [shape: f32[2,4,8,8], index: 5, kind: output, shape index: {}]
  %s6 = sld [smem:[#allocation0]]
  $region61: #{transformer_forward.54} parent=0
    _
  %s8 = ssub.s32 1, %s6
  %s9 = scalar_select 0, %s8, %s6
  loop: start=0, step=1, limit=4
  $region2: #{transformer_forward.54} parent=0 // loop_pre_header
    _
  $region3: #{transformer_forward.54} parent=0 // loop_header
    %s11 = sphi 0, %s15
    %p12 = scmp.ge.s32.totalorder %s11, 4
    %s18 = sphi 0, %s37
    %s19 = sphi 0, %s33
    %s20 = sphi 0, %s29
    %s21 = sphi 0, %s18
    %s22 = sphi 0, %s19
    %s23 = sphi 0, %s20
    %s24 = sphi 0, %s21
    %s25 = sphi 0, %s22
    %s26 = sphi 0, %s23
    %s42 = sphi 0, %s44
    %s45 = sphi 0, %s42
    %s46 = sphi 0, %s45
    %s62 = sphi 0, %s46
    %s70 = sphi 0, %s72
    %s73 = sphi 0, %s70
    %s74 = sphi 0, %s73
    %s90 = sphi 0, %s74
    %s98 = sphi 0, %s100
    %s101 = sphi 0, %s98
    %s102 = sphi 0, %s101
    %s118 = sphi 0, %s102
    %s126 = sphi 0, %s128
    %s129 = sphi 0, %s126
    %s130 = sphi 0, %s129
    %s146 = sphi 0, %s130
    %s154 = sphi 0, %s156
    %s157 = sphi 0, %s154
    %s158 = sphi 0, %s157
    %s174 = sphi 0, %s158
    %s182 = sphi 0, %s184
    %s185 = sphi 0, %s182
    %s186 = sphi 0, %s185
    %s202 = sphi 0, %s186
  $region4: #{transformer_forward.54} parent=0 // loop_header_branch
    %14 = sbr.rel (%p12) target = $region8
  $region5: #{transformer_forward.54} parent=0 // loop_body
    %s16 = ssub.s32 %s11, 1
    %s17 = ssub.s32 %s11, 2
    %s27 = sadd.s32 1, %s20
    %p28 = scmp.ge.s32.totalorder %s27, 1
    %s29 = scalar_select %p28, 0, %s27
    %s30 = sadd.s32 1, %s19
    %s31 = scalar_select %p28, %s30, %s19
    %p32 = scmp.ge.s32.totalorder %s31, 1
    %s33 = scalar_select %p32, 0, %s31
    %s34 = sadd.s32 1, %s18
    %s35 = scalar_select %p32, %s34, %s18
    %p36 = scmp.ge.s32.totalorder %s35, 2
    %s37 = scalar_select %p36, 0, %s35
    %s38 = ssub.s32 %s18, %s37
    %s39 = ssub.s32 %s19, %s33
    %s40 = sor.u32 %s38, %s39
    %p41 = scmp.eq.s32.totalorder %s40, 0
    %s43 = sadd.s32 %s42, 1
    %s44 = scalar_select %p41, %s42, %s43
    %p47 = pneg %p41
    %p48 = scmp.eq.s32.totalorder %s11, 1
    %p49 = por %p47, %p48
    %p50 = scmp.ne.s32.totalorder %s42, %s45
    %p51 = scmp.eq.s32.totalorder %s11, 0
    %p52 = por %p50, %p51
    %p53 = scmp.ne.s32.totalorder %s42, %s45
    %p54 = scmp.eq.s32.totalorder %s16, 1
    %p55 = por %p53, %p54
    %p56 = scmp.ne.s32.totalorder %s45, %s46
    %p57 = scmp.eq.s32.totalorder %s16, 0
    %p58 = por %p56, %p57
    %p59 = scmp.ne.s32.totalorder %s45, %s46
    %p60 = scmp.eq.s32.totalorder %s17, 1
    %p61 = por %p59, %p60
    %p63 = scmp.ne.s32.totalorder %s46, %s62
    %p64 = scmp.eq.s32.totalorder %s17, 0
    %p65 = por %p63, %p64
    %s66 = ssub.s32 %s18, %s37
    %s67 = ssub.s32 %s20, %s29
    %s68 = sor.u32 %s66, %s67
    %p69 = scmp.eq.s32.totalorder %s68, 0
    %s71 = sadd.s32 %s70, 1
    %s72 = scalar_select %p69, %s70, %s71
    %p75 = pneg %p69
    %p76 = scmp.eq.s32.totalorder %s11, 1
    %p77 = por %p75, %p76
    %p78 = scmp.ne.s32.totalorder %s70, %s73
    %p79 = scmp.eq.s32.totalorder %s11, 0
    %p80 = por %p78, %p79
    %p81 = scmp.ne.s32.totalorder %s70, %s73
    %p82 = scmp.eq.s32.totalorder %s16, 1
    %p83 = por %p81, %p82
    %p84 = scmp.ne.s32.totalorder %s73, %s74
    %p85 = scmp.eq.s32.totalorder %s16, 0
    %p86 = por %p84, %p85
    %p87 = scmp.ne.s32.totalorder %s73, %s74
    %p88 = scmp.eq.s32.totalorder %s17, 1
    %p89 = por %p87, %p88
    %p91 = scmp.ne.s32.totalorder %s74, %s90
    %p92 = scmp.eq.s32.totalorder %s17, 0
    %p93 = por %p91, %p92
    %s94 = ssub.s32 %s18, %s37
    %s95 = ssub.s32 %s19, %s33
    %s96 = sor.u32 %s94, %s95
    %p97 = scmp.eq.s32.totalorder %s96, 0
    %s99 = sadd.s32 %s98, 1
    %s100 = scalar_select %p97, %s98, %s99
    %p103 = pneg %p97
    %p104 = scmp.eq.s32.totalorder %s11, 1
    %p105 = por %p103, %p104
    %p106 = scmp.ne.s32.totalorder %s98, %s101
    %p107 = scmp.eq.s32.totalorder %s11, 0
    %p108 = por %p106, %p107
    %p109 = scmp.ne.s32.totalorder %s98, %s101
    %p110 = scmp.eq.s32.totalorder %s16, 1
    %p111 = por %p109, %p110
    %p112 = scmp.ne.s32.totalorder %s101, %s102
    %p113 = scmp.eq.s32.totalorder %s16, 0
    %p114 = por %p112, %p113
    %p115 = scmp.ne.s32.totalorder %s101, %s102
    %p116 = scmp.eq.s32.totalorder %s17, 1
    %p117 = por %p115, %p116
    %p119 = scmp.ne.s32.totalorder %s102, %s118
    %p120 = scmp.eq.s32.totalorder %s17, 0
    %p121 = por %p119, %p120
    %s122 = ssub.s32 %s18, %s37
    %s123 = ssub.s32 %s20, %s29
    %s124 = sor.u32 %s122, %s123
    %p125 = scmp.eq.s32.totalorder %s124, 0
    %s127 = sadd.s32 %s126, 1
    %s128 = scalar_select %p125, %s126, %s127
    %p131 = pneg %p125
    %p132 = scmp.eq.s32.totalorder %s11, 1
    %p133 = por %p131, %p132
    %p134 = scmp.ne.s32.totalorder %s126, %s129
    %p135 = scmp.eq.s32.totalorder %s11, 0
    %p136 = por %p134, %p135
    %p137 = scmp.ne.s32.totalorder %s126, %s129
    %p138 = scmp.eq.s32.totalorder %s16, 1
    %p139 = por %p137, %p138
    %p140 = scmp.ne.s32.totalorder %s129, %s130
    %p141 = scmp.eq.s32.totalorder %s16, 0
    %p142 = por %p140, %p141
    %p143 = scmp.ne.s32.totalorder %s129, %s130
    %p144 = scmp.eq.s32.totalorder %s17, 1
    %p145 = por %p143, %p144
    %p147 = scmp.ne.s32.totalorder %s130, %s146
    %p148 = scmp.eq.s32.totalorder %s17, 0
    %p149 = por %p147, %p148
    %s150 = ssub.s32 %s18, %s37
    %s151 = ssub.s32 %s20, %s29
    %s152 = sor.u32 %s150, %s151
    %p153 = scmp.eq.s32.totalorder %s152, 0
    %s155 = sadd.s32 %s154, 1
    %s156 = scalar_select %p153, %s154, %s155
    %p159 = pneg %p153
    %p160 = scmp.eq.s32.totalorder %s11, 1
    %p161 = por %p159, %p160
    %p162 = scmp.ne.s32.totalorder %s154, %s157
    %p163 = scmp.eq.s32.totalorder %s11, 0
    %p164 = por %p162, %p163
    %p165 = scmp.ne.s32.totalorder %s154, %s157
    %p166 = scmp.eq.s32.totalorder %s16, 1
    %p167 = por %p165, %p166
    %p168 = scmp.ne.s32.totalorder %s157, %s158
    %p169 = scmp.eq.s32.totalorder %s16, 0
    %p170 = por %p168, %p169
    %p171 = scmp.ne.s32.totalorder %s157, %s158
    %p172 = scmp.eq.s32.totalorder %s17, 1
    %p173 = por %p171, %p172
    %p175 = scmp.ne.s32.totalorder %s158, %s174
    %p176 = scmp.eq.s32.totalorder %s17, 0
    %p177 = por %p175, %p176
    %s178 = ssub.s32 %s18, %s37
    %s179 = ssub.s32 %s19, %s33
    %s180 = sor.u32 %s178, %s179
    %p181 = scmp.eq.s32.totalorder %s180, 0
    %s183 = sadd.s32 %s182, 1
    %s184 = scalar_select %p181, %s182, %s183
    %p187 = pneg %p181
    %p188 = scmp.eq.s32.totalorder %s11, 1
    %p189 = por %p187, %p188
    %p190 = scmp.ne.s32.totalorder %s182, %s185
    %p191 = scmp.eq.s32.totalorder %s11, 0
    %p192 = por %p190, %p191
    %p193 = scmp.ne.s32.totalorder %s182, %s185
    %p194 = scmp.eq.s32.totalorder %s16, 1
    %p195 = por %p193, %p194
    %p196 = scmp.ne.s32.totalorder %s185, %s186
    %p197 = scmp.eq.s32.totalorder %s16, 0
    %p198 = por %p196, %p197
    %p199 = scmp.ne.s32.totalorder %s185, %s186
    %p200 = scmp.eq.s32.totalorder %s17, 1
    %p201 = por %p199, %p200
    %p203 = scmp.ne.s32.totalorder %s186, %s202
    %p204 = scmp.eq.s32.totalorder %s17, 0
    %p205 = por %p203, %p204
    %p206 = scmp.le.s32.totalorder 1, %s11
    %p207 = scmp.lt.s32.totalorder %s11, 3
    %p208 = pnand %p206, %p207
    %p209 = pneg %p208
    // Predicated region
    $region9: #{transformer_forward.54} parent=5 // pred_check
      _
    $region10: #{transformer_forward.54} parent=5 // pred_check_branch
      %211 = sbr.rel (%p208) target = $region12
    $region11: #{transformer_forward.54} parent=5 // pred_region
      %s212 = ssub.s32 %s11, 1
    $region12: #{transformer_forward.54} parent=5 // pred_fallthru
      _
    %p213 = scmp.lt.s32.totalorder %s11, 2
    // Predicated region
    $region13: #{transformer_forward.54} parent=5 // pred_check
      %p214 = pneg %p213
    $region14: #{transformer_forward.54} parent=5 // pred_check_branch
      %216 = sbr.rel (%p214) target = $region16
    $region15: #{transformer_forward.54} parent=5 // pred_region
      // Predicated region
      $region17: #{transformer_forward.54} parent=15 // pred_check
        %p217 = pneg %p52
      $region18: #{transformer_forward.54} parent=15 // pred_check_branch
        %219 = sbr.rel (%p217) target = $region20
      $region19: #{transformer_forward.54} parent=15 // pred_region
        %p220 = scmp.lt.s32.totalorder %s18, 1
        %s221 = scalar_select %p220, %s18, 1
        %p222 = scmp.lt.s32.totalorder %s19, 0
        %s223 = scalar_select %p222, %s19, 0
        %s224 = sadd.s32 %s223, %s221
        %s225 = smul.addr %s224, 8
        %s226 = scalar_lea.vmem %s0, %s225
      $region20: #{transformer_forward.54} parent=15 // pred_fallthru
        _
      // Predicated region
      $region21: #{transformer_forward.54} parent=15 // pred_check
        %p227 = pneg %p80
      $region22: #{transformer_forward.54} parent=15 // pred_check_branch
        %229 = sbr.rel (%p227) target = $region24
      $region23: #{transformer_forward.54} parent=15 // pred_region
        %p230 = scmp.lt.s32.totalorder %s18, 1
        %s231 = scalar_select %p230, %s18, 1
        %p232 = scmp.lt.s32.totalorder %s20, 0
        %s233 = scalar_select %p232, %s20, 0
        %s234 = sadd.s32 %s233, %s231
        %s235 = scalar_lea.vmem %s1, %s234
      $region24: #{transformer_forward.54} parent=15 // pred_fallthru
        _
      // Predicated region
      $region25: #{transformer_forward.54} parent=15 // pred_check
        %p236 = pneg %p108
      $region26: #{transformer_forward.54} parent=15 // pred_check_branch
        %238 = sbr.rel (%p236) target = $region28
      $region27: #{transformer_forward.54} parent=15 // pred_region
        %p239 = scmp.lt.s32.totalorder %s18, 1
        %s240 = scalar_select %p239, %s18, 1
        %p241 = scmp.lt.s32.totalorder %s19, 0
        %s242 = scalar_select %p241, %s19, 0
        %s243 = smul.addr %s240, 4
        %s244 = sadd.s32 %s242, %s243
        %s245 = smul.addr %s244, 8
        %s246 = scalar_lea.vmem %s2, %s245
      $region28: #{transformer_forward.54} parent=15 // pred_fallthru
        _
      // Predicated region
      $region29: #{transformer_forward.54} parent=15 // pred_check
        %p247 = pneg %p136
      $region30: #{transformer_forward.54} parent=15 // pred_check_branch
        %249 = sbr.rel (%p247) target = $region32
      $region31: #{transformer_forward.54} parent=15 // pred_region
        %p250 = scmp.lt.s32.totalorder %s18, 1
        %s251 = scalar_select %p250, %s18, 1
        %p252 = scmp.lt.s32.totalorder %s20, 0
        %s253 = scalar_select %p252, %s20, 0
        %s254 = smul.addr %s251, 4
        %s255 = sadd.s32 %s253, %s254
        %s256 = smul.addr %s255, 8
        %s257 = scalar_lea.vmem %s3, %s256
      $region32: #{transformer_forward.54} parent=15 // pred_fallthru
        _
      // Predicated region
      $region33: #{transformer_forward.54} parent=15 // pred_check
        %p258 = pneg %p164
      $region34: #{transformer_forward.54} parent=15 // pred_check_branch
        %260 = sbr.rel (%p258) target = $region36
      $region35: #{transformer_forward.54} parent=15 // pred_region
        %p261 = scmp.lt.s32.totalorder %s18, 1
        %s262 = scalar_select %p261, %s18, 1
        %p263 = scmp.lt.s32.totalorder %s20, 0
        %s264 = scalar_select %p263, %s20, 0
        %s265 = smul.addr %s262, 4
        %s266 = sadd.s32 %s264, %s265
        %s267 = smul.addr %s266, 8
        %s268 = scalar_lea.vmem %s4, %s267
      $region36: #{transformer_forward.54} parent=15 // pred_fallthru
        _
    $region16: #{transformer_forward.54} parent=5 // pred_fallthru
      _
    %p269 = scmp.le.s32.totalorder 1, %s11
    %p270 = scmp.lt.s32.totalorder %s11, 3
    %p271 = pnand %p269, %p270
    %p272 = pneg %p271
    // Predicated region
    $region37: #{transformer_forward.54} parent=5 // pred_check
      _
    $region38: #{transformer_forward.54} parent=5 // pred_check_branch
      %274 = sbr.rel (%p271) target = $region40
    $region39: #{transformer_forward.54} parent=5 // pred_region
      %s275 = ssub.s32 %s11, 1
      %p276 = scmp.lt.s32.totalorder %s21, 1
      %s277 = scalar_select %p276, %s21, 1
      %p278 = scmp.lt.s32.totalorder %s22, 0
      %s279 = scalar_select %p278, %s22, 0
      %s280 = sadd.s32 %s279, %s277
      %s281 = smul.addr %s280, 8
      %s282 = scalar_lea.vmem %s0, %s281
      %p283 = pneg %p58
      %p284 = pneg %p55
      %p285 = scmp.lt.s32.totalorder %s21, 1
      %s286 = scalar_select %p285, %s21, 1
      %p287 = scmp.lt.s32.totalorder %s23, 0
      %s288 = scalar_select %p287, %s23, 0
      %s289 = sadd.s32 %s288, %s286
      %s290 = scalar_lea.vmem %s1, %s289
      %p291 = pneg %p86
      %p292 = pneg %p83
      %p293 = scmp.lt.s32.totalorder %s21, 1
      %s294 = scalar_select %p293, %s21, 1
      %p295 = scmp.lt.s32.totalorder %s22, 0
      %s296 = scalar_select %p295, %s22, 0
      %s297 = smul.addr %s294, 4
      %s298 = sadd.s32 %s296, %s297
      %s299 = smul.addr %s298, 8
      %s300 = scalar_lea.vmem %s2, %s299
      %p301 = pneg %p114
      %p302 = pneg %p111
      %p303 = scmp.lt.s32.totalorder %s21, 1
      %s304 = scalar_select %p303, %s21, 1
      %p305 = scmp.lt.s32.totalorder %s23, 0
      %s306 = scalar_select %p305, %s23, 0
      %s307 = smul.addr %s304, 4
      %s308 = sadd.s32 %s306, %s307
      %s309 = smul.addr %s308, 8
      %s310 = scalar_lea.vmem %s3, %s309
      %p311 = pneg %p142
      %p312 = pneg %p139
      %p313 = scmp.lt.s32.totalorder %s21, 1
      %s314 = scalar_select %p313, %s21, 1
      %p315 = scmp.lt.s32.totalorder %s23, 0
      %s316 = scalar_select %p315, %s23, 0
      %s317 = smul.addr %s314, 4
      %s318 = sadd.s32 %s316, %s317
      %s319 = smul.addr %s318, 8
      %s320 = scalar_lea.vmem %s4, %s319
      %p321 = pneg %p170
      %p322 = pneg %p167
      %p323 = pneg %p198
      %p324 = pneg %p195
      %p325 = scmp.lt.s32.totalorder %s21, 1
      %s326 = scalar_select %p325, %s21, 1
      %p327 = scmp.lt.s32.totalorder %s22, 0
      %s328 = scalar_select %p327, %s22, 0
      %s329 = smul.addr %s326, 4
      %s330 = sadd.s32 %s328, %s329
      %s331 = smul.addr %s330, 8
      %s332 = scalar_lea.vmem %s5, %s331
      %p333 = scmp.lt.s32.totalorder %s21, 1
      %s334 = scalar_select %p333, %s21, 1
      %p335 = scmp.lt.s32.totalorder %s22, 0
      %s336 = scalar_select %p335, %s22, 0
      %s337 = sadd.s32 %s336, %s334
      %s338 = smul.addr %s337, 8
      %s339 = scalar_lea.vmem %s0, %s338
      %p340 = scmp.lt.s32.totalorder %s21, 1
      %s341 = scalar_select %p340, %s21, 1
      %p342 = scmp.lt.s32.totalorder %s23, 0
      %s343 = scalar_select %p342, %s23, 0
      %s344 = sadd.s32 %s343, %s341
      %s345 = scalar_lea.vmem %s1, %s344
      %p346 = scmp.lt.s32.totalorder %s21, 1
      %s347 = scalar_select %p346, %s21, 1
      %p348 = scmp.lt.s32.totalorder %s22, 0
      %s349 = scalar_select %p348, %s22, 0
      %s350 = smul.addr %s347, 4
      %s351 = sadd.s32 %s349, %s350
      %s352 = smul.addr %s351, 8
      %s353 = scalar_lea.vmem %s2, %s352
      %p354 = scmp.lt.s32.totalorder %s21, 1
      %s355 = scalar_select %p354, %s21, 1
      %p356 = scmp.lt.s32.totalorder %s23, 0
      %s357 = scalar_select %p356, %s23, 0
      %s358 = smul.addr %s355, 4
      %s359 = sadd.s32 %s357, %s358
      %s360 = smul.addr %s359, 8
      %s361 = scalar_lea.vmem %s3, %s360
      %p362 = scmp.lt.s32.totalorder %s21, 1
      %s363 = scalar_select %p362, %s21, 1
      %p364 = scmp.lt.s32.totalorder %s23, 0
      %s365 = scalar_select %p364, %s23, 0
      %s366 = smul.addr %s363, 4
      %s367 = sadd.s32 %s365, %s366
      %s368 = smul.addr %s367, 8
      %s369 = scalar_lea.vmem %s4, %s368
      %p370 = scmp.lt.s32.totalorder %s21, 1
      %s371 = scalar_select %p370, %s21, 1
      %p372 = scmp.lt.s32.totalorder %s22, 0
      %s373 = scalar_select %p372, %s22, 0
      %s374 = smul.addr %s371, 4
      %s375 = sadd.s32 %s373, %s374
      %s376 = smul.addr %s375, 8
      %s377 = scalar_lea.vmem %s5, %s376
      %p378 = scmp.eq.s32.totalorder %s23, 0
      // Predicated region
      $region41: #{transformer_forward.54} parent=39 // pred_check
        %p379 = pneg %p378
      $region42: #{transformer_forward.54} parent=39 // pred_check_branch
        %381 = sbr.rel (%p379) target = $region44
      $region43: #{transformer_forward.54} parent=39 // pred_region
        %vm382 = vcmask 7168
        %383 = vst.msk [vmem:[#allocation2] sm:$0xff] %vm382, -inf
        %384 = vst.msk [vmem:[#allocation2 + $0x8] sm:$0xff] %vm382, -inf
        %385 = vst.msk [vmem:[#allocation2 + $0x10] sm:$0xff] %vm382, -inf
        %386 = vst.msk [vmem:[#allocation2 + $0x18] sm:$0xff] %vm382, -inf
        %387 = vst.msk [vmem:[#allocation3] sm:$0xff] %vm382, 0.0
        %388 = vst.msk [vmem:[#allocation3 + $0x8] sm:$0xff] %vm382, 0.0
        %389 = vst.msk [vmem:[#allocation3 + $0x10] sm:$0xff] %vm382, 0.0
        %390 = vst.msk [vmem:[#allocation3 + $0x18] sm:$0xff] %vm382, 0.0
        %vm391 = vcmask 64512
        %392 = vst.msk [vmem:[#allocation4] sm:$0xff] %vm391, 0.0
        %393 = vst.msk [vmem:[#allocation4 + $0x8] sm:$0xff] %vm391, 0.0
        %394 = vst.msk [vmem:[#allocation4 + $0x10] sm:$0xff] %vm391, 0.0
        %395 = vst.msk [vmem:[#allocation4 + $0x18] sm:$0xff] %vm391, 0.0
      $region44: #{transformer_forward.54} parent=39 // pred_fallthru
        _
      %v396 = vld [vmem:[%s353] sm:$0xff]
      %v397 = vld [vmem:[%s353 + $0x8] sm:$0xff]
      %v398 = vld [vmem:[%s353 + $0x10] sm:$0xff]
      %v399 = vld [vmem:[%s353 + $0x18] sm:$0xff]
      %v400 = vld [vmem:[%s361] sm:$0xff]
      %v401 = vld [vmem:[%s361 + $0x8] sm:$0xff]
      %v402 = vld [vmem:[%s361 + $0x10] sm:$0xff]
      %v403 = vld [vmem:[%s361 + $0x18] sm:$0xff]
      %v404 = vld [vmem:[%s369] sm:$0xff]
      %v405 = vld [vmem:[%s369 + $0x8] sm:$0xff]
      %v406 = vld [vmem:[%s369 + $0x10] sm:$0xff]
      %v407 = vld [vmem:[%s369 + $0x18] sm:$0xff]
      %vm408 = vcmask 64512
      %v410 = vsel %vm408, %v396, 0
      %v413 = vsel %vm408, %v400, 0
      %415 = vmatprep.subr.mxu0 0.0
      %416 = vmatpush1.xpose.msra.mxu0 %v413
      %417 = vmatprep.subr.mxu0 0.0
      %418 = vmatpush1.xpose.msra.mxu0 0.0
      %419 = vmatprep.subr.mxu0 0.0
      %420 = vmatpush1.xpose.msra.mxu0 0.0
      %421 = vmatprep.subr.mxu0 0.0
      %422 = vmatpush1.xpose.msra.mxu0 0.0
      %423 = vmatprep.subr.mxu0 0.0
      %424 = vmatpush1.xpose.msra.mxu0 0.0
      %425 = vmatprep.subr.mxu0 0.0
      %426 = vmatpush1.xpose.msra.mxu0 0.0
      %427 = vmatprep.subr.mxu0 0.0
      %428 = vmatpush1.xpose.msra.mxu0 0.0
      %429 = vmatprep.subr.mxu0 0.0
      %430 = vmatpush1.xpose.msra.mxu0 0.0
      %431 = vmatprep.subr.mxu0 0.0
      %432 = vmatpush1.xpose.msra.mxu0 0.0
      %433 = vmatprep.subr.mxu0 0.0
      %434 = vmatpush1.xpose.msra.mxu0 0.0
      %435 = vmatprep.subr.mxu0 0.0
      %436 = vmatpush1.xpose.msra.mxu0 0.0
      %437 = vmatprep.subr.mxu0 0.0
      %438 = vmatpush1.xpose.msra.mxu0 0.0
      %439 = vmatprep.subr.mxu0 0.0
      %440 = vmatpush1.xpose.msra.mxu0 0.0
      %441 = vmatprep.subr.mxu0 0.0
      %442 = vmatpush1.xpose.msra.mxu0 0.0
      %443 = vmatprep.subr.mxu0 0.0
      %444 = vmatpush1.xpose.msra.mxu0 0.0
      %445 = vmatprep.subr.mxu0 0.0
      %446 = vmatpush1.xpose.msra.mxu0 0.0
      %447 = vmatprep.subr.mxu0 0.0
      %448 = vmatpush1.xpose.msra.mxu0 0.0
      %449 = vmatprep.subr.mxu0 0.0
      %450 = vmatpush1.xpose.msra.mxu0 0.0
      %451 = vmatprep.subr.mxu0 0.0
      %452 = vmatpush1.xpose.msra.mxu0 0.0
      %453 = vmatprep.subr.mxu0 0.0
      %454 = vmatpush1.xpose.msra.mxu0 0.0
      %455 = vmatprep.subr.mxu0 0.0
      %456 = vmatpush1.xpose.msra.mxu0 0.0
      %457 = vmatprep.subr.mxu0 0.0
      %458 = vmatpush1.xpose.msra.mxu0 0.0
      %459 = vmatprep.subr.mxu0 0.0
      %460 = vmatpush1.xpose.msra.mxu0 0.0
      %461 = vmatprep.subr.mxu0 0.0
      %462 = vmatpush1.xpose.msra.mxu0 0.0
      %463 = vmatprep.subr.mxu0 0.0
      %464 = vmatpush1.xpose.msra.mxu0 0.0
      %465 = vmatprep.subr.mxu0 0.0
      %466 = vmatpush1.xpose.msra.mxu0 0.0
      %467 = vmatprep.subr.mxu0 0.0
      %468 = vmatpush1.xpose.msra.mxu0 0.0
      %469 = vmatprep.subr.mxu0 0.0
      %470 = vmatpush1.xpose.msra.mxu0 0.0
      %471 = vmatprep.subr.mxu0 0.0
      %472 = vmatpush1.xpose.msra.mxu0 0.0
      %473 = vmatprep.subr.mxu0 0.0
      %474 = vmatpush1.xpose.msra.mxu0 0.0
      %475 = vmatprep.subr.mxu0 0.0
      %476 = vmatpush1.xpose.msra.mxu0 0.0
      %477 = vmatprep.subr.mxu0 0.0
      %478 = vmatpush1.xpose.msra.mxu0 0.0
      %479 = vmatprep.mubr.f32.mxu0 0.0
      %480 = vmatmul.mubr.f32.gmra.mrb[0].mxu0 %v410
      %v481 = vpop.f32.mrb[0].mxu0
      %v482 = vadd.f32 0.0, %v481
      %v483 = vpop.f32.mrb[0].mxu0
      %484 = vdwg.mxu0
      %v486 = vsel %vm408, %v397, 0
      %v489 = vsel %vm408, %v401, 0
      %491 = vmatprep.subr.mxu0 0.0
      %492 = vmatpush1.xpose.msra.mxu0 %v489
      %493 = vmatprep.subr.mxu0 0.0
      %494 = vmatpush1.xpose.msra.mxu0 0.0
      %495 = vmatprep.subr.mxu0 0.0
      %496 = vmatpush1.xpose.msra.mxu0 0.0
      %497 = vmatprep.subr.mxu0 0.0
      %498 = vmatpush1.xpose.msra.mxu0 0.0
      %499 = vmatprep.subr.mxu0 0.0
      %500 = vmatpush1.xpose.msra.mxu0 0.0
      %501 = vmatprep.subr.mxu0 0.0
      %502 = vmatpush1.xpose.msra.mxu0 0.0
      %503 = vmatprep.subr.mxu0 0.0
      %504 = vmatpush1.xpose.msra.mxu0 0.0
      %505 = vmatprep.subr.mxu0 0.0
      %506 = vmatpush1.xpose.msra.mxu0 0.0
      %507 = vmatprep.subr.mxu0 0.0
      %508 = vmatpush1.xpose.msra.mxu0 0.0
      %509 = vmatprep.subr.mxu0 0.0
      %510 = vmatpush1.xpose.msra.mxu0 0.0
      %511 = vmatprep.subr.mxu0 0.0
      %512 = vmatpush1.xpose.msra.mxu0 0.0
      %513 = vmatprep.subr.mxu0 0.0
      %514 = vmatpush1.xpose.msra.mxu0 0.0
      %515 = vmatprep.subr.mxu0 0.0
      %516 = vmatpush1.xpose.msra.mxu0 0.0
      %517 = vmatprep.subr.mxu0 0.0
      %518 = vmatpush1.xpose.msra.mxu0 0.0
      %519 = vmatprep.subr.mxu0 0.0
      %520 = vmatpush1.xpose.msra.mxu0 0.0
      %521 = vmatprep.subr.mxu0 0.0
      %522 = vmatpush1.xpose.msra.mxu0 0.0
      %523 = vmatprep.subr.mxu0 0.0
      %524 = vmatpush1.xpose.msra.mxu0 0.0
      %525 = vmatprep.subr.mxu0 0.0
      %526 = vmatpush1.xpose.msra.mxu0 0.0
      %527 = vmatprep.subr.mxu0 0.0
      %528 = vmatpush1.xpose.msra.mxu0 0.0
      %529 = vmatprep.subr.mxu0 0.0
      %530 = vmatpush1.xpose.msra.mxu0 0.0
      %531 = vmatprep.subr.mxu0 0.0
      %532 = vmatpush1.xpose.msra.mxu0 0.0
      %533 = vmatprep.subr.mxu0 0.0
      %534 = vmatpush1.xpose.msra.mxu0 0.0
      %535 = vmatprep.subr.mxu0 0.0
      %536 = vmatpush1.xpose.msra.mxu0 0.0
      %537 = vmatprep.subr.mxu0 0.0
      %538 = vmatpush1.xpose.msra.mxu0 0.0
      %539 = vmatprep.subr.mxu0 0.0
      %540 = vmatpush1.xpose.msra.mxu0 0.0
      %541 = vmatprep.subr.mxu0 0.0
      %542 = vmatpush1.xpose.msra.mxu0 0.0
      %543 = vmatprep.subr.mxu0 0.0
      %544 = vmatpush1.xpose.msra.mxu0 0.0
      %545 = vmatprep.subr.mxu0 0.0
      %546 = vmatpush1.xpose.msra.mxu0 0.0
      %547 = vmatprep.subr.mxu0 0.0
      %548 = vmatpush1.xpose.msra.mxu0 0.0
      %549 = vmatprep.subr.mxu0 0.0
      %550 = vmatpush1.xpose.msra.mxu0 0.0
      %551 = vmatprep.subr.mxu0 0.0
      %552 = vmatpush1.xpose.msra.mxu0 0.0
      %553 = vmatprep.subr.mxu0 0.0
      %554 = vmatpush1.xpose.msra.mxu0 0.0
      %555 = vmatprep.mubr.f32.mxu0 0.0
      %556 = vmatmul.mubr.f32.gmra.mrb[0].mxu0 %v486
      %v557 = vpop.f32.mrb[0].mxu0
      %v558 = vadd.f32 0.0, %v557
      %v559 = vpop.f32.mrb[0].mxu0
      %560 = vdwg.mxu0
      %v562 = vsel %vm408, %v398, 0
      %v565 = vsel %vm408, %v402, 0
      %567 = vmatprep.subr.mxu0 0.0
      %568 = vmatpush1.xpose.msra.mxu0 %v565
      %569 = vmatprep.subr.mxu0 0.0
      %570 = vmatpush1.xpose.msra.mxu0 0.0
      %571 = vmatprep.subr.mxu0 0.0
      %572 = vmatpush1.xpose.msra.mxu0 0.0
      %573 = vmatprep.subr.mxu0 0.0
      %574 = vmatpush1.xpose.msra.mxu0 0.0
      %575 = vmatprep.subr.mxu0 0.0
      %576 = vmatpush1.xpose.msra.mxu0 0.0
      %577 = vmatprep.subr.mxu0 0.0
      %578 = vmatpush1.xpose.msra.mxu0 0.0
      %579 = vmatprep.subr.mxu0 0.0
      %580 = vmatpush1.xpose.msra.mxu0 0.0
      %581 = vmatprep.subr.mxu0 0.0
      %582 = vmatpush1.xpose.msra.mxu0 0.0
      %583 = vmatprep.subr.mxu0 0.0
      %584 = vmatpush1.xpose.msra.mxu0 0.0
      %585 = vmatprep.subr.mxu0 0.0
      %586 = vmatpush1.xpose.msra.mxu0 0.0
      %587 = vmatprep.subr.mxu0 0.0
      %588 = vmatpush1.xpose.msra.mxu0 0.0
      %589 = vmatprep.subr.mxu0 0.0
      %590 = vmatpush1.xpose.msra.mxu0 0.0
      %591 = vmatprep.subr.mxu0 0.0
      %592 = vmatpush1.xpose.msra.mxu0 0.0
      %593 = vmatprep.subr.mxu0 0.0
      %594 = vmatpush1.xpose.msra.mxu0 0.0
      %595 = vmatprep.subr.mxu0 0.0
      %596 = vmatpush1.xpose.msra.mxu0 0.0
      %597 = vmatprep.subr.mxu0 0.0
      %598 = vmatpush1.xpose.msra.mxu0 0.0
      %599 = vmatprep.subr.mxu0 0.0
      %600 = vmatpush1.xpose.msra.mxu0 0.0
      %601 = vmatprep.subr.mxu0 0.0
      %602 = vmatpush1.xpose.msra.mxu0 0.0
      %603 = vmatprep.subr.mxu0 0.0
      %604 = vmatpush1.xpose.msra.mxu0 0.0
      %605 = vmatprep.subr.mxu0 0.0
      %606 = vmatpush1.xpose.msra.mxu0 0.0
      %607 = vmatprep.subr.mxu0 0.0
      %608 = vmatpush1.xpose.msra.mxu0 0.0
      %609 = vmatprep.subr.mxu0 0.0
      %610 = vmatpush1.xpose.msra.mxu0 0.0
      %611 = vmatprep.subr.mxu0 0.0
      %612 = vmatpush1.xpose.msra.mxu0 0.0
      %613 = vmatprep.subr.mxu0 0.0
      %614 = vmatpush1.xpose.msra.mxu0 0.0
      %615 = vmatprep.subr.mxu0 0.0
      %616 = vmatpush1.xpose.msra.mxu0 0.0
      %617 = vmatprep.subr.mxu0 0.0
      %618 = vmatpush1.xpose.msra.mxu0 0.0
      %619 = vmatprep.subr.mxu0 0.0
      %620 = vmatpush1.xpose.msra.mxu0 0.0
      %621 = vmatprep.subr.mxu0 0.0
      %622 = vmatpush1.xpose.msra.mxu0 0.0
      %623 = vmatprep.subr.mxu0 0.0
      %624 = vmatpush1.xpose.msra.mxu0 0.0
      %625 = vmatprep.subr.mxu0 0.0
      %626 = vmatpush1.xpose.msra.mxu0 0.0
      %627 = vmatprep.subr.mxu0 0.0
      %628 = vmatpush1.xpose.msra.mxu0 0.0
      %629 = vmatprep.subr.mxu0 0.0
      %630 = vmatpush1.xpose.msra.mxu0 0.0
      %631 = vmatprep.mubr.f32.mxu0 0.0
      %632 = vmatmul.mubr.f32.gmra.mrb[0].mxu0 %v562
      %v633 = vpop.f32.mrb[0].mxu0
      %v634 = vadd.f32 0.0, %v633
      %v635 = vpop.f32.mrb[0].mxu0
      %636 = vdwg.mxu0
      %v638 = vsel %vm408, %v399, 0
      %v641 = vsel %vm408, %v403, 0
      %643 = vmatprep.subr.mxu0 0.0
      %644 = vmatpush1.xpose.msra.mxu0 %v641
      %645 = vmatprep.subr.mxu0 0.0
      %646 = vmatpush1.xpose.msra.mxu0 0.0
      %647 = vmatprep.subr.mxu0 0.0
      %648 = vmatpush1.xpose.msra.mxu0 0.0
      %649 = vmatprep.subr.mxu0 0.0
      %650 = vmatpush1.xpose.msra.mxu0 0.0
      %651 = vmatprep.subr.mxu0 0.0
      %652 = vmatpush1.xpose.msra.mxu0 0.0
      %653 = vmatprep.subr.mxu0 0.0
      %654 = vmatpush1.xpose.msra.mxu0 0.0
      %655 = vmatprep.subr.mxu0 0.0
      %656 = vmatpush1.xpose.msra.mxu0 0.0
      %657 = vmatprep.subr.mxu0 0.0
      %658 = vmatpush1.xpose.msra.mxu0 0.0
      %659 = vmatprep.subr.mxu0 0.0
      %660 = vmatpush1.xpose.msra.mxu0 0.0
      %661 = vmatprep.subr.mxu0 0.0
      %662 = vmatpush1.xpose.msra.mxu0 0.0
      %663 = vmatprep.subr.mxu0 0.0
      %664 = vmatpush1.xpose.msra.mxu0 0.0
      %665 = vmatprep.subr.mxu0 0.0
      %666 = vmatpush1.xpose.msra.mxu0 0.0
      %667 = vmatprep.subr.mxu0 0.0
      %668 = vmatpush1.xpose.msra.mxu0 0.0
      %669 = vmatprep.subr.mxu0 0.0
      %670 = vmatpush1.xpose.msra.mxu0 0.0
      %671 = vmatprep.subr.mxu0 0.0
      %672 = vmatpush1.xpose.msra.mxu0 0.0
      %673 = vmatprep.subr.mxu0 0.0
      %674 = vmatpush1.xpose.msra.mxu0 0.0
      %675 = vmatprep.subr.mxu0 0.0
      %676 = vmatpush1.xpose.msra.mxu0 0.0
      %677 = vmatprep.subr.mxu0 0.0
      %678 = vmatpush1.xpose.msra.mxu0 0.0
      %679 = vmatprep.subr.mxu0 0.0
      %680 = vmatpush1.xpose.msra.mxu0 0.0
      %681 = vmatprep.subr.mxu0 0.0
      %682 = vmatpush1.xpose.msra.mxu0 0.0
      %683 = vmatprep.subr.mxu0 0.0
      %684 = vmatpush1.xpose.msra.mxu0 0.0
      %685 = vmatprep.subr.mxu0 0.0
      %686 = vmatpush1.xpose.msra.mxu0 0.0
      %687 = vmatprep.subr.mxu0 0.0
      %688 = vmatpush1.xpose.msra.mxu0 0.0
      %689 = vmatprep.subr.mxu0 0.0
      %690 = vmatpush1.xpose.msra.mxu0 0.0
      %691 = vmatprep.subr.mxu0 0.0
      %692 = vmatpush1.xpose.msra.mxu0 0.0
      %693 = vmatprep.subr.mxu0 0.0
      %694 = vmatpush1.xpose.msra.mxu0 0.0
      %695 = vmatprep.subr.mxu0 0.0
      %696 = vmatpush1.xpose.msra.mxu0 0.0
      %697 = vmatprep.subr.mxu0 0.0
      %698 = vmatpush1.xpose.msra.mxu0 0.0
      %699 = vmatprep.subr.mxu0 0.0
      %700 = vmatpush1.xpose.msra.mxu0 0.0
      %701 = vmatprep.subr.mxu0 0.0
      %702 = vmatpush1.xpose.msra.mxu0 0.0
      %703 = vmatprep.subr.mxu0 0.0
      %704 = vmatpush1.xpose.msra.mxu0 0.0
      %705 = vmatprep.subr.mxu0 0.0
      %706 = vmatpush1.xpose.msra.mxu0 0.0
      %707 = vmatprep.mubr.f32.mxu0 0.0
      %708 = vmatmul.mubr.f32.gmra.mrb[0].mxu0 %v638
      %v709 = vpop.f32.mrb[0].mxu0
      %v710 = vadd.f32 0.0, %v709
      %v711 = vpop.f32.mrb[0].mxu0
      %712 = vdwg.mxu0
      %v713 = vmul.f32 %v482, 0.35355338
      %v714 = vmul.f32 %v558, 0.35355338
      %v715 = vmul.f32 %v634, 0.35355338
      %v716 = vmul.f32 %v710, 0.35355338
      %v717 = vld [vmem:[%s339] sm:$0xff]
      %vm718 = vcmp.gt.f32.partialorder %v717, 0.5
      %v719 = vld [vmem:[%s345] sm:$0x1]
      %vm720 = vcmp.gt.f32.partialorder %v719, 0.5
      %v721 = vsel %vm718, 1, 0
      %722 = vset.pattern.permute.xlu0 0
      %723 = vperm.xlu0 %722, %v721
      %v724 = vpop.permute.xlu0 %723
      %vm725 = vcmp.eq.s32.totalorder %v724, 1
      %v726 = vsel %vm720, 1, 0
      %v727 = vlaneseq
      %v728 = vshrl.u32 %v727, 7
      %v729 = vsub.s32 0, %v728
      %v730 = vrot.slane %v726, %v729
      %vm731 = vcmp.eq.s32.totalorder %v730, 1
      %vm732 = vmand %vm725, %vm731
      %s733 = smul.u32 %s22, 8
      %v734 = vlaneseq
      %v735 = vshrl.u32 %v734, 7
      %v736 = vstv %s733
      %v737 = vadd.s32 %v736, %v735
      %s738 = smul.u32 %s23, 8
      %v739 = vlaneseq
      %v740 = vand.u32 %v739, 127
      %v741 = vstv %s738
      %v742 = vadd.s32 %v741, %v740
      %vm743 = vcmp.ge.s32.totalorder %v737, %v742
      %vm744 = vmand %vm732, %vm743
      %v745 = vsel %vm744, 1, 0
      %vm746 = vcmp.eq.s32.totalorder %v745, 1
      %v747 = vsel %vm746, %v713, -10000.0
      %v748 = vsel %vm746, %v714, -10000.0
      %v749 = vsel %vm746, %v715, -10000.0
      %v750 = vsel %vm746, %v716, -10000.0
      %v751 = vld [vmem:[#allocation2] sm:$0xff]
      %v752 = vld [vmem:[#allocation2 + $0x8] sm:$0xff]
      %v753 = vld [vmem:[#allocation2 + $0x10] sm:$0xff]
      %v754 = vld [vmem:[#allocation2 + $0x18] sm:$0xff]
      %v755 = vsel %vm408, %v747, -inf
      %756 = vmax.xlane.f32.xlu0 %v755
      %v757 = vpop.xlane.xlu0 %756
      %v758 = vsel %vm408, %v748, -inf
      %759 = vmax.xlane.f32.xlu0 %v758
      %v760 = vpop.xlane.xlu0 %759
      %v761 = vsel %vm408, %v749, -inf
      %762 = vmax.xlane.f32.xlu0 %v761
      %v763 = vpop.xlane.xlu0 %762
      %v764 = vsel %vm408, %v750, -inf
      %765 = vmax.xlane.f32.xlu0 %v764
      %v766 = vpop.xlane.xlu0 %765
      %v767 = vmax.f32 %v751, %v757
      %v768 = vmax.f32 %v752, %v760
      %v769 = vmax.f32 %v753, %v763
      %v770 = vmax.f32 %v754, %v766
      %v771 = vsub.f32 %v751, %v767
      %v772 = vsub.f32 %v752, %v768
      %v773 = vsub.f32 %v753, %v769
      %v774 = vsub.f32 %v754, %v770
      %v775 = vmul.f32 %v771, 1.442695
      %v776 = vpow.pop %v775
      %v777 = vmul.f32 %v772, 1.442695
      %v778 = vpow.pop %v777
      %v779 = vmul.f32 %v773, 1.442695
      %v780 = vpow.pop %v779
      %v781 = vmul.f32 %v774, 1.442695
      %v782 = vpow.pop %v781
      %784 = vset.pattern.permute.xlu0 0
      %785 = vperm.xlu0 %784, %v767
      %v786 = vpop.permute.xlu0 %785
      %789 = vset.pattern.permute.xlu0 0
      %790 = vperm.xlu0 %789, %v768
      %v791 = vpop.permute.xlu0 %790
      %794 = vset.pattern.permute.xlu0 0
      %795 = vperm.xlu0 %794, %v769
      %v796 = vpop.permute.xlu0 %795
      %799 = vset.pattern.permute.xlu0 0
      %800 = vperm.xlu0 %799, %v770
      %v801 = vpop.permute.xlu0 %800
      %v803 = vsub.f32 %v747, %v786
      %v804 = vsub.f32 %v748, %v791
      %v805 = vsub.f32 %v749, %v796
      %v806 = vsub.f32 %v750, %v801
      %v807 = vmul.f32 %v803, 1.442695
      %v808 = vpow.pop %v807
      %v809 = vmul.f32 %v804, 1.442695
      %v810 = vpow.pop %v809
      %v811 = vmul.f32 %v805, 1.442695
      %v812 = vpow.pop %v811
      %v813 = vmul.f32 %v806, 1.442695
      %v814 = vpow.pop %v813
      %v815 = vld [vmem:[#allocation3] sm:$0xff]
      %v816 = vld [vmem:[#allocation3 + $0x8] sm:$0xff]
      %v817 = vld [vmem:[#allocation3 + $0x10] sm:$0xff]
      %v818 = vld [vmem:[#allocation3 + $0x18] sm:$0xff]
      %v819 = vmul.f32 %v776, %v815
      %v820 = vmul.f32 %v778, %v816
      %v821 = vmul.f32 %v780, %v817
      %v822 = vmul.f32 %v782, %v818
      %v823 = vsel %vm408, %v808, 0.0
      %824 = vadd.xlane.f32.xlu0 %v823
      %v825 = vpop.xlane.xlu0 %824
      %v826 = vsel %vm408, %v810, 0.0
      %827 = vadd.xlane.f32.xlu0 %v826
      %v828 = vpop.xlane.xlu0 %827
      %v829 = vsel %vm408, %v812, 0.0
      %830 = vadd.xlane.f32.xlu0 %v829
      %v831 = vpop.xlane.xlu0 %830
      %v832 = vsel %vm408, %v814, 0.0
      %833 = vadd.xlane.f32.xlu0 %v832
      %v834 = vpop.xlane.xlu0 %833
      %v835 = vadd.f32 %v819, %v825
      %v836 = vadd.f32 %v820, %v828
      %v837 = vadd.f32 %v821, %v831
      %v838 = vadd.f32 %v822, %v834
      %vm839 = vcmask 7168
      %840 = vst.msk [vmem:[#allocation3] sm:$0xff] %vm839, %v835
      %841 = vst.msk [vmem:[#allocation3 + $0x8] sm:$0xff] %vm839, %v836
      %842 = vst.msk [vmem:[#allocation3 + $0x10] sm:$0xff] %vm839, %v837
      %843 = vst.msk [vmem:[#allocation3 + $0x18] sm:$0xff] %vm839, %v838
      %v844 = vld [vmem:[#allocation4] sm:$0xff]
      %v845 = vld [vmem:[#allocation4 + $0x8] sm:$0xff]
      %v846 = vld [vmem:[#allocation4 + $0x10] sm:$0xff]
      %v847 = vld [vmem:[#allocation4 + $0x18] sm:$0xff]
      %849 = vset.pattern.permute.xlu0 0
      %850 = vperm.xlu0 %849, %v776
      %v851 = vpop.permute.xlu0 %850
      %854 = vset.pattern.permute.xlu0 0
      %855 = vperm.xlu0 %854, %v778
      %v856 = vpop.permute.xlu0 %855
      %859 = vset.pattern.permute.xlu0 0
      %860 = vperm.xlu0 %859, %v780
      %v861 = vpop.permute.xlu0 %860
      %864 = vset.pattern.permute.xlu0 0
      %865 = vperm.xlu0 %864, %v782
      %v866 = vpop.permute.xlu0 %865
      %v868 = vmul.f32 %v851, %v844
      %v869 = vmul.f32 %v856, %v845
      %v870 = vmul.f32 %v861, %v846
      %v871 = vmul.f32 %v866, %v847
      %v873 = vsel %vm408, %v808, 0
      %875 = vmatprep.subr.mxu0 0.0
      %876 = vmatpush1.msra.mxu0 %v404
      %877 = vmatprep.subr.mxu0 0.0
      %878 = vmatpush1.msra.mxu0 0.0
      %879 = vmatprep.subr.mxu0 0.0
      %880 = vmatpush1.msra.mxu0 0.0
      %881 = vmatprep.subr.mxu0 0.0
      %882 = vmatpush1.msra.mxu0 0.0
      %883 = vmatprep.subr.mxu0 0.0
      %884 = vmatpush1.msra.mxu0 0.0
      %885 = vmatprep.subr.mxu0 0.0
      %886 = vmatpush1.msra.mxu0 0.0
      %887 = vmatprep.subr.mxu0 0.0
      %888 = vmatpush1.msra.mxu0 0.0
      %889 = vmatprep.subr.mxu0 0.0
      %890 = vmatpush1.msra.mxu0 0.0
      %891 = vmatprep.subr.mxu0 0.0
      %892 = vmatpush1.msra.mxu0 0.0
      %893 = vmatprep.subr.mxu0 0.0
      %894 = vmatpush1.msra.mxu0 0.0
      %895 = vmatprep.subr.mxu0 0.0
      %896 = vmatpush1.msra.mxu0 0.0
      %897 = vmatprep.subr.mxu0 0.0
      %898 = vmatpush1.msra.mxu0 0.0
      %899 = vmatprep.subr.mxu0 0.0
      %900 = vmatpush1.msra.mxu0 0.0
      %901 = vmatprep.subr.mxu0 0.0
      %902 = vmatpush1.msra.mxu0 0.0
      %903 = vmatprep.subr.mxu0 0.0
      %904 = vmatpush1.msra.mxu0 0.0
      %905 = vmatprep.subr.mxu0 0.0
      %906 = vmatpush1.msra.mxu0 0.0
      %907 = vmatprep.subr.mxu0 0.0
      %908 = vmatpush1.msra.mxu0 0.0
      %909 = vmatprep.subr.mxu0 0.0
      %910 = vmatpush1.msra.mxu0 0.0
      %911 = vmatprep.subr.mxu0 0.0
      %912 = vmatpush1.msra.mxu0 0.0
      %913 = vmatprep.subr.mxu0 0.0
      %914 = vmatpush1.msra.mxu0 0.0
      %915 = vmatprep.subr.mxu0 0.0
      %916 = vmatpush1.msra.mxu0 0.0
      %917 = vmatprep.subr.mxu0 0.0
      %918 = vmatpush1.msra.mxu0 0.0
      %919 = vmatprep.subr.mxu0 0.0
      %920 = vmatpush1.msra.mxu0 0.0
      %921 = vmatprep.subr.mxu0 0.0
      %922 = vmatpush1.msra.mxu0 0.0
      %923 = vmatprep.subr.mxu0 0.0
      %924 = vmatpush1.msra.mxu0 0.0
      %925 = vmatprep.subr.mxu0 0.0
      %926 = vmatpush1.msra.mxu0 0.0
      %927 = vmatprep.subr.mxu0 0.0
      %928 = vmatpush1.msra.mxu0 0.0
      %929 = vmatprep.subr.mxu0 0.0
      %930 = vmatpush1.msra.mxu0 0.0
      %931 = vmatprep.subr.mxu0 0.0
      %932 = vmatpush1.msra.mxu0 0.0
      %933 = vmatprep.subr.mxu0 0.0
      %934 = vmatpush1.msra.mxu0 0.0
      %935 = vmatprep.subr.mxu0 0.0
      %936 = vmatpush1.msra.mxu0 0.0
      %937 = vmatprep.subr.mxu0 0.0
      %938 = vmatpush1.msra.mxu0 0.0
      %939 = vmatprep.mubr.f32.mxu0 0.0
      %940 = vmatmul.mubr.f32.gmra.mrb[0].mxu0 %v873
      %v941 = vpop.f32.mrb[0].mxu0
      %v942 = vadd.f32 0.0, %v941
      %v943 = vpop.f32.mrb[0].mxu0
      %944 = vdwg.mxu0
      %v946 = vsel %vm408, %v810, 0
      %948 = vmatprep.subr.mxu0 0.0
      %949 = vmatpush1.msra.mxu0 %v405
      %950 = vmatprep.subr.mxu0 0.0
      %951 = vmatpush1.msra.mxu0 0.0
      %952 = vmatprep.subr.mxu0 0.0
      %953 = vmatpush1.msra.mxu0 0.0
      %954 = vmatprep.subr.mxu0 0.0
      %955 = vmatpush1.msra.mxu0 0.0
      %956 = vmatprep.subr.mxu0 0.0
      %957 = vmatpush1.msra.mxu0 0.0
      %958 = vmatprep.subr.mxu0 0.0
      %959 = vmatpush1.msra.mxu0 0.0
      %960 = vmatprep.subr.mxu0 0.0
      %961 = vmatpush1.msra.mxu0 0.0
      %962 = vmatprep.subr.mxu0 0.0
      %963 = vmatpush1.msra.mxu0 0.0
      %964 = vmatprep.subr.mxu0 0.0
      %965 = vmatpush1.msra.mxu0 0.0
      %966 = vmatprep.subr.mxu0 0.0
      %967 = vmatpush1.msra.mxu0 0.0
      %968 = vmatprep.subr.mxu0 0.0
      %969 = vmatpush1.msra.mxu0 0.0
      %970 = vmatprep.subr.mxu0 0.0
      %971 = vmatpush1.msra.mxu0 0.0
      %972 = vmatprep.subr.mxu0 0.0
      %973 = vmatpush1.msra.mxu0 0.0
      %974 = vmatprep.subr.mxu0 0.0
      %975 = vmatpush1.msra.mxu0 0.0
      %976 = vmatprep.subr.mxu0 0.0
      %977 = vmatpush1.msra.mxu0 0.0
      %978 = vmatprep.subr.mxu0 0.0
      %979 = vmatpush1.msra.mxu0 0.0
      %980 = vmatprep.subr.mxu0 0.0
      %981 = vmatpush1.msra.mxu0 0.0
      %982 = vmatprep.subr.mxu0 0.0
      %983 = vmatpush1.msra.mxu0 0.0
      %984 = vmatprep.subr.mxu0 0.0
      %985 = vmatpush1.msra.mxu0 0.0
      %986 = vmatprep.subr.mxu0 0.0
      %987 = vmatpush1.msra.mxu0 0.0
      %988 = vmatprep.subr.mxu0 0.0
      %989 = vmatpush1.msra.mxu0 0.0
      %990 = vmatprep.subr.mxu0 0.0
      %991 = vmatpush1.msra.mxu0 0.0
      %992 = vmatprep.subr.mxu0 0.0
      %993 = vmatpush1.msra.mxu0 0.0
      %994 = vmatprep.subr.mxu0 0.0
      %995 = vmatpush1.msra.mxu0 0.0
      %996 = vmatprep.subr.mxu0 0.0
      %997 = vmatpush1.msra.mxu0 0.0
      %998 = vmatprep.subr.mxu0 0.0
      %999 = vmatpush1.msra.mxu0 0.0
      %1000 = vmatprep.subr.mxu0 0.0
      %1001 = vmatpush1.msra.mxu0 0.0
      %1002 = vmatprep.subr.mxu0 0.0
      %1003 = vmatpush1.msra.mxu0 0.0
      %1004 = vmatprep.subr.mxu0 0.0
      %1005 = vmatpush1.msra.mxu0 0.0
      %1006 = vmatprep.subr.mxu0 0.0
      %1007 = vmatpush1.msra.mxu0 0.0
      %1008 = vmatprep.subr.mxu0 0.0
      %1009 = vmatpush1.msra.mxu0 0.0
      %1010 = vmatprep.subr.mxu0 0.0
      %1011 = vmatpush1.msra.mxu0 0.0
      %1012 = vmatprep.mubr.f32.mxu0 0.0
      %1013 = vmatmul.mubr.f32.gmra.mrb[0].mxu0 %v946
      %v1014 = vpop.f32.mrb[0].mxu0
      %v1015 = vadd.f32 0.0, %v1014
      %v1016 = vpop.f32.mrb[0].mxu0
      %1017 = vdwg.mxu0
      %v1019 = vsel %vm408, %v812, 0
      %1021 = vmatprep.subr.mxu0 0.0
      %1022 = vmatpush1.msra.mxu0 %v406
      %1023 = vmatprep.subr.mxu0 0.0
      %1024 = vmatpush1.msra.mxu0 0.0
      %1025 = vmatprep.subr.mxu0 0.0
      %1026 = vmatpush1.msra.mxu0 0.0
      %1027 = vmatprep.subr.mxu0 0.0
      %1028 = vmatpush1.msra.mxu0 0.0
      %1029 = vmatprep.subr.mxu0 0.0
      %1030 = vmatpush1.msra.mxu0 0.0
      %1031 = vmatprep.subr.mxu0 0.0
      %1032 = vmatpush1.msra.mxu0 0.0
      %1033 = vmatprep.subr.mxu0 0.0
      %1034 = vmatpush1.msra.mxu0 0.0
      %1035 = vmatprep.subr.mxu0 0.0
      %1036 = vmatpush1.msra.mxu0 0.0
      %1037 = vmatprep.subr.mxu0 0.0
      %1038 = vmatpush1.msra.mxu0 0.0
      %1039 = vmatprep.subr.mxu0 0.0
      %1040 = vmatpush1.msra.mxu0 0.0
      %1041 = vmatprep.subr.mxu0 0.0
      %1042 = vmatpush1.msra.mxu0 0.0
      %1043 = vmatprep.subr.mxu0 0.0
      %1044 = vmatpush1.msra.mxu0 0.0
      %1045 = vmatprep.subr.mxu0 0.0
      %1046 = vmatpush1.msra.mxu0 0.0
      %1047 = vmatprep.subr.mxu0 0.0
      %1048 = vmatpush1.msra.mxu0 0.0
      %1049 = vmatprep.subr.mxu0 0.0
      %1050 = vmatpush1.msra.mxu0 0.0
      %1051 = vmatprep.subr.mxu0 0.0
      %1052 = vmatpush1.msra.mxu0 0.0
      %1053 = vmatprep.subr.mxu0 0.0
      %1054 = vmatpush1.msra.mxu0 0.0
      %1055 = vmatprep.subr.mxu0 0.0
      %1056 = vmatpush1.msra.mxu0 0.0
      %1057 = vmatprep.subr.mxu0 0.0
      %1058 = vmatpush1.msra.mxu0 0.0
      %1059 = vmatprep.subr.mxu0 0.0
      %1060 = vmatpush1.msra.mxu0 0.0
      %1061 = vmatprep.subr.mxu0 0.0
      %1062 = vmatpush1.msra.mxu0 0.0
      %1063 = vmatprep.subr.mxu0 0.0
      %1064 = vmatpush1.msra.mxu0 0.0
      %1065 = vmatprep.subr.mxu0 0.0
      %1066 = vmatpush1.msra.mxu0 0.0
      %1067 = vmatprep.subr.mxu0 0.0
      %1068 = vmatpush1.msra.mxu0 0.0
      %1069 = vmatprep.subr.mxu0 0.0
      %1070 = vmatpush1.msra.mxu0 0.0
      %1071 = vmatprep.subr.mxu0 0.0
      %1072 = vmatpush1.msra.mxu0 0.0
      %1073 = vmatprep.subr.mxu0 0.0
      %1074 = vmatpush1.msra.mxu0 0.0
      %1075 = vmatprep.subr.mxu0 0.0
      %1076 = vmatpush1.msra.mxu0 0.0
      %1077 = vmatprep.subr.mxu0 0.0
      %1078 = vmatpush1.msra.mxu0 0.0
      %1079 = vmatprep.subr.mxu0 0.0
      %1080 = vmatpush1.msra.mxu0 0.0
      %1081 = vmatprep.subr.mxu0 0.0
      %1082 = vmatpush1.msra.mxu0 0.0
      %1083 = vmatprep.subr.mxu0 0.0
      %1084 = vmatpush1.msra.mxu0 0.0
      %1085 = vmatprep.mubr.f32.mxu0 0.0
      %1086 = vmatmul.mubr.f32.gmra.mrb[0].mxu0 %v1019
      %v1087 = vpop.f32.mrb[0].mxu0
      %v1088 = vadd.f32 0.0, %v1087
      %v1089 = vpop.f32.mrb[0].mxu0
      %1090 = vdwg.mxu0
      %v1092 = vsel %vm408, %v814, 0
      %1094 = vmatprep.subr.mxu0 0.0
      %1095 = vmatpush1.msra.mxu0 %v407
      %1096 = vmatprep.subr.mxu0 0.0
      %1097 = vmatpush1.msra.mxu0 0.0
      %1098 = vmatprep.subr.mxu0 0.0
      %1099 = vmatpush1.msra.mxu0 0.0
      %1100 = vmatprep.subr.mxu0 0.0
      %1101 = vmatpush1.msra.mxu0 0.0
      %1102 = vmatprep.subr.mxu0 0.0
      %1103 = vmatpush1.msra.mxu0 0.0
      %1104 = vmatprep.subr.mxu0 0.0
      %1105 = vmatpush1.msra.mxu0 0.0
      %1106 = vmatprep.subr.mxu0 0.0
      %1107 = vmatpush1.msra.mxu0 0.0
      %1108 = vmatprep.subr.mxu0 0.0
      %1109 = vmatpush1.msra.mxu0 0.0
      %1110 = vmatprep.subr.mxu0 0.0
      %1111 = vmatpush1.msra.mxu0 0.0
      %1112 = vmatprep.subr.mxu0 0.0
      %1113 = vmatpush1.msra.mxu0 0.0
      %1114 = vmatprep.subr.mxu0 0.0
      %1115 = vmatpush1.msra.mxu0 0.0
      %1116 = vmatprep.subr.mxu0 0.0
      %1117 = vmatpush1.msra.mxu0 0.0
      %1118 = vmatprep.subr.mxu0 0.0
      %1119 = vmatpush1.msra.mxu0 0.0
      %1120 = vmatprep.subr.mxu0 0.0
      %1121 = vmatpush1.msra.mxu0 0.0
      %1122 = vmatprep.subr.mxu0 0.0
      %1123 = vmatpush1.msra.mxu0 0.0
      %1124 = vmatprep.subr.mxu0 0.0
      %1125 = vmatpush1.msra.mxu0 0.0
      %1126 = vmatprep.subr.mxu0 0.0
      %1127 = vmatpush1.msra.mxu0 0.0
      %1128 = vmatprep.subr.mxu0 0.0
      %1129 = vmatpush1.msra.mxu0 0.0
      %1130 = vmatprep.subr.mxu0 0.0
      %1131 = vmatpush1.msra.mxu0 0.0
      %1132 = vmatprep.subr.mxu0 0.0
      %1133 = vmatpush1.msra.mxu0 0.0
      %1134 = vmatprep.subr.mxu0 0.0
      %1135 = vmatpush1.msra.mxu0 0.0
      %1136 = vmatprep.subr.mxu0 0.0
      %1137 = vmatpush1.msra.mxu0 0.0
      %1138 = vmatprep.subr.mxu0 0.0
      %1139 = vmatpush1.msra.mxu0 0.0
      %1140 = vmatprep.subr.mxu0 0.0
      %1141 = vmatpush1.msra.mxu0 0.0
      %1142 = vmatprep.subr.mxu0 0.0
      %1143 = vmatpush1.msra.mxu0 0.0
      %1144 = vmatprep.subr.mxu0 0.0
      %1145 = vmatpush1.msra.mxu0 0.0
      %1146 = vmatprep.subr.mxu0 0.0
      %1147 = vmatpush1.msra.mxu0 0.0
      %1148 = vmatprep.subr.mxu0 0.0
      %1149 = vmatpush1.msra.mxu0 0.0
      %1150 = vmatprep.subr.mxu0 0.0
      %1151 = vmatpush1.msra.mxu0 0.0
      %1152 = vmatprep.subr.mxu0 0.0
      %1153 = vmatpush1.msra.mxu0 0.0
      %1154 = vmatprep.subr.mxu0 0.0
      %1155 = vmatpush1.msra.mxu0 0.0
      %1156 = vmatprep.subr.mxu0 0.0
      %1157 = vmatpush1.msra.mxu0 0.0
      %1158 = vmatprep.mubr.f32.mxu0 0.0
      %1159 = vmatmul.mubr.f32.gmra.mrb[0].mxu0 %v1092
      %v1160 = vpop.f32.mrb[0].mxu0
      %v1161 = vadd.f32 0.0, %v1160
      %v1162 = vpop.f32.mrb[0].mxu0
      %1163 = vdwg.mxu0
      %v1164 = vadd.f32 %v868, %v942
      %v1165 = vadd.f32 %v869, %v1015
      %v1166 = vadd.f32 %v870, %v1088
      %v1167 = vadd.f32 %v871, %v1161
      %1168 = vst.msk [vmem:[#allocation4] sm:$0xff] %vm408, %v1164
      %1169 = vst.msk [vmem:[#allocation4 + $0x8] sm:$0xff] %vm408, %v1165
      %1170 = vst.msk [vmem:[#allocation4 + $0x10] sm:$0xff] %vm408, %v1166
      %1171 = vst.msk [vmem:[#allocation4 + $0x18] sm:$0xff] %vm408, %v1167
      %1172 = vst.msk [vmem:[#allocation2] sm:$0xff] %vm839, %v767
      %1173 = vst.msk [vmem:[#allocation2 + $0x8] sm:$0xff] %vm839, %v768
      %1174 = vst.msk [vmem:[#allocation2 + $0x10] sm:$0xff] %vm839, %v769
      %1175 = vst.msk [vmem:[#allocation2 + $0x18] sm:$0xff] %vm839, %v770
      // Predicated region
      $region45: #{transformer_forward.54} parent=39 // pred_check
        %p1176 = pneg %p378
      $region46: #{transformer_forward.54} parent=39 // pred_check_branch
        %1178 = sbr.rel (%p1176) target = $region48
      $region47: #{transformer_forward.54} parent=39 // pred_region
        %v1179 = vld [vmem:[#allocation3] sm:$0xff]
        %v1180 = vld [vmem:[#allocation3 + $0x8] sm:$0xff]
        %v1181 = vld [vmem:[#allocation3 + $0x10] sm:$0xff]
        %v1182 = vld [vmem:[#allocation3 + $0x18] sm:$0xff]
        %v1183 = vrcp.pop %v1179
        %v1184 = vrcp.pop %v1180
        %v1185 = vrcp.pop %v1181
        %v1186 = vrcp.pop %v1182
        %v1187 = vld [vmem:[#allocation4] sm:$0xff]
        %v1188 = vld [vmem:[#allocation4 + $0x8] sm:$0xff]
        %v1189 = vld [vmem:[#allocation4 + $0x10] sm:$0xff]
        %v1190 = vld [vmem:[#allocation4 + $0x18] sm:$0xff]
        %1192 = vset.pattern.permute.xlu0 0
        %1193 = vperm.xlu0 %1192, %v1183
        %v1194 = vpop.permute.xlu0 %1193
        %1197 = vset.pattern.permute.xlu0 0
        %1198 = vperm.xlu0 %1197, %v1184
        %v1199 = vpop.permute.xlu0 %1198
        %1202 = vset.pattern.permute.xlu0 0
        %1203 = vperm.xlu0 %1202, %v1185
        %v1204 = vpop.permute.xlu0 %1203
        %1207 = vset.pattern.permute.xlu0 0
        %1208 = vperm.xlu0 %1207, %v1186
        %v1209 = vpop.permute.xlu0 %1208
        %v1211 = vmul.f32 %v1187, %v1194
        %v1212 = vmul.f32 %v1188, %v1199
        %v1213 = vmul.f32 %v1189, %v1204
        %v1214 = vmul.f32 %v1190, %v1209
        %1215 = vst.msk [vmem:[%s377] sm:$0xff] %vm408, %v1211
        %1216 = vst.msk [vmem:[%s377 + $0x8] sm:$0xff] %vm408, %v1212
        %1217 = vst.msk [vmem:[%s377 + $0x10] sm:$0xff] %vm408, %v1213
        %1218 = vst.msk [vmem:[%s377 + $0x18] sm:$0xff] %vm408, %v1214
      $region48: #{transformer_forward.54} parent=39 // pred_fallthru
        _
      %p1219 = scmp.lt.s32.totalorder %s21, 1
      %s1220 = scalar_select %p1219, %s21, 1
      %p1221 = scmp.lt.s32.totalorder %s22, 0
      %s1222 = scalar_select %p1221, %s22, 0
      %s1223 = smul.addr %s1220, 4
      %s1224 = sadd.s32 %s1222, %s1223
      %s1225 = smul.addr %s1224, 8
      %s1226 = scalar_lea.vmem %s5, %s1225
      // Predicated region
      $region49: #{transformer_forward.54} parent=39 // pred_check
        %p1227 = pneg %p195
      $region50: #{transformer_forward.54} parent=39 // pred_check_branch
        %1229 = sbr.rel (%p1227) target = $region52
      $region51: #{transformer_forward.54} parent=39 // pred_region
        _
      $region52: #{transformer_forward.54} parent=39 // pred_fallthru
        _
    $region40: #{transformer_forward.54} parent=5 // pred_fallthru
      _
    %p1230 = scmp.le.s32.totalorder 2, %s11
    // Predicated region
    $region53: #{transformer_forward.54} parent=5 // pred_check
      %p1231 = pneg %p1230
    $region54: #{transformer_forward.54} parent=5 // pred_check_branch
      %1233 = sbr.rel (%p1231) target = $region56
    $region55: #{transformer_forward.54} parent=5 // pred_region
      %s1234 = ssub.s32 %s11, 2
      // Predicated region
      $region57: #{transformer_forward.54} parent=55 // pred_check
        %p1235 = pneg %p201
      $region58: #{transformer_forward.54} parent=55 // pred_check_branch
        %1237 = sbr.rel (%p1235) target = $region60
      $region59: #{transformer_forward.54} parent=55 // pred_region
        %p1238 = scmp.lt.s32.totalorder %s24, 1
        %s1239 = scalar_select %p1238, %s24, 1
        %p1240 = scmp.lt.s32.totalorder %s25, 0
        %s1241 = scalar_select %p1240, %s25, 0
        %s1242 = smul.addr %s1239, 4
        %s1243 = sadd.s32 %s1241, %s1242
        %s1244 = smul.addr %s1243, 8
        %s1245 = scalar_lea.vmem %s5, %s1244
      $region60: #{transformer_forward.54} parent=55 // pred_fallthru
        _
    $region56: #{transformer_forward.54} parent=5 // pred_fallthru
      _
  $region6: #{transformer_forward.54} parent=0 // loop_footer
    %s15 = sadd.s32 1, %s11
  $region7: #{transformer_forward.54} parent=0 // loop_footer_branch
    %10 = sbr.rel target = $region3
  $region8: #{transformer_forward.54} parent=0 // loop_exit
    _

</llo_original>
